<compile_context>
chip_gen: v7x
topology: tpu7x:2x2x1
jax: 0.10.0
libtpu: 0.0.40
codegen_flags: <defaults>
</compile_context>

<pallas_src>
import functools

import numpy as np

import jax
import jax.numpy as jnp
from jax.experimental import pallas as pl
from jax.experimental.pallas import tpu as pltpu


# ---------------------------------------------------------------------------
# Static network layout: (name, Cout, Cin_effective (input padded to 8), k)
# ---------------------------------------------------------------------------
_LAYERS = (
    ("conv0_0", 8, 8, 3),
    ("conv0_1", 8, 8, 3),
    ("conv1_0", 16, 8, 5),
    ("conv1_1", 16, 16, 3),
    ("conv2_0", 32, 16, 5),
    ("conv2_1", 32, 32, 3),
    ("toplayer", 32, 32, 1),
    ("lat1", 32, 16, 1),
    ("lat0", 32, 8, 1),
    ("smooth0", 1, 32, 3),
)


def _layer_layout():
    """name -> (row offset in the packed slabs, Cout, k*k*Cin)."""
    layout, rows = {}, 0
    for name, cout, cin, k in _LAYERS:
        layout[name] = (rows, cout, k * k * cin)
        rows += cout
    return layout, rows


# ---------------------------------------------------------------------------
# Cached constant operators (built on host, tiny)
# ---------------------------------------------------------------------------
@functools.lru_cache(maxsize=None)
def _upsample_operator_np(h, w):
    """(h*w, 4*h*w): transposed bilinear 2x upsample, align_corners=True."""
    def u1d(n):
        out = 2 * n
        u = np.zeros((out, n), np.float32)
        for p in range(out):
            src = p * (n - 1) / (out - 1) if out > 1 else 0.0
            lo = int(np.floor(src))
            hi = min(lo + 1, n - 1)
            f = src - lo
            u[p, lo] += 1.0 - f
            u[p, hi] += f
        return u
    return np.ascontiguousarray(np.kron(u1d(h), u1d(w)).T)


@functools.lru_cache(maxsize=None)
def _subsample_operator_np(h, w):
    """(h*w, (h//2)*(w//2)) 0/1 matrix selecting every other row/column."""
    ho, wo = h // 2, w // 2
    d = np.zeros((h * w, ho * wo), np.float32)
    for io in range(ho):
        for jo in range(wo):
            d[(2 * io) * w + 2 * jo, io * wo + jo] = 1.0
    return d


@functools.lru_cache(maxsize=None)
def _ops_slabs_np(h, w, b):
    """Two packed operator slabs for b lane-concatenated images.

    ops_a = [stride-2 subsample level0->1 ; bilinear up level2->1]  (L0+L2, L1)
    ops_b = [bilinear up level1->0 , stride-2 subsample level1->2]  (L1, L0+L2)
    """
    eye = np.eye(b, dtype=np.float32)
    d1 = np.kron(eye, _subsample_operator_np(h, w))
    d2 = np.kron(eye, _subsample_operator_np(h // 2, w // 2))
    u1 = np.kron(eye, _upsample_operator_np(h // 4, w // 4))
    u0 = np.kron(eye, _upsample_operator_np(h // 2, w // 2))
    ops_a = np.concatenate([d1, u1], axis=0)
    ops_b = np.concatenate([u0, d2], axis=1)
    return ops_a, ops_b


@functools.lru_cache(maxsize=None)
def _mask_slab_np(h, w, b):
    """Packed 0/1 conv border masks (per tap, per resolution), width b*h*w.

    Returns (slab, offsets) with offsets[(hh, ww, k)] = first row of that
    k*k-row block.  Row within a block is kh*k + kw.
    """
    combos = ((h, w, 3), (h, w, 5), (h // 2, w // 2, 3), (h // 2, w // 2, 5),
              (h // 4, w // 4, 3))
    l0 = b * h * w
    blocks, offsets, row = [], {}, 0
    for hh, ww, k in combos:
        offsets[(hh, ww, k)] = row
        pad = k // 2
        rr = np.arange(hh * ww) // ww
        cc = np.arange(hh * ww) % ww
        m = np.zeros((k * k, l0), np.float32)
        for kh in range(k):
            for kw in range(k):
                dr, dc = kh - pad, kw - pad
                valid = ((rr + dr >= 0) & (rr + dr < hh)
                         & (cc + dc >= 0) & (cc + dc < ww))
                m[kh * k + kw, : b * hh * ww] = np.tile(
                    valid.astype(np.float32), b)
        blocks.append(m)
        row += k * k
    return np.concatenate(blocks, axis=0), offsets


# ---------------------------------------------------------------------------
# Parameters (PyTorch-like layout) and kernel-ready packing
# ---------------------------------------------------------------------------
def init_params(key):
    keys = iter(jax.random.split(key, 64))

    def conv_w(cout, cin, k):
        return 0.2 * jax.random.normal(next(keys), (cout, cin, k, k), jnp.float32)

    def bn_affine(c):
        gamma = 1.0 + 0.1 * jax.random.normal(next(keys), (c,), jnp.float32)
        beta = 0.1 * jax.random.normal(next(keys), (c,), jnp.float32)
        mean = 0.1 * jax.random.normal(next(keys), (c,), jnp.float32)
        var = 1.0 + 0.1 * jax.random.uniform(next(keys), (c,), jnp.float32)
        scale = gamma / jnp.sqrt(var + 1e-5)
        return scale, beta - mean * scale

    def cbr(cin, cout, k):
        s, b = bn_affine(cout)
        return dict(w=conv_w(cout, cin, k), scale=s, bias=b)

    def plain(cin, cout, k):
        return dict(w=conv_w(cout, cin, k),
                    b=0.1 * jax.random.normal(next(keys), (cout,), jnp.float32))

    return dict(
        conv0_0=cbr(3, 8, 3), conv0_1=cbr(8, 8, 3),
        conv1_0=cbr(8, 16, 5), conv1_1=cbr(16, 16, 3),
        conv2_0=cbr(16, 32, 5), conv2_1=cbr(32, 32, 3),
        toplayer=plain(32, 32, 1), lat1=plain(16, 32, 1), lat0=plain(8, 32, 1),
        smooth1=plain(32, 16, 3),   # dead in the reference forward; unused
        smooth0=plain(32, 1, 3),
    )


def prepare_params(params):
    """Fold eval-mode BN and pack all weights / biases into two slabs.

    wslab: (sum Cout, max k*k*Cin) bf16, one row block per layer, laid out
           tap-major / channel-minor so it multiplies im2col patches directly.
    bslab: (sum Cout, 1) f32.
    """
    layout, rows = _layer_layout()
    kmax = max(kdim for _, _, kdim in layout.values())
    wslab = np.zeros((rows, kmax), np.float32)
    bslab = np.zeros((rows, 1), np.float32)
    for name, cout, cin_eff, k in _LAYERS:
        r0, _, kdim = layout[name]
        p = params[name]
        w = np.asarray(p["w"], np.float32)
        if "scale" in p:                       # ConvBnReLU: fold BN into weights
            w = w * np.asarray(p["scale"], np.float32)[:, None, None, None]
            b = np.asarray(p["bias"], np.float32)
        else:
            b = np.asarray(p["b"], np.float32)
        if w.shape[1] < cin_eff:               # first conv: pad 3 -> 8 channels
            w = np.pad(w, ((0, 0), (0, cin_eff - w.shape[1]), (0, 0), (0, 0)))
        wslab[r0:r0 + cout, :kdim] = w.transpose(0, 2, 3, 1).reshape(cout, kdim)
        bslab[r0:r0 + cout, 0] = b
    return jnp.asarray(wslab, jnp.bfloat16), jnp.asarray(bslab, jnp.float32)


# ---------------------------------------------------------------------------
# Fused kernel: whole FeatureNet forward for B lane-concatenated images
# ---------------------------------------------------------------------------
def _make_kernel(H, W, B, layout, mask_off):
    HW = H * W
    L0, L1, L2 = B * HW, B * HW // 4, B * HW // 16

    def kernel(x_ref, w_ref, b_ref, opsa_ref, opsb_ref, m_ref, o_ref):
        f32, bf16 = jnp.float32, jnp.bfloat16

        def patches(x, h, w, k):
            """im2col: (Cin, B*h*w) -> (k*k*Cin, B*h*w), tap-major/channel-minor.
            Spatial shifts are lane rolls (XLU); conv zero-padding is a multiply
            by a precomputed 0/1 border-mask row (VPU).  Wrap-around of the roll
            only lands on masked positions."""
            L = x.shape[1]
            pad = k // 2
            m0 = mask_off[(h, w, k)]
            taps = []
            for kh in range(k):
                for kw in range(k):
                    dr, dc = kh - pad, kw - pad
                    if dr == 0 and dc == 0:          # centre tap: no shift/mask
                        taps.append(x)
                        continue
                    off = dr * w + dc                # source = dest + off (flat)
                    rolled = pltpu.roll(x, shift=(-off) % L, axis=1)
                    t = m0 + kh * k + kw
                    mask = m_ref[t:t + 1, 0:L]       # (1, L) 0/1 f32
                    taps.append(rolled * mask)
            return jnp.concatenate(taps, axis=0)     # f32, 8-aligned row blocks

        def conv(x, name, h=0, w=0, k=1, relu=True, subsample=None):
            """One fused conv(+BN)+bias(+ReLU) = a single MXU matmul against the
            packed (Cout, k*k*Cin) bf16 weight block.  Stride-2 convs run at full
            resolution and are then subsampled with one 0/1 matmul (channel mix
            first, since Cout << k*k*Cin makes it the cheaper association)."""
            r0, cout, kdim = layout[name]
            wgt = w_ref[r0:r0 + cout, 0:kdim]                       # bf16
            rhs = x if k == 1 else patches(x, h, w, k)
            y = jnp.dot(wgt, rhs.astype(bf16), preferred_element_type=f32)
            if subsample is not None:
                y = jnp.dot(y.astype(bf16), subsample,
                            preferred_element_type=f32)
            y = y + b_ref[r0:r0 + cout, :]
            return jnp.maximum(y, 0.0) if relu else y

        dwn1 = opsa_ref[0:L0, :]         # (L0, L1) stride-2 subsample, lvl 0 -> 1
        up1 = opsa_ref[L0:L0 + L2, :]    # (L2, L1) bilinear 2x up,     lvl 2 -> 1
        up0 = opsb_ref[:, 0:L0]          # (L1, L0) bilinear 2x up,     lvl 1 -> 0
        dwn2 = opsb_ref[:, L0:L0 + L2]   # (L1, L2) stride-2 subsample, lvl 1 -> 2

        x0 = x_ref[0]                                              # (8, L0) f32
        c0 = conv(x0, "conv0_0", H, W, 3)
        c0 = conv(c0, "conv0_1", H, W, 3)                          # (8, L0)

        c1 = conv(c0, "conv1_0", H, W, 5, subsample=dwn1)
        c1 = conv(c1, "conv1_1", H // 2, W // 2, 3)                # (16, L1)

        c2 = conv(c1, "conv2_0", H // 2, W // 2, 5, subsample=dwn2)
        c2 = conv(c2, "conv2_1", H // 4, W // 4, 3)                # (32, L2)

        feat2 = conv(c2, "toplayer", relu=False)                   # (32, L2)
        feat1 = (jnp.dot(feat2.astype(bf16), up1, preferred_element_type=f32)
                 + conv(c1, "lat1", relu=False))                   # (32, L1)
        feat0 = (jnp.dot(feat1.astype(bf16), up0, preferred_element_type=f32)
                 + conv(c0, "lat0", relu=False))                   # (32, L0)

        # smooth1(feat1) is computed-but-discarded by the reference forward.
        out = conv(feat0, "smooth0", H, W, 3, relu=False)          # (1, L0)
        o_ref[0] = out                                             # lane-dense

    return kernel


# ---------------------------------------------------------------------------
# Forward: one pallas_call for the whole network
# ---------------------------------------------------------------------------
@jax.jit
def feature_net_forward(x_nchw, wslab, bslab):
    N, C, H, W = x_nchw.shape
    assert C == 3 and H % 4 == 0 and W % 4 == 0
    B = 2 if N % 2 == 0 else 1     # images lane-concatenated per grid step
    T = N // B
    HW = H * W
    L0 = B * HW
    cin_pad = 8                    # pad input channels 3 -> 8 (one sublane tile)

    ops_a_np, ops_b_np = _ops_slabs_np(H, W, B)
    mask_np, mask_off = _mask_slab_np(H, W, B)
    ops_a = jnp.asarray(ops_a_np, jnp.bfloat16)
    ops_b = jnp.asarray(ops_b_np, jnp.bfloat16)
    masks = jnp.asarray(mask_np, jnp.float32)

    # (N, 3, H, W) -> (T, 8, B*HW): channels on sublanes, B images concatenated
    # along the lane axis (lane = b*HW + row*W + col).
    x8 = jnp.pad(x_nchw.reshape(N, C, HW).astype(jnp.float32),
                 ((0, 0), (0, cin_pad - C), (0, 0)))
    xt = x8.reshape(T, B, cin_pad, HW).transpose(0, 2, 1, 3).reshape(T, cin_pad, L0)

    layout, _ = _layer_layout()
    kernel = _make_kernel(H, W, B, layout, mask_off)

    # Constants total ~0.5 MiB and their block index never changes; the default
    # double-buffering is harmless here (pl.Buffered(1) would halve it if the
    # operators grow with larger H, W).
    def whole(a):
        return pl.BlockSpec(a.shape, lambda n: (0, 0))

    out = pl.pallas_call(
        kernel,
        out_shape=jax.ShapeDtypeStruct((T, 1, L0), jnp.float32),
        grid=(T,),
        in_specs=[pl.BlockSpec((1, cin_pad, L0), lambda n: (n, 0, 0)),
                  whole(wslab), whole(bslab), whole(ops_a), whole(ops_b),
                  whole(masks)],
        out_specs=pl.BlockSpec((1, 1, L0), lambda n: (n, 0, 0)),
        compiler_params=pltpu.CompilerParams(
            dimension_semantics=("parallel",)),
    )(xt, wslab, bslab, ops_a, ops_b, masks)

    # (T, 1, B*HW) -> (N, 1, H, W)
    return out.reshape(T, 1, B, HW).transpose(0, 2, 1, 3).reshape(N, 1, H, W)


# ---------------------------------------------------------------------------
# Pure-JAX f32 reference (eval-mode BatchNorm) for a numerical self-check
# ---------------------------------------------------------------------------
def _reference_forward(x, params):
    hp = jax.lax.Precision.HIGHEST

    def conv(x, w, b=None, stride=1, pad=1):
        y = jax.lax.conv_general_dilated(
            x, w, (stride, stride), [(pad, pad), (pad, pad)],
            dimension_numbers=("NCHW", "OIHW", "NCHW"), precision=hp)
        return y if b is None else y + b.reshape(1, -1, 1, 1)

    def cbr(x, p, stride, pad):
        y = conv(x, p["w"], None, stride, pad)
        y = y * p["scale"].reshape(1, -1, 1, 1) + p["bias"].reshape(1, -1, 1, 1)
        return jnp.maximum(y, 0.0)

    def up2(x):  # bilinear 2x, align_corners=True
        n, c, h, w = x.shape
        ys = jnp.linspace(0.0, h - 1.0, 2 * h)
        xs = jnp.linspace(0.0, w - 1.0, 2 * w)
        y0 = jnp.floor(ys).astype(jnp.int32)
        x0 = jnp.floor(xs).astype(jnp.int32)
        y1 = jnp.minimum(y0 + 1, h - 1)
        x1 = jnp.minimum(x0 + 1, w - 1)
        fy = (ys - y0)[None, None, :, None]
        fx = (xs - x0)[None, None, None, :]
        rows = x[:, :, y0, :] * (1 - fy) + x[:, :, y1, :] * fy
        return rows[:, :, :, x0] * (1 - fx) + rows[:, :, :, x1] * fx

    c0 = cbr(cbr(x, params["conv0_0"], 1, 1), params["conv0_1"], 1, 1)
    c1 = cbr(cbr(c0, params["conv1_0"], 2, 2), params["conv1_1"], 1, 1)
    c2 = cbr(cbr(c1, params["conv2_0"], 2, 2), params["conv2_1"], 1, 1)
    f2 = conv(c2, params["toplayer"]["w"], params["toplayer"]["b"], 1, 0)
    f1 = up2(f2) + conv(c1, params["lat1"]["w"], params["lat1"]["b"], 1, 0)
    f0 = up2(f1) + conv(c0, params["lat0"]["w"], params["lat0"]["b"], 1, 0)
    return conv(f0, params["smooth0"]["w"], params["smooth0"]["b"], 1, 1)


if __name__ == "__main__":
    key = jax.random.PRNGKey(0)
    pkey, xkey = jax.random.split(key)
    params = init_params(pkey)
    wslab, bslab = prepare_params(params)
    x = jax.random.normal(xkey, (2, 3, 16, 16), jnp.float32)  # NCHW, like PyTorch

    out = jax.block_until_ready(feature_net_forward(x, wslab, bslab))
    assert out.shape == (2, 1, 16, 16), out.shape
    assert bool(jnp.all(jnp.isfinite(out)))

    # Self-check against a pure-JAX f32 reference; tolerance reflects bf16 MXU
    # operands (f32 accumulation) used throughout the kernel.
    ref = jax.block_until_ready(jax.jit(_reference_forward)(x, params))
    max_ref = float(jnp.max(jnp.abs(ref)))
    max_err = float(jnp.max(jnp.abs(out - ref)))
    assert max_err <= 0.15 * max_ref + 0.1, (max_err, max_ref)

    print("KERNEL_OK")
</pallas_src>

<mosaic_0001>
module attributes {stable_mosaic.version = 11 : i64} {
  func.func @kernel(%arg0: i32, %arg1: memref<1x8x512xf32, #tpu.memory_space<vmem>>, %arg2: memref<209x400xbf16, #tpu.memory_space<vmem>>, %arg3: memref<209x1xf32, #tpu.memory_space<vmem>>, %arg4: memref<544x128xbf16, #tpu.memory_space<vmem>>, %arg5: memref<128x544xbf16, #tpu.memory_space<vmem>>, %arg6: memref<77x512xf32, #tpu.memory_space<vmem>>, %arg7: memref<1x1x512xf32, #tpu.memory_space<vmem>>) attributes {dimension_semantics = [#tpu.dimension_semantics<parallel>], iteration_bounds = array<i64: 1>, scalar_prefetch = 0 : i64, scratch_operands = 0 : i64, tpu.core_type = #tpu.core_type<tc>, window_params = [{transform_indices = @transform_0, window_bounds = array<i64: 1, 8, 512>}, {pipeline_mode = #tpu.pipeline_mode<synchronous>, transform_indices = @transform_1, window_bounds = array<i64: 209, 400>}, {pipeline_mode = #tpu.pipeline_mode<synchronous>, transform_indices = @transform_2, window_bounds = array<i64: 209, 1>}, {pipeline_mode = #tpu.pipeline_mode<synchronous>, transform_indices = @transform_3, window_bounds = array<i64: 544, 128>}, {pipeline_mode = #tpu.pipeline_mode<synchronous>, transform_indices = @transform_4, window_bounds = array<i64: 128, 544>}, {pipeline_mode = #tpu.pipeline_mode<synchronous>, transform_indices = @transform_5, window_bounds = array<i64: 77, 512>}, {transform_indices = @transform_6, window_bounds = array<i64: 1, 1, 512>}]} {
    %c0 = arith.constant 0 : index
    %c0_0 = arith.constant 0 : index
    %0 = vector.load %arg4[%c0, %c0_0] : memref<544x128xbf16, #tpu.memory_space<vmem>>, vector<512x128xbf16>
    %c512 = arith.constant 512 : index
    %c0_1 = arith.constant 0 : index
    %1 = vector.load %arg4[%c512, %c0_1] : memref<544x128xbf16, #tpu.memory_space<vmem>>, vector<32x128xbf16>
    %c0_2 = arith.constant 0 : index
    %c0_3 = arith.constant 0 : index
    %2 = vector.load %arg5[%c0_2, %c0_3] : memref<128x544xbf16, #tpu.memory_space<vmem>>, vector<128x512xbf16>
    %c0_4 = arith.constant 0 : index
    %c512_5 = arith.constant 512 : index
    %3 = vector.load %arg5[%c0_4, %c512_5] : memref<128x544xbf16, #tpu.memory_space<vmem>>, vector<128x32xbf16>
    %c0_6 = arith.constant 0 : index
    %c0_7 = arith.constant 0 : index
    %c0_8 = arith.constant 0 : index
    %4 = vector.load %arg1[%c0_6, %c0_7, %c0_8] : memref<1x8x512xf32, #tpu.memory_space<vmem>>, vector<1x8x512xf32>
    %5 = vector.shape_cast %4 : vector<1x8x512xf32> to vector<8x512xf32>
    %c0_9 = arith.constant 0 : index
    %c0_10 = arith.constant 0 : index
    %6 = vector.load %arg2[%c0_9, %c0_10] : memref<209x400xbf16, #tpu.memory_space<vmem>>, vector<8x72xbf16>
    %c17_i32 = arith.constant 17 : i32
    %7 = tpu.dynamic_rotate %5 by %c17_i32 dim 1 : vector<8x512xf32>, i32 -> vector<8x512xf32>
    %c0_11 = arith.constant 0 : index
    %c0_12 = arith.constant 0 : index
    %8 = vector.load %arg6[%c0_11, %c0_12] : memref<77x512xf32, #tpu.memory_space<vmem>>, vector<1x512xf32>
    %9 = vector.broadcast %8 : vector<1x512xf32> to vector<8x512xf32>
    %10 = arith.mulf %7, %9 : vector<8x512xf32>
    %c16_i32 = arith.constant 16 : i32
    %11 = tpu.dynamic_rotate %5 by %c16_i32 dim 1 : vector<8x512xf32>, i32 -> vector<8x512xf32>
    %c1 = arith.constant 1 : index
    %c0_13 = arith.constant 0 : index
    %12 = vector.load %arg6[%c1, %c0_13] : memref<77x512xf32, #tpu.memory_space<vmem>>, vector<1x512xf32>
    %13 = vector.broadcast %12 : vector<1x512xf32> to vector<8x512xf32>
    %14 = arith.mulf %11, %13 : vector<8x512xf32>
    %c15_i32 = arith.constant 15 : i32
    %15 = tpu.dynamic_rotate %5 by %c15_i32 dim 1 : vector<8x512xf32>, i32 -> vector<8x512xf32>
    %c2 = arith.constant 2 : index
    %c0_14 = arith.constant 0 : index
    %16 = vector.load %arg6[%c2, %c0_14] : memref<77x512xf32, #tpu.memory_space<vmem>>, vector<1x512xf32>
    %17 = vector.broadcast %16 : vector<1x512xf32> to vector<8x512xf32>
    %18 = arith.mulf %15, %17 : vector<8x512xf32>
    %c1_i32 = arith.constant 1 : i32
    %19 = tpu.dynamic_rotate %5 by %c1_i32 dim 1 : vector<8x512xf32>, i32 -> vector<8x512xf32>
    %c3 = arith.constant 3 : index
    %c0_15 = arith.constant 0 : index
    %20 = vector.load %arg6[%c3, %c0_15] : memref<77x512xf32, #tpu.memory_space<vmem>>, vector<1x512xf32>
    %21 = vector.broadcast %20 : vector<1x512xf32> to vector<8x512xf32>
    %22 = arith.mulf %19, %21 : vector<8x512xf32>
    %c511_i32 = arith.constant 511 : i32
    %23 = tpu.dynamic_rotate %5 by %c511_i32 dim 1 : vector<8x512xf32>, i32 -> vector<8x512xf32>
    %c5 = arith.constant 5 : index
    %c0_16 = arith.constant 0 : index
    %24 = vector.load %arg6[%c5, %c0_16] : memref<77x512xf32, #tpu.memory_space<vmem>>, vector<1x512xf32>
    %25 = vector.broadcast %24 : vector<1x512xf32> to vector<8x512xf32>
    %26 = arith.mulf %23, %25 : vector<8x512xf32>
    %c497_i32 = arith.constant 497 : i32
    %27 = tpu.dynamic_rotate %5 by %c497_i32 dim 1 : vector<8x512xf32>, i32 -> vector<8x512xf32>
    %c6 = arith.constant 6 : index
    %c0_17 = arith.constant 0 : index
    %28 = vector.load %arg6[%c6, %c0_17] : memref<77x512xf32, #tpu.memory_space<vmem>>, vector<1x512xf32>
    %29 = vector.broadcast %28 : vector<1x512xf32> to vector<8x512xf32>
    %30 = arith.mulf %27, %29 : vector<8x512xf32>
    %c496_i32 = arith.constant 496 : i32
    %31 = tpu.dynamic_rotate %5 by %c496_i32 dim 1 : vector<8x512xf32>, i32 -> vector<8x512xf32>
    %c7 = arith.constant 7 : index
    %c0_18 = arith.constant 0 : index
    %32 = vector.load %arg6[%c7, %c0_18] : memref<77x512xf32, #tpu.memory_space<vmem>>, vector<1x512xf32>
    %33 = vector.broadcast %32 : vector<1x512xf32> to vector<8x512xf32>
    %34 = arith.mulf %31, %33 : vector<8x512xf32>
    %c495_i32 = arith.constant 495 : i32
    %35 = tpu.dynamic_rotate %5 by %c495_i32 dim 1 : vector<8x512xf32>, i32 -> vector<8x512xf32>
    %c8 = arith.constant 8 : index
    %c0_19 = arith.constant 0 : index
    %36 = vector.load %arg6[%c8, %c0_19] : memref<77x512xf32, #tpu.memory_space<vmem>>, vector<1x512xf32>
    %37 = vector.broadcast %36 : vector<1x512xf32> to vector<8x512xf32>
    %38 = arith.mulf %35, %37 : vector<8x512xf32>
    %39 = tpu.concatenate %10, %14, %18, %22, %5, %26, %30, %34, %38 in 0 : vector<8x512xf32>, vector<8x512xf32>, vector<8x512xf32>, vector<8x512xf32>, vector<8x512xf32>, vector<8x512xf32>, vector<8x512xf32>, vector<8x512xf32>, vector<8x512xf32> -> vector<72x512xf32>
    %40 = arith.truncf %39 : vector<72x512xf32> to vector<72x512xbf16>
    %cst = arith.constant dense<0.000000e+00> : vector<8x512xf32>
    %41 = tpu.matmul %6, %40, %cst {dimension_numbers = #tpu.dot_dimension_numbers<[1], [0], [0], [1], [0, 0, 1, 1], [], []>} : vector<8x72xbf16>, vector<72x512xbf16>, vector<8x512xf32> -> vector<8x512xf32>
    %c0_20 = arith.constant 0 : index
    %c0_21 = arith.constant 0 : index
    %42 = vector.load %arg3[%c0_20, %c0_21] : memref<209x1xf32, #tpu.memory_space<vmem>>, vector<8x1xf32>
    %43 = vector.broadcast %42 : vector<8x1xf32> to vector<8x512xf32>
    %44 = arith.addf %41, %43 : vector<8x512xf32>
    %cst_22 = arith.constant 0.000000e+00 : f32
    %45 = vector.broadcast %cst_22 : f32 to vector<8x512xf32>
    %46 = arith.maximumf %44, %45 : vector<8x512xf32>
    %c8_23 = arith.constant 8 : index
    %c0_24 = arith.constant 0 : index
    %47 = vector.load %arg2[%c8_23, %c0_24] : memref<209x400xbf16, #tpu.memory_space<vmem>>, vector<8x72xbf16>
    %c17_i32_25 = arith.constant 17 : i32
    %48 = tpu.dynamic_rotate %46 by %c17_i32_25 dim 1 : vector<8x512xf32>, i32 -> vector<8x512xf32>
    %c0_26 = arith.constant 0 : index
    %c0_27 = arith.constant 0 : index
    %49 = vector.load %arg6[%c0_26, %c0_27] : memref<77x512xf32, #tpu.memory_space<vmem>>, vector<1x512xf32>
    %50 = vector.broadcast %49 : vector<1x512xf32> to vector<8x512xf32>
    %51 = arith.mulf %48, %50 : vector<8x512xf32>
    %c16_i32_28 = arith.constant 16 : i32
    %52 = tpu.dynamic_rotate %46 by %c16_i32_28 dim 1 : vector<8x512xf32>, i32 -> vector<8x512xf32>
    %c1_29 = arith.constant 1 : index
    %c0_30 = arith.constant 0 : index
    %53 = vector.load %arg6[%c1_29, %c0_30] : memref<77x512xf32, #tpu.memory_space<vmem>>, vector<1x512xf32>
    %54 = vector.broadcast %53 : vector<1x512xf32> to vector<8x512xf32>
    %55 = arith.mulf %52, %54 : vector<8x512xf32>
    %c15_i32_31 = arith.constant 15 : i32
    %56 = tpu.dynamic_rotate %46 by %c15_i32_31 dim 1 : vector<8x512xf32>, i32 -> vector<8x512xf32>
    %c2_32 = arith.constant 2 : index
    %c0_33 = arith.constant 0 : index
    %57 = vector.load %arg6[%c2_32, %c0_33] : memref<77x512xf32, #tpu.memory_space<vmem>>, vector<1x512xf32>
    %58 = vector.broadcast %57 : vector<1x512xf32> to vector<8x512xf32>
    %59 = arith.mulf %56, %58 : vector<8x512xf32>
    %c1_i32_34 = arith.constant 1 : i32
    %60 = tpu.dynamic_rotate %46 by %c1_i32_34 dim 1 : vector<8x512xf32>, i32 -> vector<8x512xf32>
    %c3_35 = arith.constant 3 : index
    %c0_36 = arith.constant 0 : index
    %61 = vector.load %arg6[%c3_35, %c0_36] : memref<77x512xf32, #tpu.memory_space<vmem>>, vector<1x512xf32>
    %62 = vector.broadcast %61 : vector<1x512xf32> to vector<8x512xf32>
    %63 = arith.mulf %60, %62 : vector<8x512xf32>
    %c511_i32_37 = arith.constant 511 : i32
    %64 = tpu.dynamic_rotate %46 by %c511_i32_37 dim 1 : vector<8x512xf32>, i32 -> vector<8x512xf32>
    %c5_38 = arith.constant 5 : index
    %c0_39 = arith.constant 0 : index
    %65 = vector.load %arg6[%c5_38, %c0_39] : memref<77x512xf32, #tpu.memory_space<vmem>>, vector<1x512xf32>
    %66 = vector.broadcast %65 : vector<1x512xf32> to vector<8x512xf32>
    %67 = arith.mulf %64, %66 : vector<8x512xf32>
    %c497_i32_40 = arith.constant 497 : i32
    %68 = tpu.dynamic_rotate %46 by %c497_i32_40 dim 1 : vector<8x512xf32>, i32 -> vector<8x512xf32>
    %c6_41 = arith.constant 6 : index
    %c0_42 = arith.constant 0 : index
    %69 = vector.load %arg6[%c6_41, %c0_42] : memref<77x512xf32, #tpu.memory_space<vmem>>, vector<1x512xf32>
    %70 = vector.broadcast %69 : vector<1x512xf32> to vector<8x512xf32>
    %71 = arith.mulf %68, %70 : vector<8x512xf32>
    %c496_i32_43 = arith.constant 496 : i32
    %72 = tpu.dynamic_rotate %46 by %c496_i32_43 dim 1 : vector<8x512xf32>, i32 -> vector<8x512xf32>
    %c7_44 = arith.constant 7 : index
    %c0_45 = arith.constant 0 : index
    %73 = vector.load %arg6[%c7_44, %c0_45] : memref<77x512xf32, #tpu.memory_space<vmem>>, vector<1x512xf32>
    %74 = vector.broadcast %73 : vector<1x512xf32> to vector<8x512xf32>
    %75 = arith.mulf %72, %74 : vector<8x512xf32>
    %c495_i32_46 = arith.constant 495 : i32
    %76 = tpu.dynamic_rotate %46 by %c495_i32_46 dim 1 : vector<8x512xf32>, i32 -> vector<8x512xf32>
    %c8_47 = arith.constant 8 : index
    %c0_48 = arith.constant 0 : index
    %77 = vector.load %arg6[%c8_47, %c0_48] : memref<77x512xf32, #tpu.memory_space<vmem>>, vector<1x512xf32>
    %78 = vector.broadcast %77 : vector<1x512xf32> to vector<8x512xf32>
    %79 = arith.mulf %76, %78 : vector<8x512xf32>
    %80 = tpu.concatenate %51, %55, %59, %63, %46, %67, %71, %75, %79 in 0 : vector<8x512xf32>, vector<8x512xf32>, vector<8x512xf32>, vector<8x512xf32>, vector<8x512xf32>, vector<8x512xf32>, vector<8x512xf32>, vector<8x512xf32>, vector<8x512xf32> -> vector<72x512xf32>
    %81 = arith.truncf %80 : vector<72x512xf32> to vector<72x512xbf16>
    %cst_49 = arith.constant dense<0.000000e+00> : vector<8x512xf32>
    %82 = tpu.matmul %47, %81, %cst_49 {dimension_numbers = #tpu.dot_dimension_numbers<[1], [0], [0], [1], [0, 0, 1, 1], [], []>} : vector<8x72xbf16>, vector<72x512xbf16>, vector<8x512xf32> -> vector<8x512xf32>
    %c8_50 = arith.constant 8 : index
    %c0_51 = arith.constant 0 : index
    %83 = vector.load %arg3[%c8_50, %c0_51] : memref<209x1xf32, #tpu.memory_space<vmem>>, vector<8x1xf32>
    %84 = vector.broadcast %83 : vector<8x1xf32> to vector<8x512xf32>
    %85 = arith.addf %82, %84 : vector<8x512xf32>
    %cst_52 = arith.constant 0.000000e+00 : f32
    %86 = vector.broadcast %cst_52 : f32 to vector<8x512xf32>
    %87 = arith.maximumf %85, %86 : vector<8x512xf32>
    %c16 = arith.constant 16 : index
    %c0_53 = arith.constant 0 : index
    %88 = vector.load %arg2[%c16, %c0_53] : memref<209x400xbf16, #tpu.memory_space<vmem>>, vector<16x200xbf16>
    %c34_i32 = arith.constant 34 : i32
    %89 = tpu.dynamic_rotate %87 by %c34_i32 dim 1 : vector<8x512xf32>, i32 -> vector<8x512xf32>
    %c9 = arith.constant 9 : index
    %c0_54 = arith.constant 0 : index
    %90 = vector.load %arg6[%c9, %c0_54] : memref<77x512xf32, #tpu.memory_space<vmem>>, vector<1x512xf32>
    %91 = vector.broadcast %90 : vector<1x512xf32> to vector<8x512xf32>
    %92 = arith.mulf %89, %91 : vector<8x512xf32>
    %c33_i32 = arith.constant 33 : i32
    %93 = tpu.dynamic_rotate %87 by %c33_i32 dim 1 : vector<8x512xf32>, i32 -> vector<8x512xf32>
    %c10 = arith.constant 10 : index
    %c0_55 = arith.constant 0 : index
    %94 = vector.load %arg6[%c10, %c0_55] : memref<77x512xf32, #tpu.memory_space<vmem>>, vector<1x512xf32>
    %95 = vector.broadcast %94 : vector<1x512xf32> to vector<8x512xf32>
    %96 = arith.mulf %93, %95 : vector<8x512xf32>
    %c32_i32 = arith.constant 32 : i32
    %97 = tpu.dynamic_rotate %87 by %c32_i32 dim 1 : vector<8x512xf32>, i32 -> vector<8x512xf32>
    %c11 = arith.constant 11 : index
    %c0_56 = arith.constant 0 : index
    %98 = vector.load %arg6[%c11, %c0_56] : memref<77x512xf32, #tpu.memory_space<vmem>>, vector<1x512xf32>
    %99 = vector.broadcast %98 : vector<1x512xf32> to vector<8x512xf32>
    %100 = arith.mulf %97, %99 : vector<8x512xf32>
    %c31_i32 = arith.constant 31 : i32
    %101 = tpu.dynamic_rotate %87 by %c31_i32 dim 1 : vector<8x512xf32>, i32 -> vector<8x512xf32>
    %c12 = arith.constant 12 : index
    %c0_57 = arith.constant 0 : index
    %102 = vector.load %arg6[%c12, %c0_57] : memref<77x512xf32, #tpu.memory_space<vmem>>, vector<1x512xf32>
    %103 = vector.broadcast %102 : vector<1x512xf32> to vector<8x512xf32>
    %104 = arith.mulf %101, %103 : vector<8x512xf32>
    %c30_i32 = arith.constant 30 : i32
    %105 = tpu.dynamic_rotate %87 by %c30_i32 dim 1 : vector<8x512xf32>, i32 -> vector<8x512xf32>
    %c13 = arith.constant 13 : index
    %c0_58 = arith.constant 0 : index
    %106 = vector.load %arg6[%c13, %c0_58] : memref<77x512xf32, #tpu.memory_space<vmem>>, vector<1x512xf32>
    %107 = vector.broadcast %106 : vector<1x512xf32> to vector<8x512xf32>
    %108 = arith.mulf %105, %107 : vector<8x512xf32>
    %c18_i32 = arith.constant 18 : i32
    %109 = tpu.dynamic_rotate %87 by %c18_i32 dim 1 : vector<8x512xf32>, i32 -> vector<8x512xf32>
    %c14 = arith.constant 14 : index
    %c0_59 = arith.constant 0 : index
    %110 = vector.load %arg6[%c14, %c0_59] : memref<77x512xf32, #tpu.memory_space<vmem>>, vector<1x512xf32>
    %111 = vector.broadcast %110 : vector<1x512xf32> to vector<8x512xf32>
    %112 = arith.mulf %109, %111 : vector<8x512xf32>
    %c17_i32_60 = arith.constant 17 : i32
    %113 = tpu.dynamic_rotate %87 by %c17_i32_60 dim 1 : vector<8x512xf32>, i32 -> vector<8x512xf32>
    %c15 = arith.constant 15 : index
    %c0_61 = arith.constant 0 : index
    %114 = vector.load %arg6[%c15, %c0_61] : memref<77x512xf32, #tpu.memory_space<vmem>>, vector<1x512xf32>
    %115 = vector.broadcast %114 : vector<1x512xf32> to vector<8x512xf32>
    %116 = arith.mulf %113, %115 : vector<8x512xf32>
    %c16_i32_62 = arith.constant 16 : i32
    %117 = tpu.dynamic_rotate %87 by %c16_i32_62 dim 1 : vector<8x512xf32>, i32 -> vector<8x512xf32>
    %c16_63 = arith.constant 16 : index
    %c0_64 = arith.constant 0 : index
    %118 = vector.load %arg6[%c16_63, %c0_64] : memref<77x512xf32, #tpu.memory_space<vmem>>, vector<1x512xf32>
    %119 = vector.broadcast %118 : vector<1x512xf32> to vector<8x512xf32>
    %120 = arith.mulf %117, %119 : vector<8x512xf32>
    %c15_i32_65 = arith.constant 15 : i32
    %121 = tpu.dynamic_rotate %87 by %c15_i32_65 dim 1 : vector<8x512xf32>, i32 -> vector<8x512xf32>
    %c17 = arith.constant 17 : index
    %c0_66 = arith.constant 0 : index
    %122 = vector.load %arg6[%c17, %c0_66] : memref<77x512xf32, #tpu.memory_space<vmem>>, vector<1x512xf32>
    %123 = vector.broadcast %122 : vector<1x512xf32> to vector<8x512xf32>
    %124 = arith.mulf %121, %123 : vector<8x512xf32>
    %c14_i32 = arith.constant 14 : i32
    %125 = tpu.dynamic_rotate %87 by %c14_i32 dim 1 : vector<8x512xf32>, i32 -> vector<8x512xf32>
    %c18 = arith.constant 18 : index
    %c0_67 = arith.constant 0 : index
    %126 = vector.load %arg6[%c18, %c0_67] : memref<77x512xf32, #tpu.memory_space<vmem>>, vector<1x512xf32>
    %127 = vector.broadcast %126 : vector<1x512xf32> to vector<8x512xf32>
    %128 = arith.mulf %125, %127 : vector<8x512xf32>
    %c2_i32 = arith.constant 2 : i32
    %129 = tpu.dynamic_rotate %87 by %c2_i32 dim 1 : vector<8x512xf32>, i32 -> vector<8x512xf32>
    %c19 = arith.constant 19 : index
    %c0_68 = arith.constant 0 : index
    %130 = vector.load %arg6[%c19, %c0_68] : memref<77x512xf32, #tpu.memory_space<vmem>>, vector<1x512xf32>
    %131 = vector.broadcast %130 : vector<1x512xf32> to vector<8x512xf32>
    %132 = arith.mulf %129, %131 : vector<8x512xf32>
    %c1_i32_69 = arith.constant 1 : i32
    %133 = tpu.dynamic_rotate %87 by %c1_i32_69 dim 1 : vector<8x512xf32>, i32 -> vector<8x512xf32>
    %c20 = arith.constant 20 : index
    %c0_70 = arith.constant 0 : index
    %134 = vector.load %arg6[%c20, %c0_70] : memref<77x512xf32, #tpu.memory_space<vmem>>, vector<1x512xf32>
    %135 = vector.broadcast %134 : vector<1x512xf32> to vector<8x512xf32>
    %136 = arith.mulf %133, %135 : vector<8x512xf32>
    %c511_i32_71 = arith.constant 511 : i32
    %137 = tpu.dynamic_rotate %87 by %c511_i32_71 dim 1 : vector<8x512xf32>, i32 -> vector<8x512xf32>
    %c22 = arith.constant 22 : index
    %c0_72 = arith.constant 0 : index
    %138 = vector.load %arg6[%c22, %c0_72] : memref<77x512xf32, #tpu.memory_space<vmem>>, vector<1x512xf32>
    %139 = vector.broadcast %138 : vector<1x512xf32> to vector<8x512xf32>
    %140 = arith.mulf %137, %139 : vector<8x512xf32>
    %c510_i32 = arith.constant 510 : i32
    %141 = tpu.dynamic_rotate %87 by %c510_i32 dim 1 : vector<8x512xf32>, i32 -> vector<8x512xf32>
    %c23 = arith.constant 23 : index
    %c0_73 = arith.constant 0 : index
    %142 = vector.load %arg6[%c23, %c0_73] : memref<77x512xf32, #tpu.memory_space<vmem>>, vector<1x512xf32>
    %143 = vector.broadcast %142 : vector<1x512xf32> to vector<8x512xf32>
    %144 = arith.mulf %141, %143 : vector<8x512xf32>
    %c498_i32 = arith.constant 498 : i32
    %145 = tpu.dynamic_rotate %87 by %c498_i32 dim 1 : vector<8x512xf32>, i32 -> vector<8x512xf32>
    %c24 = arith.constant 24 : index
    %c0_74 = arith.constant 0 : index
    %146 = vector.load %arg6[%c24, %c0_74] : memref<77x512xf32, #tpu.memory_space<vmem>>, vector<1x512xf32>
    %147 = vector.broadcast %146 : vector<1x512xf32> to vector<8x512xf32>
    %148 = arith.mulf %145, %147 : vector<8x512xf32>
    %c497_i32_75 = arith.constant 497 : i32
    %149 = tpu.dynamic_rotate %87 by %c497_i32_75 dim 1 : vector<8x512xf32>, i32 -> vector<8x512xf32>
    %c25 = arith.constant 25 : index
    %c0_76 = arith.constant 0 : index
    %150 = vector.load %arg6[%c25, %c0_76] : memref<77x512xf32, #tpu.memory_space<vmem>>, vector<1x512xf32>
    %151 = vector.broadcast %150 : vector<1x512xf32> to vector<8x512xf32>
    %152 = arith.mulf %149, %151 : vector<8x512xf32>
    %c496_i32_77 = arith.constant 496 : i32
    %153 = tpu.dynamic_rotate %87 by %c496_i32_77 dim 1 : vector<8x512xf32>, i32 -> vector<8x512xf32>
    %c26 = arith.constant 26 : index
    %c0_78 = arith.constant 0 : index
    %154 = vector.load %arg6[%c26, %c0_78] : memref<77x512xf32, #tpu.memory_space<vmem>>, vector<1x512xf32>
    %155 = vector.broadcast %154 : vector<1x512xf32> to vector<8x512xf32>
    %156 = arith.mulf %153, %155 : vector<8x512xf32>
    %c495_i32_79 = arith.constant 495 : i32
    %157 = tpu.dynamic_rotate %87 by %c495_i32_79 dim 1 : vector<8x512xf32>, i32 -> vector<8x512xf32>
    %c27 = arith.constant 27 : index
    %c0_80 = arith.constant 0 : index
    %158 = vector.load %arg6[%c27, %c0_80] : memref<77x512xf32, #tpu.memory_space<vmem>>, vector<1x512xf32>
    %159 = vector.broadcast %158 : vector<1x512xf32> to vector<8x512xf32>
    %160 = arith.mulf %157, %159 : vector<8x512xf32>
    %c494_i32 = arith.constant 494 : i32
    %161 = tpu.dynamic_rotate %87 by %c494_i32 dim 1 : vector<8x512xf32>, i32 -> vector<8x512xf32>
    %c28 = arith.constant 28 : index
    %c0_81 = arith.constant 0 : index
    %162 = vector.load %arg6[%c28, %c0_81] : memref<77x512xf32, #tpu.memory_space<vmem>>, vector<1x512xf32>
    %163 = vector.broadcast %162 : vector<1x512xf32> to vector<8x512xf32>
    %164 = arith.mulf %161, %163 : vector<8x512xf32>
    %c482_i32 = arith.constant 482 : i32
    %165 = tpu.dynamic_rotate %87 by %c482_i32 dim 1 : vector<8x512xf32>, i32 -> vector<8x512xf32>
    %c29 = arith.constant 29 : index
    %c0_82 = arith.constant 0 : index
    %166 = vector.load %arg6[%c29, %c0_82] : memref<77x512xf32, #tpu.memory_space<vmem>>, vector<1x512xf32>
    %167 = vector.broadcast %166 : vector<1x512xf32> to vector<8x512xf32>
    %168 = arith.mulf %165, %167 : vector<8x512xf32>
    %c481_i32 = arith.constant 481 : i32
    %169 = tpu.dynamic_rotate %87 by %c481_i32 dim 1 : vector<8x512xf32>, i32 -> vector<8x512xf32>
    %c30 = arith.constant 30 : index
    %c0_83 = arith.constant 0 : index
    %170 = vector.load %arg6[%c30, %c0_83] : memref<77x512xf32, #tpu.memory_space<vmem>>, vector<1x512xf32>
    %171 = vector.broadcast %170 : vector<1x512xf32> to vector<8x512xf32>
    %172 = arith.mulf %169, %171 : vector<8x512xf32>
    %c480_i32 = arith.constant 480 : i32
    %173 = tpu.dynamic_rotate %87 by %c480_i32 dim 1 : vector<8x512xf32>, i32 -> vector<8x512xf32>
    %c31 = arith.constant 31 : index
    %c0_84 = arith.constant 0 : index
    %174 = vector.load %arg6[%c31, %c0_84] : memref<77x512xf32, #tpu.memory_space<vmem>>, vector<1x512xf32>
    %175 = vector.broadcast %174 : vector<1x512xf32> to vector<8x512xf32>
    %176 = arith.mulf %173, %175 : vector<8x512xf32>
    %c479_i32 = arith.constant 479 : i32
    %177 = tpu.dynamic_rotate %87 by %c479_i32 dim 1 : vector<8x512xf32>, i32 -> vector<8x512xf32>
    %c32 = arith.constant 32 : index
    %c0_85 = arith.constant 0 : index
    %178 = vector.load %arg6[%c32, %c0_85] : memref<77x512xf32, #tpu.memory_space<vmem>>, vector<1x512xf32>
    %179 = vector.broadcast %178 : vector<1x512xf32> to vector<8x512xf32>
    %180 = arith.mulf %177, %179 : vector<8x512xf32>
    %c478_i32 = arith.constant 478 : i32
    %181 = tpu.dynamic_rotate %87 by %c478_i32 dim 1 : vector<8x512xf32>, i32 -> vector<8x512xf32>
    %c33 = arith.constant 33 : index
    %c0_86 = arith.constant 0 : index
    %182 = vector.load %arg6[%c33, %c0_86] : memref<77x512xf32, #tpu.memory_space<vmem>>, vector<1x512xf32>
    %183 = vector.broadcast %182 : vector<1x512xf32> to vector<8x512xf32>
    %184 = arith.mulf %181, %183 : vector<8x512xf32>
    %185 = tpu.concatenate %92, %96, %100, %104, %108, %112, %116, %120, %124, %128, %132, %136, %87, %140, %144, %148 in 0 : vector<8x512xf32>, vector<8x512xf32>, vector<8x512xf32>, vector<8x512xf32>, vector<8x512xf32>, vector<8x512xf32>, vector<8x512xf32>, vector<8x512xf32>, vector<8x512xf32>, vector<8x512xf32>, vector<8x512xf32>, vector<8x512xf32>, vector<8x512xf32>, vector<8x512xf32>, vector<8x512xf32>, vector<8x512xf32> -> vector<128x512xf32>
    %186 = tpu.concatenate %152, %156, %160, %164, %168, %172, %176, %180, %184 in 0 : vector<8x512xf32>, vector<8x512xf32>, vector<8x512xf32>, vector<8x512xf32>, vector<8x512xf32>, vector<8x512xf32>, vector<8x512xf32>, vector<8x512xf32>, vector<8x512xf32> -> vector<72x512xf32>
    %187 = tpu.concatenate %185, %186 in 0 : vector<128x512xf32>, vector<72x512xf32> -> vector<200x512xf32>
    %188 = arith.truncf %187 : vector<200x512xf32> to vector<200x512xbf16>
    %cst_87 = arith.constant dense<0.000000e+00> : vector<16x512xf32>
    %189 = tpu.matmul %88, %188, %cst_87 {dimension_numbers = #tpu.dot_dimension_numbers<[1], [0], [0], [1], [0, 0, 1, 1], [], []>} : vector<16x200xbf16>, vector<200x512xbf16>, vector<16x512xf32> -> vector<16x512xf32>
    %190 = arith.truncf %189 : vector<16x512xf32> to vector<16x512xbf16>
    %cst_88 = arith.constant dense<0.000000e+00> : vector<16x128xf32>
    %191 = tpu.matmul %190, %0, %cst_88 {dimension_numbers = #tpu.dot_dimension_numbers<[1], [0], [0], [1], [0, 0, 1, 1], [], []>} : vector<16x512xbf16>, vector<512x128xbf16>, vector<16x128xf32> -> vector<16x128xf32>
    %c16_89 = arith.constant 16 : index
    %c0_90 = arith.constant 0 : index
    %192 = vector.load %arg3[%c16_89, %c0_90] : memref<209x1xf32, #tpu.memory_space<vmem>>, vector<16x1xf32>
    %193 = vector.broadcast %192 : vector<16x1xf32> to vector<16x128xf32>
    %194 = arith.addf %191, %193 : vector<16x128xf32>
    %cst_91 = arith.constant 0.000000e+00 : f32
    %195 = vector.broadcast %cst_91 : f32 to vector<16x128xf32>
    %196 = arith.maximumf %194, %195 : vector<16x128xf32>
    %c32_92 = arith.constant 32 : index
    %c0_93 = arith.constant 0 : index
    %197 = vector.load %arg2[%c32_92, %c0_93] : memref<209x400xbf16, #tpu.memory_space<vmem>>, vector<16x144xbf16>
    %c9_i32 = arith.constant 9 : i32
    %198 = tpu.dynamic_rotate %196 by %c9_i32 dim 1 : vector<16x128xf32>, i32 -> vector<16x128xf32>
    %c34 = arith.constant 34 : index
    %c0_94 = arith.constant 0 : index
    %199 = vector.load %arg6[%c34, %c0_94] : memref<77x512xf32, #tpu.memory_space<vmem>>, vector<1x128xf32>
    %200 = vector.broadcast %199 : vector<1x128xf32> to vector<16x128xf32>
    %201 = arith.mulf %198, %200 : vector<16x128xf32>
    %c8_i32 = arith.constant 8 : i32
    %202 = tpu.dynamic_rotate %196 by %c8_i32 dim 1 : vector<16x128xf32>, i32 -> vector<16x128xf32>
    %c35 = arith.constant 35 : index
    %c0_95 = arith.constant 0 : index
    %203 = vector.load %arg6[%c35, %c0_95] : memref<77x512xf32, #tpu.memory_space<vmem>>, vector<1x128xf32>
    %204 = vector.broadcast %203 : vector<1x128xf32> to vector<16x128xf32>
    %205 = arith.mulf %202, %204 : vector<16x128xf32>
    %c7_i32 = arith.constant 7 : i32
    %206 = tpu.dynamic_rotate %196 by %c7_i32 dim 1 : vector<16x128xf32>, i32 -> vector<16x128xf32>
    %c36 = arith.constant 36 : index
    %c0_96 = arith.constant 0 : index
    %207 = vector.load %arg6[%c36, %c0_96] : memref<77x512xf32, #tpu.memory_space<vmem>>, vector<1x128xf32>
    %208 = vector.broadcast %207 : vector<1x128xf32> to vector<16x128xf32>
    %209 = arith.mulf %206, %208 : vector<16x128xf32>
    %c1_i32_97 = arith.constant 1 : i32
    %210 = tpu.dynamic_rotate %196 by %c1_i32_97 dim 1 : vector<16x128xf32>, i32 -> vector<16x128xf32>
    %c37 = arith.constant 37 : index
    %c0_98 = arith.constant 0 : index
    %211 = vector.load %arg6[%c37, %c0_98] : memref<77x512xf32, #tpu.memory_space<vmem>>, vector<1x128xf32>
    %212 = vector.broadcast %211 : vector<1x128xf32> to vector<16x128xf32>
    %213 = arith.mulf %210, %212 : vector<16x128xf32>
    %c127_i32 = arith.constant 127 : i32
    %214 = tpu.dynamic_rotate %196 by %c127_i32 dim 1 : vector<16x128xf32>, i32 -> vector<16x128xf32>
    %c39 = arith.constant 39 : index
    %c0_99 = arith.constant 0 : index
    %215 = vector.load %arg6[%c39, %c0_99] : memref<77x512xf32, #tpu.memory_space<vmem>>, vector<1x128xf32>
    %216 = vector.broadcast %215 : vector<1x128xf32> to vector<16x128xf32>
    %217 = arith.mulf %214, %216 : vector<16x128xf32>
    %c121_i32 = arith.constant 121 : i32
    %218 = tpu.dynamic_rotate %196 by %c121_i32 dim 1 : vector<16x128xf32>, i32 -> vector<16x128xf32>
    %c40 = arith.constant 40 : index
    %c0_100 = arith.constant 0 : index
    %219 = vector.load %arg6[%c40, %c0_100] : memref<77x512xf32, #tpu.memory_space<vmem>>, vector<1x128xf32>
    %220 = vector.broadcast %219 : vector<1x128xf32> to vector<16x128xf32>
    %221 = arith.mulf %218, %220 : vector<16x128xf32>
    %c120_i32 = arith.constant 120 : i32
    %222 = tpu.dynamic_rotate %196 by %c120_i32 dim 1 : vector<16x128xf32>, i32 -> vector<16x128xf32>
    %c41 = arith.constant 41 : index
    %c0_101 = arith.constant 0 : index
    %223 = vector.load %arg6[%c41, %c0_101] : memref<77x512xf32, #tpu.memory_space<vmem>>, vector<1x128xf32>
    %224 = vector.broadcast %223 : vector<1x128xf32> to vector<16x128xf32>
    %225 = arith.mulf %222, %224 : vector<16x128xf32>
    %c119_i32 = arith.constant 119 : i32
    %226 = tpu.dynamic_rotate %196 by %c119_i32 dim 1 : vector<16x128xf32>, i32 -> vector<16x128xf32>
    %c42 = arith.constant 42 : index
    %c0_102 = arith.constant 0 : index
    %227 = vector.load %arg6[%c42, %c0_102] : memref<77x512xf32, #tpu.memory_space<vmem>>, vector<1x128xf32>
    %228 = vector.broadcast %227 : vector<1x128xf32> to vector<16x128xf32>
    %229 = arith.mulf %226, %228 : vector<16x128xf32>
    %230 = tpu.concatenate %201, %205, %209, %213, %196, %217, %221, %225, %229 in 0 : vector<16x128xf32>, vector<16x128xf32>, vector<16x128xf32>, vector<16x128xf32>, vector<16x128xf32>, vector<16x128xf32>, vector<16x128xf32>, vector<16x128xf32>, vector<16x128xf32> -> vector<144x128xf32>
    %231 = arith.truncf %230 : vector<144x128xf32> to vector<144x128xbf16>
    %cst_103 = arith.constant dense<0.000000e+00> : vector<16x128xf32>
    %232 = tpu.matmul %197, %231, %cst_103 {dimension_numbers = #tpu.dot_dimension_numbers<[1], [0], [0], [1], [0, 0, 1, 1], [], []>} : vector<16x144xbf16>, vector<144x128xbf16>, vector<16x128xf32> -> vector<16x128xf32>
    %c32_104 = arith.constant 32 : index
    %c0_105 = arith.constant 0 : index
    %233 = vector.load %arg3[%c32_104, %c0_105] : memref<209x1xf32, #tpu.memory_space<vmem>>, vector<16x1xf32>
    %234 = vector.broadcast %233 : vector<16x1xf32> to vector<16x128xf32>
    %235 = arith.addf %232, %234 : vector<16x128xf32>
    %cst_106 = arith.constant 0.000000e+00 : f32
    %236 = vector.broadcast %cst_106 : f32 to vector<16x128xf32>
    %237 = arith.maximumf %235, %236 : vector<16x128xf32>
    %c48 = arith.constant 48 : index
    %c0_107 = arith.constant 0 : index
    %238 = vector.load %arg2[%c48, %c0_107] : memref<209x400xbf16, #tpu.memory_space<vmem>>, vector<32x400xbf16>
    %c18_i32_108 = arith.constant 18 : i32
    %239 = tpu.dynamic_rotate %237 by %c18_i32_108 dim 1 : vector<16x128xf32>, i32 -> vector<16x128xf32>
    %c43 = arith.constant 43 : index
    %c0_109 = arith.constant 0 : index
    %240 = vector.load %arg6[%c43, %c0_109] : memref<77x512xf32, #tpu.memory_space<vmem>>, vector<1x128xf32>
    %241 = vector.broadcast %240 : vector<1x128xf32> to vector<16x128xf32>
    %242 = arith.mulf %239, %241 : vector<16x128xf32>
    %c17_i32_110 = arith.constant 17 : i32
    %243 = tpu.dynamic_rotate %237 by %c17_i32_110 dim 1 : vector<16x128xf32>, i32 -> vector<16x128xf32>
    %c44 = arith.constant 44 : index
    %c0_111 = arith.constant 0 : index
    %244 = vector.load %arg6[%c44, %c0_111] : memref<77x512xf32, #tpu.memory_space<vmem>>, vector<1x128xf32>
    %245 = vector.broadcast %244 : vector<1x128xf32> to vector<16x128xf32>
    %246 = arith.mulf %243, %245 : vector<16x128xf32>
    %c16_i32_112 = arith.constant 16 : i32
    %247 = tpu.dynamic_rotate %237 by %c16_i32_112 dim 1 : vector<16x128xf32>, i32 -> vector<16x128xf32>
    %c45 = arith.constant 45 : index
    %c0_113 = arith.constant 0 : index
    %248 = vector.load %arg6[%c45, %c0_113] : memref<77x512xf32, #tpu.memory_space<vmem>>, vector<1x128xf32>
    %249 = vector.broadcast %248 : vector<1x128xf32> to vector<16x128xf32>
    %250 = arith.mulf %247, %249 : vector<16x128xf32>
    %c15_i32_114 = arith.constant 15 : i32
    %251 = tpu.dynamic_rotate %237 by %c15_i32_114 dim 1 : vector<16x128xf32>, i32 -> vector<16x128xf32>
    %c46 = arith.constant 46 : index
    %c0_115 = arith.constant 0 : index
    %252 = vector.load %arg6[%c46, %c0_115] : memref<77x512xf32, #tpu.memory_space<vmem>>, vector<1x128xf32>
    %253 = vector.broadcast %252 : vector<1x128xf32> to vector<16x128xf32>
    %254 = arith.mulf %251, %253 : vector<16x128xf32>
    %c14_i32_116 = arith.constant 14 : i32
    %255 = tpu.dynamic_rotate %237 by %c14_i32_116 dim 1 : vector<16x128xf32>, i32 -> vector<16x128xf32>
    %c47 = arith.constant 47 : index
    %c0_117 = arith.constant 0 : index
    %256 = vector.load %arg6[%c47, %c0_117] : memref<77x512xf32, #tpu.memory_space<vmem>>, vector<1x128xf32>
    %257 = vector.broadcast %256 : vector<1x128xf32> to vector<16x128xf32>
    %258 = arith.mulf %255, %257 : vector<16x128xf32>
    %c10_i32 = arith.constant 10 : i32
    %259 = tpu.dynamic_rotate %237 by %c10_i32 dim 1 : vector<16x128xf32>, i32 -> vector<16x128xf32>
    %c48_118 = arith.constant 48 : index
    %c0_119 = arith.constant 0 : index
    %260 = vector.load %arg6[%c48_118, %c0_119] : memref<77x512xf32, #tpu.memory_space<vmem>>, vector<1x128xf32>
    %261 = vector.broadcast %260 : vector<1x128xf32> to vector<16x128xf32>
    %262 = arith.mulf %259, %261 : vector<16x128xf32>
    %c9_i32_120 = arith.constant 9 : i32
    %263 = tpu.dynamic_rotate %237 by %c9_i32_120 dim 1 : vector<16x128xf32>, i32 -> vector<16x128xf32>
    %c49 = arith.constant 49 : index
    %c0_121 = arith.constant 0 : index
    %264 = vector.load %arg6[%c49, %c0_121] : memref<77x512xf32, #tpu.memory_space<vmem>>, vector<1x128xf32>
    %265 = vector.broadcast %264 : vector<1x128xf32> to vector<16x128xf32>
    %266 = arith.mulf %263, %265 : vector<16x128xf32>
    %c8_i32_122 = arith.constant 8 : i32
    %267 = tpu.dynamic_rotate %237 by %c8_i32_122 dim 1 : vector<16x128xf32>, i32 -> vector<16x128xf32>
    %c50 = arith.constant 50 : index
    %c0_123 = arith.constant 0 : index
    %268 = vector.load %arg6[%c50, %c0_123] : memref<77x512xf32, #tpu.memory_space<vmem>>, vector<1x128xf32>
    %269 = vector.broadcast %268 : vector<1x128xf32> to vector<16x128xf32>
    %270 = arith.mulf %267, %269 : vector<16x128xf32>
    %c7_i32_124 = arith.constant 7 : i32
    %271 = tpu.dynamic_rotate %237 by %c7_i32_124 dim 1 : vector<16x128xf32>, i32 -> vector<16x128xf32>
    %c51 = arith.constant 51 : index
    %c0_125 = arith.constant 0 : index
    %272 = vector.load %arg6[%c51, %c0_125] : memref<77x512xf32, #tpu.memory_space<vmem>>, vector<1x128xf32>
    %273 = vector.broadcast %272 : vector<1x128xf32> to vector<16x128xf32>
    %274 = arith.mulf %271, %273 : vector<16x128xf32>
    %c6_i32 = arith.constant 6 : i32
    %275 = tpu.dynamic_rotate %237 by %c6_i32 dim 1 : vector<16x128xf32>, i32 -> vector<16x128xf32>
    %c52 = arith.constant 52 : index
    %c0_126 = arith.constant 0 : index
    %276 = vector.load %arg6[%c52, %c0_126] : memref<77x512xf32, #tpu.memory_space<vmem>>, vector<1x128xf32>
    %277 = vector.broadcast %276 : vector<1x128xf32> to vector<16x128xf32>
    %278 = arith.mulf %275, %277 : vector<16x128xf32>
    %c2_i32_127 = arith.constant 2 : i32
    %279 = tpu.dynamic_rotate %237 by %c2_i32_127 dim 1 : vector<16x128xf32>, i32 -> vector<16x128xf32>
    %c53 = arith.constant 53 : index
    %c0_128 = arith.constant 0 : index
    %280 = vector.load %arg6[%c53, %c0_128] : memref<77x512xf32, #tpu.memory_space<vmem>>, vector<1x128xf32>
    %281 = vector.broadcast %280 : vector<1x128xf32> to vector<16x128xf32>
    %282 = arith.mulf %279, %281 : vector<16x128xf32>
    %c1_i32_129 = arith.constant 1 : i32
    %283 = tpu.dynamic_rotate %237 by %c1_i32_129 dim 1 : vector<16x128xf32>, i32 -> vector<16x128xf32>
    %c54 = arith.constant 54 : index
    %c0_130 = arith.constant 0 : index
    %284 = vector.load %arg6[%c54, %c0_130] : memref<77x512xf32, #tpu.memory_space<vmem>>, vector<1x128xf32>
    %285 = vector.broadcast %284 : vector<1x128xf32> to vector<16x128xf32>
    %286 = arith.mulf %283, %285 : vector<16x128xf32>
    %c127_i32_131 = arith.constant 127 : i32
    %287 = tpu.dynamic_rotate %237 by %c127_i32_131 dim 1 : vector<16x128xf32>, i32 -> vector<16x128xf32>
    %c56 = arith.constant 56 : index
    %c0_132 = arith.constant 0 : index
    %288 = vector.load %arg6[%c56, %c0_132] : memref<77x512xf32, #tpu.memory_space<vmem>>, vector<1x128xf32>
    %289 = vector.broadcast %288 : vector<1x128xf32> to vector<16x128xf32>
    %290 = arith.mulf %287, %289 : vector<16x128xf32>
    %c126_i32 = arith.constant 126 : i32
    %291 = tpu.dynamic_rotate %237 by %c126_i32 dim 1 : vector<16x128xf32>, i32 -> vector<16x128xf32>
    %c57 = arith.constant 57 : index
    %c0_133 = arith.constant 0 : index
    %292 = vector.load %arg6[%c57, %c0_133] : memref<77x512xf32, #tpu.memory_space<vmem>>, vector<1x128xf32>
    %293 = vector.broadcast %292 : vector<1x128xf32> to vector<16x128xf32>
    %294 = arith.mulf %291, %293 : vector<16x128xf32>
    %c122_i32 = arith.constant 122 : i32
    %295 = tpu.dynamic_rotate %237 by %c122_i32 dim 1 : vector<16x128xf32>, i32 -> vector<16x128xf32>
    %c58 = arith.constant 58 : index
    %c0_134 = arith.constant 0 : index
    %296 = vector.load %arg6[%c58, %c0_134] : memref<77x512xf32, #tpu.memory_space<vmem>>, vector<1x128xf32>
    %297 = vector.broadcast %296 : vector<1x128xf32> to vector<16x128xf32>
    %298 = arith.mulf %295, %297 : vector<16x128xf32>
    %c121_i32_135 = arith.constant 121 : i32
    %299 = tpu.dynamic_rotate %237 by %c121_i32_135 dim 1 : vector<16x128xf32>, i32 -> vector<16x128xf32>
    %c59 = arith.constant 59 : index
    %c0_136 = arith.constant 0 : index
    %300 = vector.load %arg6[%c59, %c0_136] : memref<77x512xf32, #tpu.memory_space<vmem>>, vector<1x128xf32>
    %301 = vector.broadcast %300 : vector<1x128xf32> to vector<16x128xf32>
    %302 = arith.mulf %299, %301 : vector<16x128xf32>
    %c120_i32_137 = arith.constant 120 : i32
    %303 = tpu.dynamic_rotate %237 by %c120_i32_137 dim 1 : vector<16x128xf32>, i32 -> vector<16x128xf32>
    %c60 = arith.constant 60 : index
    %c0_138 = arith.constant 0 : index
    %304 = vector.load %arg6[%c60, %c0_138] : memref<77x512xf32, #tpu.memory_space<vmem>>, vector<1x128xf32>
    %305 = vector.broadcast %304 : vector<1x128xf32> to vector<16x128xf32>
    %306 = arith.mulf %303, %305 : vector<16x128xf32>
    %c119_i32_139 = arith.constant 119 : i32
    %307 = tpu.dynamic_rotate %237 by %c119_i32_139 dim 1 : vector<16x128xf32>, i32 -> vector<16x128xf32>
    %c61 = arith.constant 61 : index
    %c0_140 = arith.constant 0 : index
    %308 = vector.load %arg6[%c61, %c0_140] : memref<77x512xf32, #tpu.memory_space<vmem>>, vector<1x128xf32>
    %309 = vector.broadcast %308 : vector<1x128xf32> to vector<16x128xf32>
    %310 = arith.mulf %307, %309 : vector<16x128xf32>
    %c118_i32 = arith.constant 118 : i32
    %311 = tpu.dynamic_rotate %237 by %c118_i32 dim 1 : vector<16x128xf32>, i32 -> vector<16x128xf32>
    %c62 = arith.constant 62 : index
    %c0_141 = arith.constant 0 : index
    %312 = vector.load %arg6[%c62, %c0_141] : memref<77x512xf32, #tpu.memory_space<vmem>>, vector<1x128xf32>
    %313 = vector.broadcast %312 : vector<1x128xf32> to vector<16x128xf32>
    %314 = arith.mulf %311, %313 : vector<16x128xf32>
    %c114_i32 = arith.constant 114 : i32
    %315 = tpu.dynamic_rotate %237 by %c114_i32 dim 1 : vector<16x128xf32>, i32 -> vector<16x128xf32>
    %c63 = arith.constant 63 : index
    %c0_142 = arith.constant 0 : index
    %316 = vector.load %arg6[%c63, %c0_142] : memref<77x512xf32, #tpu.memory_space<vmem>>, vector<1x128xf32>
    %317 = vector.broadcast %316 : vector<1x128xf32> to vector<16x128xf32>
    %318 = arith.mulf %315, %317 : vector<16x128xf32>
    %c113_i32 = arith.constant 113 : i32
    %319 = tpu.dynamic_rotate %237 by %c113_i32 dim 1 : vector<16x128xf32>, i32 -> vector<16x128xf32>
    %c64 = arith.constant 64 : index
    %c0_143 = arith.constant 0 : index
    %320 = vector.load %arg6[%c64, %c0_143] : memref<77x512xf32, #tpu.memory_space<vmem>>, vector<1x128xf32>
    %321 = vector.broadcast %320 : vector<1x128xf32> to vector<16x128xf32>
    %322 = arith.mulf %319, %321 : vector<16x128xf32>
    %c112_i32 = arith.constant 112 : i32
    %323 = tpu.dynamic_rotate %237 by %c112_i32 dim 1 : vector<16x128xf32>, i32 -> vector<16x128xf32>
    %c65 = arith.constant 65 : index
    %c0_144 = arith.constant 0 : index
    %324 = vector.load %arg6[%c65, %c0_144] : memref<77x512xf32, #tpu.memory_space<vmem>>, vector<1x128xf32>
    %325 = vector.broadcast %324 : vector<1x128xf32> to vector<16x128xf32>
    %326 = arith.mulf %323, %325 : vector<16x128xf32>
    %c111_i32 = arith.constant 111 : i32
    %327 = tpu.dynamic_rotate %237 by %c111_i32 dim 1 : vector<16x128xf32>, i32 -> vector<16x128xf32>
    %c66 = arith.constant 66 : index
    %c0_145 = arith.constant 0 : index
    %328 = vector.load %arg6[%c66, %c0_145] : memref<77x512xf32, #tpu.memory_space<vmem>>, vector<1x128xf32>
    %329 = vector.broadcast %328 : vector<1x128xf32> to vector<16x128xf32>
    %330 = arith.mulf %327, %329 : vector<16x128xf32>
    %c110_i32 = arith.constant 110 : i32
    %331 = tpu.dynamic_rotate %237 by %c110_i32 dim 1 : vector<16x128xf32>, i32 -> vector<16x128xf32>
    %c67 = arith.constant 67 : index
    %c0_146 = arith.constant 0 : index
    %332 = vector.load %arg6[%c67, %c0_146] : memref<77x512xf32, #tpu.memory_space<vmem>>, vector<1x128xf32>
    %333 = vector.broadcast %332 : vector<1x128xf32> to vector<16x128xf32>
    %334 = arith.mulf %331, %333 : vector<16x128xf32>
    %335 = tpu.concatenate %242, %246, %250, %254, %258, %262, %266, %270, %274, %278, %282, %286, %237, %290, %294, %298 in 0 : vector<16x128xf32>, vector<16x128xf32>, vector<16x128xf32>, vector<16x128xf32>, vector<16x128xf32>, vector<16x128xf32>, vector<16x128xf32>, vector<16x128xf32>, vector<16x128xf32>, vector<16x128xf32>, vector<16x128xf32>, vector<16x128xf32>, vector<16x128xf32>, vector<16x128xf32>, vector<16x128xf32>, vector<16x128xf32> -> vector<256x128xf32>
    %336 = tpu.concatenate %302, %306, %310, %314, %318, %322, %326, %330, %334 in 0 : vector<16x128xf32>, vector<16x128xf32>, vector<16x128xf32>, vector<16x128xf32>, vector<16x128xf32>, vector<16x128xf32>, vector<16x128xf32>, vector<16x128xf32>, vector<16x128xf32> -> vector<144x128xf32>
    %337 = tpu.concatenate %335, %336 in 0 : vector<256x128xf32>, vector<144x128xf32> -> vector<400x128xf32>
    %338 = arith.truncf %337 : vector<400x128xf32> to vector<400x128xbf16>
    %cst_147 = arith.constant dense<0.000000e+00> : vector<32x128xf32>
    %339 = tpu.matmul %238, %338, %cst_147 {dimension_numbers = #tpu.dot_dimension_numbers<[1], [0], [0], [1], [0, 0, 1, 1], [], []>} : vector<32x400xbf16>, vector<400x128xbf16>, vector<32x128xf32> -> vector<32x128xf32>
    %340 = arith.truncf %339 : vector<32x128xf32> to vector<32x128xbf16>
    %cst_148 = arith.constant dense<0.000000e+00> : vector<32x32xf32>
    %341 = tpu.matmul %340, %3, %cst_148 {dimension_numbers = #tpu.dot_dimension_numbers<[1], [0], [0], [1], [0, 0, 1, 1], [], []>} : vector<32x128xbf16>, vector<128x32xbf16>, vector<32x32xf32> -> vector<32x32xf32>
    %c48_149 = arith.constant 48 : index
    %c0_150 = arith.constant 0 : index
    %342 = vector.load %arg3[%c48_149, %c0_150] : memref<209x1xf32, #tpu.memory_space<vmem>>, vector<32x1xf32>
    %343 = vector.broadcast %342 : vector<32x1xf32> to vector<32x32xf32>
    %344 = arith.addf %341, %343 : vector<32x32xf32>
    %cst_151 = arith.constant 0.000000e+00 : f32
    %345 = vector.broadcast %cst_151 : f32 to vector<32x32xf32>
    %346 = arith.maximumf %344, %345 : vector<32x32xf32>
    %c80 = arith.constant 80 : index
    %c0_152 = arith.constant 0 : index
    %347 = vector.load %arg2[%c80, %c0_152] : memref<209x400xbf16, #tpu.memory_space<vmem>>, vector<32x288xbf16>
    %c5_i32 = arith.constant 5 : i32
    %348 = tpu.dynamic_rotate %346 by %c5_i32 dim 1 : vector<32x32xf32>, i32 -> vector<32x32xf32>
    %c68 = arith.constant 68 : index
    %c0_153 = arith.constant 0 : index
    %349 = vector.load %arg6[%c68, %c0_153] : memref<77x512xf32, #tpu.memory_space<vmem>>, vector<1x32xf32>
    %350 = vector.broadcast %349 : vector<1x32xf32> to vector<32x32xf32>
    %351 = arith.mulf %348, %350 : vector<32x32xf32>
    %c4_i32 = arith.constant 4 : i32
    %352 = tpu.dynamic_rotate %346 by %c4_i32 dim 1 : vector<32x32xf32>, i32 -> vector<32x32xf32>
    %c69 = arith.constant 69 : index
    %c0_154 = arith.constant 0 : index
    %353 = vector.load %arg6[%c69, %c0_154] : memref<77x512xf32, #tpu.memory_space<vmem>>, vector<1x32xf32>
    %354 = vector.broadcast %353 : vector<1x32xf32> to vector<32x32xf32>
    %355 = arith.mulf %352, %354 : vector<32x32xf32>
    %c3_i32 = arith.constant 3 : i32
    %356 = tpu.dynamic_rotate %346 by %c3_i32 dim 1 : vector<32x32xf32>, i32 -> vector<32x32xf32>
    %c70 = arith.constant 70 : index
    %c0_155 = arith.constant 0 : index
    %357 = vector.load %arg6[%c70, %c0_155] : memref<77x512xf32, #tpu.memory_space<vmem>>, vector<1x32xf32>
    %358 = vector.broadcast %357 : vector<1x32xf32> to vector<32x32xf32>
    %359 = arith.mulf %356, %358 : vector<32x32xf32>
    %c1_i32_156 = arith.constant 1 : i32
    %360 = tpu.dynamic_rotate %346 by %c1_i32_156 dim 1 : vector<32x32xf32>, i32 -> vector<32x32xf32>
    %c71 = arith.constant 71 : index
    %c0_157 = arith.constant 0 : index
    %361 = vector.load %arg6[%c71, %c0_157] : memref<77x512xf32, #tpu.memory_space<vmem>>, vector<1x32xf32>
    %362 = vector.broadcast %361 : vector<1x32xf32> to vector<32x32xf32>
    %363 = arith.mulf %360, %362 : vector<32x32xf32>
    %c31_i32_158 = arith.constant 31 : i32
    %364 = tpu.dynamic_rotate %346 by %c31_i32_158 dim 1 : vector<32x32xf32>, i32 -> vector<32x32xf32>
    %c73 = arith.constant 73 : index
    %c0_159 = arith.constant 0 : index
    %365 = vector.load %arg6[%c73, %c0_159] : memref<77x512xf32, #tpu.memory_space<vmem>>, vector<1x32xf32>
    %366 = vector.broadcast %365 : vector<1x32xf32> to vector<32x32xf32>
    %367 = arith.mulf %364, %366 : vector<32x32xf32>
    %c29_i32 = arith.constant 29 : i32
    %368 = tpu.dynamic_rotate %346 by %c29_i32 dim 1 : vector<32x32xf32>, i32 -> vector<32x32xf32>
    %c74 = arith.constant 74 : index
    %c0_160 = arith.constant 0 : index
    %369 = vector.load %arg6[%c74, %c0_160] : memref<77x512xf32, #tpu.memory_space<vmem>>, vector<1x32xf32>
    %370 = vector.broadcast %369 : vector<1x32xf32> to vector<32x32xf32>
    %371 = arith.mulf %368, %370 : vector<32x32xf32>
    %c28_i32 = arith.constant 28 : i32
    %372 = tpu.dynamic_rotate %346 by %c28_i32 dim 1 : vector<32x32xf32>, i32 -> vector<32x32xf32>
    %c75 = arith.constant 75 : index
    %c0_161 = arith.constant 0 : index
    %373 = vector.load %arg6[%c75, %c0_161] : memref<77x512xf32, #tpu.memory_space<vmem>>, vector<1x32xf32>
    %374 = vector.broadcast %373 : vector<1x32xf32> to vector<32x32xf32>
    %375 = arith.mulf %372, %374 : vector<32x32xf32>
    %c27_i32 = arith.constant 27 : i32
    %376 = tpu.dynamic_rotate %346 by %c27_i32 dim 1 : vector<32x32xf32>, i32 -> vector<32x32xf32>
    %c76 = arith.constant 76 : index
    %c0_162 = arith.constant 0 : index
    %377 = vector.load %arg6[%c76, %c0_162] : memref<77x512xf32, #tpu.memory_space<vmem>>, vector<1x32xf32>
    %378 = vector.broadcast %377 : vector<1x32xf32> to vector<32x32xf32>
    %379 = arith.mulf %376, %378 : vector<32x32xf32>
    %380 = tpu.concatenate %351, %355, %359, %363, %346, %367, %371, %375, %379 in 0 : vector<32x32xf32>, vector<32x32xf32>, vector<32x32xf32>, vector<32x32xf32>, vector<32x32xf32>, vector<32x32xf32>, vector<32x32xf32>, vector<32x32xf32>, vector<32x32xf32> -> vector<288x32xf32>
    %381 = arith.truncf %380 : vector<288x32xf32> to vector<288x32xbf16>
    %cst_163 = arith.constant dense<0.000000e+00> : vector<32x32xf32>
    %382 = tpu.matmul %347, %381, %cst_163 {dimension_numbers = #tpu.dot_dimension_numbers<[1], [0], [0], [1], [0, 0, 1, 1], [], []>} : vector<32x288xbf16>, vector<288x32xbf16>, vector<32x32xf32> -> vector<32x32xf32>
    %c80_164 = arith.constant 80 : index
    %c0_165 = arith.constant 0 : index
    %383 = vector.load %arg3[%c80_164, %c0_165] : memref<209x1xf32, #tpu.memory_space<vmem>>, vector<32x1xf32>
    %384 = vector.broadcast %383 : vector<32x1xf32> to vector<32x32xf32>
    %385 = arith.addf %382, %384 : vector<32x32xf32>
    %cst_166 = arith.constant 0.000000e+00 : f32
    %386 = vector.broadcast %cst_166 : f32 to vector<32x32xf32>
    %387 = arith.maximumf %385, %386 : vector<32x32xf32>
    %c112 = arith.constant 112 : index
    %c0_167 = arith.constant 0 : index
    %388 = vector.load %arg2[%c112, %c0_167] : memref<209x400xbf16, #tpu.memory_space<vmem>>, vector<32x32xbf16>
    %389 = arith.truncf %387 : vector<32x32xf32> to vector<32x32xbf16>
    %cst_168 = arith.constant dense<0.000000e+00> : vector<32x32xf32>
    %390 = tpu.matmul %388, %389, %cst_168 {dimension_numbers = #tpu.dot_dimension_numbers<[1], [0], [0], [1], [0, 0, 1, 1], [], []>} : vector<32x32xbf16>, vector<32x32xbf16>, vector<32x32xf32> -> vector<32x32xf32>
    %c112_169 = arith.constant 112 : index
    %c0_170 = arith.constant 0 : index
    %391 = vector.load %arg3[%c112_169, %c0_170] : memref<209x1xf32, #tpu.memory_space<vmem>>, vector<32x1xf32>
    %392 = vector.broadcast %391 : vector<32x1xf32> to vector<32x32xf32>
    %393 = arith.addf %390, %392 : vector<32x32xf32>
    %394 = arith.truncf %393 : vector<32x32xf32> to vector<32x32xbf16>
    %cst_171 = arith.constant dense<0.000000e+00> : vector<32x128xf32>
    %395 = tpu.matmul %394, %1, %cst_171 {dimension_numbers = #tpu.dot_dimension_numbers<[1], [0], [0], [1], [0, 0, 1, 1], [], []>} : vector<32x32xbf16>, vector<32x128xbf16>, vector<32x128xf32> -> vector<32x128xf32>
    %c144 = arith.constant 144 : index
    %c0_172 = arith.constant 0 : index
    %396 = vector.load %arg2[%c144, %c0_172] : memref<209x400xbf16, #tpu.memory_space<vmem>>, vector<32x16xbf16>
    %397 = arith.truncf %237 : vector<16x128xf32> to vector<16x128xbf16>
    %cst_173 = arith.constant dense<0.000000e+00> : vector<32x128xf32>
    %398 = tpu.matmul %396, %397, %cst_173 {dimension_numbers = #tpu.dot_dimension_numbers<[1], [0], [0], [1], [0, 0, 1, 1], [], []>} : vector<32x16xbf16>, vector<16x128xbf16>, vector<32x128xf32> -> vector<32x128xf32>
    %c144_174 = arith.constant 144 : index
    %c0_175 = arith.constant 0 : index
    %399 = vector.load %arg3[%c144_174, %c0_175] : memref<209x1xf32, #tpu.memory_space<vmem>>, vector<32x1xf32>
    %400 = vector.broadcast %399 : vector<32x1xf32> to vector<32x128xf32>
    %401 = arith.addf %398, %400 : vector<32x128xf32>
    %402 = arith.addf %395, %401 : vector<32x128xf32>
    %403 = arith.truncf %402 : vector<32x128xf32> to vector<32x128xbf16>
    %cst_176 = arith.constant dense<0.000000e+00> : vector<32x512xf32>
    %404 = tpu.matmul %403, %2, %cst_176 {dimension_numbers = #tpu.dot_dimension_numbers<[1], [0], [0], [1], [0, 0, 1, 1], [], []>} : vector<32x128xbf16>, vector<128x512xbf16>, vector<32x512xf32> -> vector<32x512xf32>
    %c176 = arith.constant 176 : index
    %c0_177 = arith.constant 0 : index
    %405 = vector.load %arg2[%c176, %c0_177] : memref<209x400xbf16, #tpu.memory_space<vmem>>, vector<32x8xbf16>
    %406 = arith.truncf %87 : vector<8x512xf32> to vector<8x512xbf16>
    %cst_178 = arith.constant dense<0.000000e+00> : vector<32x512xf32>
    %407 = tpu.matmul %405, %406, %cst_178 {dimension_numbers = #tpu.dot_dimension_numbers<[1], [0], [0], [1], [0, 0, 1, 1], [], []>} : vector<32x8xbf16>, vector<8x512xbf16>, vector<32x512xf32> -> vector<32x512xf32>
    %c176_179 = arith.constant 176 : index
    %c0_180 = arith.constant 0 : index
    %408 = vector.load %arg3[%c176_179, %c0_180] : memref<209x1xf32, #tpu.memory_space<vmem>>, vector<32x1xf32>
    %409 = vector.broadcast %408 : vector<32x1xf32> to vector<32x512xf32>
    %410 = arith.addf %407, %409 : vector<32x512xf32>
    %411 = arith.addf %404, %410 : vector<32x512xf32>
    %c208 = arith.constant 208 : index
    %c0_181 = arith.constant 0 : index
    %412 = vector.load %arg2[%c208, %c0_181] : memref<209x400xbf16, #tpu.memory_space<vmem>>, vector<1x288xbf16>
    %c17_i32_182 = arith.constant 17 : i32
    %413 = tpu.dynamic_rotate %411 by %c17_i32_182 dim 1 : vector<32x512xf32>, i32 -> vector<32x512xf32>
    %c0_183 = arith.constant 0 : index
    %c0_184 = arith.constant 0 : index
    %414 = vector.load %arg6[%c0_183, %c0_184] : memref<77x512xf32, #tpu.memory_space<vmem>>, vector<1x512xf32>
    %415 = vector.broadcast %414 : vector<1x512xf32> to vector<32x512xf32>
    %416 = arith.mulf %413, %415 : vector<32x512xf32>
    %c16_i32_185 = arith.constant 16 : i32
    %417 = tpu.dynamic_rotate %411 by %c16_i32_185 dim 1 : vector<32x512xf32>, i32 -> vector<32x512xf32>
    %c1_186 = arith.constant 1 : index
    %c0_187 = arith.constant 0 : index
    %418 = vector.load %arg6[%c1_186, %c0_187] : memref<77x512xf32, #tpu.memory_space<vmem>>, vector<1x512xf32>
    %419 = vector.broadcast %418 : vector<1x512xf32> to vector<32x512xf32>
    %420 = arith.mulf %417, %419 : vector<32x512xf32>
    %c15_i32_188 = arith.constant 15 : i32
    %421 = tpu.dynamic_rotate %411 by %c15_i32_188 dim 1 : vector<32x512xf32>, i32 -> vector<32x512xf32>
    %c2_189 = arith.constant 2 : index
    %c0_190 = arith.constant 0 : index
    %422 = vector.load %arg6[%c2_189, %c0_190] : memref<77x512xf32, #tpu.memory_space<vmem>>, vector<1x512xf32>
    %423 = vector.broadcast %422 : vector<1x512xf32> to vector<32x512xf32>
    %424 = arith.mulf %421, %423 : vector<32x512xf32>
    %c1_i32_191 = arith.constant 1 : i32
    %425 = tpu.dynamic_rotate %411 by %c1_i32_191 dim 1 : vector<32x512xf32>, i32 -> vector<32x512xf32>
    %c3_192 = arith.constant 3 : index
    %c0_193 = arith.constant 0 : index
    %426 = vector.load %arg6[%c3_192, %c0_193] : memref<77x512xf32, #tpu.memory_space<vmem>>, vector<1x512xf32>
    %427 = vector.broadcast %426 : vector<1x512xf32> to vector<32x512xf32>
    %428 = arith.mulf %425, %427 : vector<32x512xf32>
    %c511_i32_194 = arith.constant 511 : i32
    %429 = tpu.dynamic_rotate %411 by %c511_i32_194 dim 1 : vector<32x512xf32>, i32 -> vector<32x512xf32>
    %c5_195 = arith.constant 5 : index
    %c0_196 = arith.constant 0 : index
    %430 = vector.load %arg6[%c5_195, %c0_196] : memref<77x512xf32, #tpu.memory_space<vmem>>, vector<1x512xf32>
    %431 = vector.broadcast %430 : vector<1x512xf32> to vector<32x512xf32>
    %432 = arith.mulf %429, %431 : vector<32x512xf32>
    %c497_i32_197 = arith.constant 497 : i32
    %433 = tpu.dynamic_rotate %411 by %c497_i32_197 dim 1 : vector<32x512xf32>, i32 -> vector<32x512xf32>
    %c6_198 = arith.constant 6 : index
    %c0_199 = arith.constant 0 : index
    %434 = vector.load %arg6[%c6_198, %c0_199] : memref<77x512xf32, #tpu.memory_space<vmem>>, vector<1x512xf32>
    %435 = vector.broadcast %434 : vector<1x512xf32> to vector<32x512xf32>
    %436 = arith.mulf %433, %435 : vector<32x512xf32>
    %c496_i32_200 = arith.constant 496 : i32
    %437 = tpu.dynamic_rotate %411 by %c496_i32_200 dim 1 : vector<32x512xf32>, i32 -> vector<32x512xf32>
    %c7_201 = arith.constant 7 : index
    %c0_202 = arith.constant 0 : index
    %438 = vector.load %arg6[%c7_201, %c0_202] : memref<77x512xf32, #tpu.memory_space<vmem>>, vector<1x512xf32>
    %439 = vector.broadcast %438 : vector<1x512xf32> to vector<32x512xf32>
    %440 = arith.mulf %437, %439 : vector<32x512xf32>
    %c495_i32_203 = arith.constant 495 : i32
    %441 = tpu.dynamic_rotate %411 by %c495_i32_203 dim 1 : vector<32x512xf32>, i32 -> vector<32x512xf32>
    %c8_204 = arith.constant 8 : index
    %c0_205 = arith.constant 0 : index
    %442 = vector.load %arg6[%c8_204, %c0_205] : memref<77x512xf32, #tpu.memory_space<vmem>>, vector<1x512xf32>
    %443 = vector.broadcast %442 : vector<1x512xf32> to vector<32x512xf32>
    %444 = arith.mulf %441, %443 : vector<32x512xf32>
    %445 = tpu.concatenate %416, %420, %424, %428, %411, %432, %436, %440, %444 in 0 : vector<32x512xf32>, vector<32x512xf32>, vector<32x512xf32>, vector<32x512xf32>, vector<32x512xf32>, vector<32x512xf32>, vector<32x512xf32>, vector<32x512xf32>, vector<32x512xf32> -> vector<288x512xf32>
    %446 = arith.truncf %445 : vector<288x512xf32> to vector<288x512xbf16>
    %cst_206 = arith.constant dense<0.000000e+00> : vector<1x512xf32>
    %447 = tpu.matmul %412, %446, %cst_206 {dimension_numbers = #tpu.dot_dimension_numbers<[1], [0], [0], [1], [0, 0, 1, 1], [], []>} : vector<1x288xbf16>, vector<288x512xbf16>, vector<1x512xf32> -> vector<1x512xf32>
    %c208_207 = arith.constant 208 : index
    %c0_208 = arith.constant 0 : index
    %448 = vector.load %arg3[%c208_207, %c0_208] : memref<209x1xf32, #tpu.memory_space<vmem>>, vector<1x1xf32>
    %449 = vector.broadcast %448 : vector<1x1xf32> to vector<1x512xf32>
    %450 = arith.addf %447, %449 : vector<1x512xf32>
    %c0_209 = arith.constant 0 : index
    %c0_210 = arith.constant 0 : index
    %c0_211 = arith.constant 0 : index
    %451 = vector.load %arg7[%c0_209, %c0_210, %c0_211] : memref<1x1x512xf32, #tpu.memory_space<vmem>>, vector<1x1x512xf32>
    %452 = vector.shape_cast %451 : vector<1x1x512xf32> to vector<1x512xf32>
    %453 = vector.shape_cast %450 : vector<1x512xf32> to vector<1x1x512xf32>
    tpu.vector_store %arg7[%c0_209, %c0_210, %c0_211], %453 {strides = array<i32>} : memref<1x1x512xf32, #tpu.memory_space<vmem>>, vector<1x1x512xf32>,
    return
  }
  func.func @transform_0(%arg0: i32) -> (i32, i32, i32) {
    %c0_i32 = arith.constant 0 : i32
    %c0_i32_0 = arith.constant 0 : i32
    %c0_i32_1 = arith.constant 0 : i32
    return %arg0, %c0_i32, %c0_i32_0 : i32, i32, i32
  }
  func.func @transform_1(%arg0: i32) -> (i32, i32) {
    %c0_i32 = arith.constant 0 : i32
    %c0_i32_0 = arith.constant 0 : i32
    %c0_i32_1 = arith.constant 0 : i32
    return %c0_i32, %c0_i32_0 : i32, i32
  }
  func.func @transform_2(%arg0: i32) -> (i32, i32) {
    %c0_i32 = arith.constant 0 : i32
    %c0_i32_0 = arith.constant 0 : i32
    %c0_i32_1 = arith.constant 0 : i32
    return %c0_i32, %c0_i32_0 : i32, i32
  }
  func.func @transform_3(%arg0: i32) -> (i32, i32) {
    %c0_i32 = arith.constant 0 : i32
    %c0_i32_0 = arith.constant 0 : i32
    %c0_i32_1 = arith.constant 0 : i32
    return %c0_i32, %c0_i32_0 : i32, i32
  }
  func.func @transform_4(%arg0: i32) -> (i32, i32) {
    %c0_i32 = arith.constant 0 : i32
    %c0_i32_0 = arith.constant 0 : i32
    %c0_i32_1 = arith.constant 0 : i32
    return %c0_i32, %c0_i32_0 : i32, i32
  }
  func.func @transform_5(%arg0: i32) -> (i32, i32) {
    %c0_i32 = arith.constant 0 : i32
    %c0_i32_0 = arith.constant 0 : i32
    %c0_i32_1 = arith.constant 0 : i32
    return %c0_i32, %c0_i32_0 : i32, i32
  }
  func.func @transform_6(%arg0: i32) -> (i32, i32, i32) {
    %c0_i32 = arith.constant 0 : i32
    %c0_i32_0 = arith.constant 0 : i32
    %c0_i32_1 = arith.constant 0 : i32
    return %arg0, %c0_i32, %c0_i32_0 : i32, i32, i32
  }
}

</mosaic_0001>

<llo_original>
// kernel: feature_net_forward.1
$region0: #{feature_net_forward.1}
  #allocation0 [shape = 'u32[]', space=smem, size = 0x4, offset = 0x4, fixed_abs, tag = 'smem constant byte address 0x4 - core index']
  #allocation1 [shape = 'u32[144,128]{1,0:T(1,128)}', space=vmem, size = 0x12000, scoped, tag = 'internal scratch']
  %s0 = inlined_call_operand.vmem [shape: f32[1,8,512], index: 0, kind: input, shape index: {}]
  %s1 = inlined_call_operand.vmem [shape: bf16[209,400], index: 1, kind: input, shape index: {}]
  %s2 = inlined_call_operand.vmem [shape: f32[209,1], index: 2, kind: input, shape index: {}]
  %s3 = inlined_call_operand.vmem [shape: bf16[544,128], index: 3, kind: input, shape index: {}]
  %s4 = inlined_call_operand.vmem [shape: bf16[128,544], index: 4, kind: input, shape index: {}]
  %s5 = inlined_call_operand.vmem [shape: f32[77,512], index: 5, kind: input, shape index: {}]
  %s6 = inlined_call_operand.vmem [shape: f32[1,1,512], index: 6, kind: output, shape index: {}]
  %s7 = sld [smem:[#allocation0]]
  $region34: #{feature_net_forward.1} parent=0
    _
  %s9 = ssub.s32 1, %s7
  %s10 = scalar_select 0, %s9, %s7
  // Predicated region
  $region2: #{feature_net_forward.1} parent=0 // pred_check
    _
  $region3: #{feature_net_forward.1} parent=0 // pred_check_branch
    %12 = sbr.rel (0) target = $region5
  $region4: #{feature_net_forward.1} parent=0 // pred_region
    _
  $region5: #{feature_net_forward.1} parent=0 // pred_fallthru
    _
  // Predicated region
  $region6: #{feature_net_forward.1} parent=0 // pred_check
    _
  $region7: #{feature_net_forward.1} parent=0 // pred_check_branch
    %14 = sbr.rel (0) target = $region9
  $region8: #{feature_net_forward.1} parent=0 // pred_region
    _
  $region9: #{feature_net_forward.1} parent=0 // pred_fallthru
    _
  // Predicated region
  $region10: #{feature_net_forward.1} parent=0 // pred_check
    _
  $region11: #{feature_net_forward.1} parent=0 // pred_check_branch
    %16 = sbr.rel (0) target = $region13
  $region12: #{feature_net_forward.1} parent=0 // pred_region
    _
  $region13: #{feature_net_forward.1} parent=0 // pred_fallthru
    _
  // Predicated region
  $region14: #{feature_net_forward.1} parent=0 // pred_check
    _
  $region15: #{feature_net_forward.1} parent=0 // pred_check_branch
    %18 = sbr.rel (0) target = $region17
  $region16: #{feature_net_forward.1} parent=0 // pred_region
    _
  $region17: #{feature_net_forward.1} parent=0 // pred_fallthru
    _
  // Predicated region
  $region18: #{feature_net_forward.1} parent=0 // pred_check
    _
  $region19: #{feature_net_forward.1} parent=0 // pred_check_branch
    %20 = sbr.rel (0) target = $region21
  $region20: #{feature_net_forward.1} parent=0 // pred_region
    _
  $region21: #{feature_net_forward.1} parent=0 // pred_fallthru
    _
  // Predicated region
  $region22: #{feature_net_forward.1} parent=0 // pred_check
    _
  $region23: #{feature_net_forward.1} parent=0 // pred_check_branch
    %22 = sbr.rel (0) target = $region25
  $region24: #{feature_net_forward.1} parent=0 // pred_region
    _
  $region25: #{feature_net_forward.1} parent=0 // pred_fallthru
    _
  %v24 = vld [vmem:[%s3] sm:$0xf]
  %v25 = vld [vmem:[%s3 + $0x4] sm:$0xf]
  %v26 = vld [vmem:[%s3 + $0x8] sm:$0xf]
  %v27 = vld [vmem:[%s3 + $0xc] sm:$0xf]
  %v28 = vld [vmem:[%s3 + $0x10] sm:$0xf]
  %v29 = vld [vmem:[%s3 + $0x14] sm:$0xf]
  %v30 = vld [vmem:[%s3 + $0x18] sm:$0xf]
  %v31 = vld [vmem:[%s3 + $0x1c] sm:$0xf]
  %v32 = vld [vmem:[%s3 + $0x20] sm:$0xf]
  %v33 = vld [vmem:[%s3 + $0x24] sm:$0xf]
  %v34 = vld [vmem:[%s3 + $0x28] sm:$0xf]
  %v35 = vld [vmem:[%s3 + $0x2c] sm:$0xf]
  %v36 = vld [vmem:[%s3 + $0x30] sm:$0xf]
  %v37 = vld [vmem:[%s3 + $0x34] sm:$0xf]
  %v38 = vld [vmem:[%s3 + $0x38] sm:$0xf]
  %v39 = vld [vmem:[%s3 + $0x3c] sm:$0xf]
  %v40 = vld [vmem:[%s3 + $0x40] sm:$0xf]
  %v41 = vld [vmem:[%s3 + $0x44] sm:$0xf]
  %v42 = vld [vmem:[%s3 + $0x48] sm:$0xf]
  %v43 = vld [vmem:[%s3 + $0x4c] sm:$0xf]
  %v44 = vld [vmem:[%s3 + $0x50] sm:$0xf]
  %v45 = vld [vmem:[%s3 + $0x54] sm:$0xf]
  %v46 = vld [vmem:[%s3 + $0x58] sm:$0xf]
  %v47 = vld [vmem:[%s3 + $0x5c] sm:$0xf]
  %v48 = vld [vmem:[%s3 + $0x60] sm:$0xf]
  %v49 = vld [vmem:[%s3 + $0x64] sm:$0xf]
  %v50 = vld [vmem:[%s3 + $0x68] sm:$0xf]
  %v51 = vld [vmem:[%s3 + $0x6c] sm:$0xf]
  %v52 = vld [vmem:[%s3 + $0x70] sm:$0xf]
  %v53 = vld [vmem:[%s3 + $0x74] sm:$0xf]
  %v54 = vld [vmem:[%s3 + $0x78] sm:$0xf]
  %v55 = vld [vmem:[%s3 + $0x7c] sm:$0xf]
  %v56 = vld [vmem:[%s3 + $0x80] sm:$0xf]
  %v57 = vld [vmem:[%s3 + $0x84] sm:$0xf]
  %v58 = vld [vmem:[%s3 + $0x88] sm:$0xf]
  %v59 = vld [vmem:[%s3 + $0x8c] sm:$0xf]
  %v60 = vld [vmem:[%s3 + $0x90] sm:$0xf]
  %v61 = vld [vmem:[%s3 + $0x94] sm:$0xf]
  %v62 = vld [vmem:[%s3 + $0x98] sm:$0xf]
  %v63 = vld [vmem:[%s3 + $0x9c] sm:$0xf]
  %v64 = vld [vmem:[%s3 + $0xa0] sm:$0xf]
  %v65 = vld [vmem:[%s3 + $0xa4] sm:$0xf]
  %v66 = vld [vmem:[%s3 + $0xa8] sm:$0xf]
  %v67 = vld [vmem:[%s3 + $0xac] sm:$0xf]
  %v68 = vld [vmem:[%s3 + $0xb0] sm:$0xf]
  %v69 = vld [vmem:[%s3 + $0xb4] sm:$0xf]
  %v70 = vld [vmem:[%s3 + $0xb8] sm:$0xf]
  %v71 = vld [vmem:[%s3 + $0xbc] sm:$0xf]
  %v72 = vld [vmem:[%s3 + $0xc0] sm:$0xf]
  %v73 = vld [vmem:[%s3 + $0xc4] sm:$0xf]
  %v74 = vld [vmem:[%s3 + $0xc8] sm:$0xf]
  %v75 = vld [vmem:[%s3 + $0xcc] sm:$0xf]
  %v76 = vld [vmem:[%s3 + $0xd0] sm:$0xf]
  %v77 = vld [vmem:[%s3 + $0xd4] sm:$0xf]
  %v78 = vld [vmem:[%s3 + $0xd8] sm:$0xf]
  %v79 = vld [vmem:[%s3 + $0xdc] sm:$0xf]
  %v80 = vld [vmem:[%s3 + $0xe0] sm:$0xf]
  %v81 = vld [vmem:[%s3 + $0xe4] sm:$0xf]
  %v82 = vld [vmem:[%s3 + $0xe8] sm:$0xf]
  %v83 = vld [vmem:[%s3 + $0xec] sm:$0xf]
  %v84 = vld [vmem:[%s3 + $0xf0] sm:$0xf]
  %v85 = vld [vmem:[%s3 + $0xf4] sm:$0xf]
  %v86 = vld [vmem:[%s3 + $0xf8] sm:$0xf]
  %v87 = vld [vmem:[%s3 + $0xfc] sm:$0xf]
  %v88 = vld [vmem:[%s3 + $0x100] sm:$0xf]
  %v89 = vld [vmem:[%s3 + $0x104] sm:$0xf]
  %v90 = vld [vmem:[%s3 + $0x108] sm:$0xf]
  %v91 = vld [vmem:[%s3 + $0x10c] sm:$0xf]
  %v92 = vld [vmem:[%s4] sm:$0xff]
  %v93 = vld [vmem:[%s4 + $0x8] sm:$0xff]
  %v94 = vld [vmem:[%s4 + $0x14] sm:$0xff]
  %v95 = vld [vmem:[%s4 + $0x1c] sm:$0xff]
  %v96 = vld [vmem:[%s4 + $0x28] sm:$0xff]
  %v97 = vld [vmem:[%s4 + $0x30] sm:$0xff]
  %v98 = vld [vmem:[%s4 + $0x3c] sm:$0xff]
  %v99 = vld [vmem:[%s4 + $0x44] sm:$0xff]
  %v100 = vld [vmem:[%s4 + $0x50] sm:$0xff]
  %v101 = vld [vmem:[%s4 + $0x58] sm:$0xff]
  %v102 = vld [vmem:[%s4 + $0x64] sm:$0xff]
  %v103 = vld [vmem:[%s4 + $0x6c] sm:$0xff]
  %v104 = vld [vmem:[%s4 + $0x78] sm:$0xff]
  %v105 = vld [vmem:[%s4 + $0x80] sm:$0xff]
  %v106 = vld [vmem:[%s4 + $0x8c] sm:$0xff]
  %v107 = vld [vmem:[%s4 + $0x94] sm:$0xff]
  %v108 = vld [vmem:[%s4 + $0xa0] sm:$0xff]
  %v109 = vld [vmem:[%s4 + $0xa8] sm:$0xff]
  %v110 = vld [vmem:[%s4 + $0xb4] sm:$0xff]
  %v111 = vld [vmem:[%s4 + $0xbc] sm:$0xff]
  %v112 = vld [vmem:[%s4 + $0xc8] sm:$0xff]
  %v113 = vld [vmem:[%s4 + $0xd0] sm:$0xff]
  %v114 = vld [vmem:[%s4 + $0xdc] sm:$0xff]
  %v115 = vld [vmem:[%s4 + $0xe4] sm:$0xff]
  %v116 = vld [vmem:[%s4 + $0xf0] sm:$0xff]
  %v117 = vld [vmem:[%s4 + $0xf8] sm:$0xff]
  %v118 = vld [vmem:[%s4 + $0x104] sm:$0xff]
  %v119 = vld [vmem:[%s4 + $0x10c] sm:$0xff]
  %v120 = vld [vmem:[%s4 + $0x118] sm:$0xff]
  %v121 = vld [vmem:[%s4 + $0x120] sm:$0xff]
  %v122 = vld [vmem:[%s4 + $0x12c] sm:$0xff]
  %v123 = vld [vmem:[%s4 + $0x134] sm:$0xff]
  %v124 = vld [vmem:[%s4 + $0x10] sm:$0xf]
  %v125 = vld [vmem:[%s4 + $0x24] sm:$0xf]
  %v126 = vld [vmem:[%s4 + $0x38] sm:$0xf]
  %v127 = vld [vmem:[%s4 + $0x4c] sm:$0xf]
  %v128 = vld [vmem:[%s4 + $0x60] sm:$0xf]
  %v129 = vld [vmem:[%s4 + $0x74] sm:$0xf]
  %v130 = vld [vmem:[%s4 + $0x88] sm:$0xf]
  %v131 = vld [vmem:[%s4 + $0x9c] sm:$0xf]
  %v132 = vld [vmem:[%s4 + $0xb0] sm:$0xf]
  %v133 = vld [vmem:[%s4 + $0xc4] sm:$0xf]
  %v134 = vld [vmem:[%s4 + $0xd8] sm:$0xf]
  %v135 = vld [vmem:[%s4 + $0xec] sm:$0xf]
  %v136 = vld [vmem:[%s4 + $0x100] sm:$0xf]
  %v137 = vld [vmem:[%s4 + $0x114] sm:$0xf]
  %v138 = vld [vmem:[%s4 + $0x128] sm:$0xf]
  %v139 = vld [vmem:[%s4 + $0x13c] sm:$0xf]
  %v140 = vld [vmem:[%s0] sm:$0xff]
  %v141 = vld [vmem:[%s0 + $0x8] sm:$0xff]
  %v142 = vld [vmem:[%s0 + $0x10] sm:$0xff]
  %v143 = vld [vmem:[%s0 + $0x18] sm:$0xff]
  %v144 = vld [vmem:[%s1] sm:$0xf]
  %145 = vrot.lane.b32.xlu0 %v140, 17
  %v146 = vpop.permute.xlu0 %145
  %147 = vrot.lane.b32.xlu0 %v141, 17
  %v148 = vpop.permute.xlu0 %147
  %149 = vrot.lane.b32.xlu0 %v142, 17
  %v150 = vpop.permute.xlu0 %149
  %151 = vrot.lane.b32.xlu0 %v143, 17
  %v152 = vpop.permute.xlu0 %151
  %v153 = vlaneseq
  %v154 = vand.u32 %v153, 127
  %vm155 = vcmp.lt.s32.totalorder %v154, 17
  %v156 = vsel %vm155, %v150, %v152
  %v157 = vsel %vm155, %v148, %v150
  %v158 = vsel %vm155, %v146, %v148
  %v159 = vsel %vm155, %v152, %v146
  %v160 = vld [vmem:[%s5] ss:$8 sm:$0xf]
  %v162 = vlaneseq
  %v163 = vshrl.u32 %v162, 7
  %v164 = vsub.s32 0, %v163
  %v165 = vrot.slane %v160, %v164
  %v166 = vlaneseq
  %v167 = vshrl.u32 %v166, 7
  %v168 = vsub.s32 1, %v167
  %v169 = vrot.slane %v160, %v168
  %v170 = vlaneseq
  %v171 = vshrl.u32 %v170, 7
  %v172 = vsub.s32 2, %v171
  %v173 = vrot.slane %v160, %v172
  %v174 = vlaneseq
  %v175 = vshrl.u32 %v174, 7
  %v176 = vsub.s32 3, %v175
  %v177 = vrot.slane %v160, %v176
  %v182 = vmul.f32 %v159, %v165
  %v183 = vmul.f32 %v158, %v169
  %v184 = vmul.f32 %v157, %v173
  %v185 = vmul.f32 %v156, %v177
  %186 = vrot.lane.b32.xlu0 %v140, 16
  %v187 = vpop.permute.xlu0 %186
  %188 = vrot.lane.b32.xlu0 %v141, 16
  %v189 = vpop.permute.xlu0 %188
  %190 = vrot.lane.b32.xlu0 %v142, 16
  %v191 = vpop.permute.xlu0 %190
  %192 = vrot.lane.b32.xlu0 %v143, 16
  %v193 = vpop.permute.xlu0 %192
  %vm194 = vcmp.lt.s32.totalorder %v154, 16
  %v195 = vsel %vm194, %v191, %v193
  %v196 = vsel %vm194, %v189, %v191
  %v197 = vsel %vm194, %v187, %v189
  %v198 = vsel %vm194, %v193, %v187
  %s199 = scalar_lea.vmem %s5, 1
  %v200 = vld [vmem:[%s199] ss:$8 sm:$0xf]
  %v202 = vlaneseq
  %v203 = vshrl.u32 %v202, 7
  %v204 = vsub.s32 0, %v203
  %v205 = vrot.slane %v200, %v204
  %v206 = vlaneseq
  %v207 = vshrl.u32 %v206, 7
  %v208 = vsub.s32 1, %v207
  %v209 = vrot.slane %v200, %v208
  %v210 = vlaneseq
  %v211 = vshrl.u32 %v210, 7
  %v212 = vsub.s32 2, %v211
  %v213 = vrot.slane %v200, %v212
  %v214 = vlaneseq
  %v215 = vshrl.u32 %v214, 7
  %v216 = vsub.s32 3, %v215
  %v217 = vrot.slane %v200, %v216
  %v222 = vmul.f32 %v198, %v205
  %v223 = vmul.f32 %v197, %v209
  %v224 = vmul.f32 %v196, %v213
  %v225 = vmul.f32 %v195, %v217
  %226 = vrot.lane.b32.xlu0 %v140, 15
  %v227 = vpop.permute.xlu0 %226
  %228 = vrot.lane.b32.xlu0 %v141, 15
  %v229 = vpop.permute.xlu0 %228
  %230 = vrot.lane.b32.xlu0 %v142, 15
  %v231 = vpop.permute.xlu0 %230
  %232 = vrot.lane.b32.xlu0 %v143, 15
  %v233 = vpop.permute.xlu0 %232
  %vm234 = vcmp.lt.s32.totalorder %v154, 15
  %v235 = vsel %vm234, %v231, %v233
  %v236 = vsel %vm234, %v229, %v231
  %v237 = vsel %vm234, %v227, %v229
  %v238 = vsel %vm234, %v233, %v227
  %s239 = scalar_lea.vmem %s5, 2
  %v240 = vld [vmem:[%s239] ss:$8 sm:$0xf]
  %v242 = vlaneseq
  %v243 = vshrl.u32 %v242, 7
  %v244 = vsub.s32 0, %v243
  %v245 = vrot.slane %v240, %v244
  %v246 = vlaneseq
  %v247 = vshrl.u32 %v246, 7
  %v248 = vsub.s32 1, %v247
  %v249 = vrot.slane %v240, %v248
  %v250 = vlaneseq
  %v251 = vshrl.u32 %v250, 7
  %v252 = vsub.s32 2, %v251
  %v253 = vrot.slane %v240, %v252
  %v254 = vlaneseq
  %v255 = vshrl.u32 %v254, 7
  %v256 = vsub.s32 3, %v255
  %v257 = vrot.slane %v240, %v256
  %v262 = vmul.f32 %v238, %v245
  %v263 = vmul.f32 %v237, %v249
  %v264 = vmul.f32 %v236, %v253
  %v265 = vmul.f32 %v235, %v257
  %266 = vrot.lane.b32.xlu0 %v140, 1
  %v267 = vpop.permute.xlu0 %266
  %268 = vrot.lane.b32.xlu0 %v141, 1
  %v269 = vpop.permute.xlu0 %268
  %270 = vrot.lane.b32.xlu0 %v142, 1
  %v271 = vpop.permute.xlu0 %270
  %272 = vrot.lane.b32.xlu0 %v143, 1
  %v273 = vpop.permute.xlu0 %272
  %vm274 = vcmp.lt.s32.totalorder %v154, 1
  %v275 = vsel %vm274, %v271, %v273
  %v276 = vsel %vm274, %v269, %v271
  %v277 = vsel %vm274, %v267, %v269
  %v278 = vsel %vm274, %v273, %v267
  %s279 = scalar_lea.vmem %s5, 3
  %v280 = vld [vmem:[%s279] ss:$8 sm:$0xf]
  %v282 = vlaneseq
  %v283 = vshrl.u32 %v282, 7
  %v284 = vsub.s32 0, %v283
  %v285 = vrot.slane %v280, %v284
  %v286 = vlaneseq
  %v287 = vshrl.u32 %v286, 7
  %v288 = vsub.s32 1, %v287
  %v289 = vrot.slane %v280, %v288
  %v290 = vlaneseq
  %v291 = vshrl.u32 %v290, 7
  %v292 = vsub.s32 2, %v291
  %v293 = vrot.slane %v280, %v292
  %v294 = vlaneseq
  %v295 = vshrl.u32 %v294, 7
  %v296 = vsub.s32 3, %v295
  %v297 = vrot.slane %v280, %v296
  %v302 = vmul.f32 %v278, %v285
  %v303 = vmul.f32 %v277, %v289
  %v304 = vmul.f32 %v276, %v293
  %v305 = vmul.f32 %v275, %v297
  %306 = vrot.lane.b32.xlu0 %v140, 127
  %v307 = vpop.permute.xlu0 %306
  %308 = vrot.lane.b32.xlu0 %v141, 127
  %v309 = vpop.permute.xlu0 %308
  %310 = vrot.lane.b32.xlu0 %v142, 127
  %v311 = vpop.permute.xlu0 %310
  %312 = vrot.lane.b32.xlu0 %v143, 127
  %v313 = vpop.permute.xlu0 %312
  %vm314 = vcmp.lt.s32.totalorder %v154, 127
  %v315 = vsel %vm314, %v311, %v313
  %v316 = vsel %vm314, %v309, %v311
  %v317 = vsel %vm314, %v307, %v309
  %v318 = vsel %vm314, %v313, %v307
  %s319 = scalar_lea.vmem %s5, 5
  %v320 = vld [vmem:[%s319] ss:$8 sm:$0xf]
  %v322 = vlaneseq
  %v323 = vshrl.u32 %v322, 7
  %v324 = vsub.s32 0, %v323
  %v325 = vrot.slane %v320, %v324
  %v326 = vlaneseq
  %v327 = vshrl.u32 %v326, 7
  %v328 = vsub.s32 1, %v327
  %v329 = vrot.slane %v320, %v328
  %v330 = vlaneseq
  %v331 = vshrl.u32 %v330, 7
  %v332 = vsub.s32 2, %v331
  %v333 = vrot.slane %v320, %v332
  %v334 = vlaneseq
  %v335 = vshrl.u32 %v334, 7
  %v336 = vsub.s32 3, %v335
  %v337 = vrot.slane %v320, %v336
  %v342 = vmul.f32 %v317, %v325
  %v343 = vmul.f32 %v316, %v329
  %v344 = vmul.f32 %v315, %v333
  %v345 = vmul.f32 %v318, %v337
  %346 = vrot.lane.b32.xlu0 %v140, 113
  %v347 = vpop.permute.xlu0 %346
  %348 = vrot.lane.b32.xlu0 %v141, 113
  %v349 = vpop.permute.xlu0 %348
  %350 = vrot.lane.b32.xlu0 %v142, 113
  %v351 = vpop.permute.xlu0 %350
  %352 = vrot.lane.b32.xlu0 %v143, 113
  %v353 = vpop.permute.xlu0 %352
  %vm354 = vcmp.lt.s32.totalorder %v154, 113
  %v355 = vsel %vm354, %v351, %v353
  %v356 = vsel %vm354, %v349, %v351
  %v357 = vsel %vm354, %v347, %v349
  %v358 = vsel %vm354, %v353, %v347
  %s359 = scalar_lea.vmem %s5, 6
  %v360 = vld [vmem:[%s359] ss:$8 sm:$0xf]
  %v362 = vlaneseq
  %v363 = vshrl.u32 %v362, 7
  %v364 = vsub.s32 0, %v363
  %v365 = vrot.slane %v360, %v364
  %v366 = vlaneseq
  %v367 = vshrl.u32 %v366, 7
  %v368 = vsub.s32 1, %v367
  %v369 = vrot.slane %v360, %v368
  %v370 = vlaneseq
  %v371 = vshrl.u32 %v370, 7
  %v372 = vsub.s32 2, %v371
  %v373 = vrot.slane %v360, %v372
  %v374 = vlaneseq
  %v375 = vshrl.u32 %v374, 7
  %v376 = vsub.s32 3, %v375
  %v377 = vrot.slane %v360, %v376
  %v382 = vmul.f32 %v357, %v365
  %v383 = vmul.f32 %v356, %v369
  %v384 = vmul.f32 %v355, %v373
  %v385 = vmul.f32 %v358, %v377
  %386 = vrot.lane.b32.xlu0 %v140, 112
  %v387 = vpop.permute.xlu0 %386
  %388 = vrot.lane.b32.xlu0 %v141, 112
  %v389 = vpop.permute.xlu0 %388
  %390 = vrot.lane.b32.xlu0 %v142, 112
  %v391 = vpop.permute.xlu0 %390
  %392 = vrot.lane.b32.xlu0 %v143, 112
  %v393 = vpop.permute.xlu0 %392
  %vm394 = vcmp.lt.s32.totalorder %v154, 112
  %v395 = vsel %vm394, %v391, %v393
  %v396 = vsel %vm394, %v389, %v391
  %v397 = vsel %vm394, %v387, %v389
  %v398 = vsel %vm394, %v393, %v387
  %s399 = scalar_lea.vmem %s5, 7
  %v400 = vld [vmem:[%s399] ss:$8 sm:$0xf]
  %v402 = vlaneseq
  %v403 = vshrl.u32 %v402, 7
  %v404 = vsub.s32 0, %v403
  %v405 = vrot.slane %v400, %v404
  %v406 = vlaneseq
  %v407 = vshrl.u32 %v406, 7
  %v408 = vsub.s32 1, %v407
  %v409 = vrot.slane %v400, %v408
  %v410 = vlaneseq
  %v411 = vshrl.u32 %v410, 7
  %v412 = vsub.s32 2, %v411
  %v413 = vrot.slane %v400, %v412
  %v414 = vlaneseq
  %v415 = vshrl.u32 %v414, 7
  %v416 = vsub.s32 3, %v415
  %v417 = vrot.slane %v400, %v416
  %v422 = vmul.f32 %v397, %v405
  %v423 = vmul.f32 %v396, %v409
  %v424 = vmul.f32 %v395, %v413
  %v425 = vmul.f32 %v398, %v417
  %426 = vrot.lane.b32.xlu0 %v140, 111
  %v427 = vpop.permute.xlu0 %426
  %428 = vrot.lane.b32.xlu0 %v141, 111
  %v429 = vpop.permute.xlu0 %428
  %430 = vrot.lane.b32.xlu0 %v142, 111
  %v431 = vpop.permute.xlu0 %430
  %432 = vrot.lane.b32.xlu0 %v143, 111
  %v433 = vpop.permute.xlu0 %432
  %vm434 = vcmp.lt.s32.totalorder %v154, 111
  %v435 = vsel %vm434, %v431, %v433
  %v436 = vsel %vm434, %v429, %v431
  %v437 = vsel %vm434, %v427, %v429
  %v438 = vsel %vm434, %v433, %v427
  %s439 = scalar_lea.vmem %s5, 32
  %v440 = vld [vmem:[%s439] ss:$8 sm:$0xf]
  %v442 = vlaneseq
  %v443 = vshrl.u32 %v442, 7
  %v444 = vsub.s32 0, %v443
  %v445 = vrot.slane %v440, %v444
  %v446 = vlaneseq
  %v447 = vshrl.u32 %v446, 7
  %v448 = vsub.s32 1, %v447
  %v449 = vrot.slane %v440, %v448
  %v450 = vlaneseq
  %v451 = vshrl.u32 %v450, 7
  %v452 = vsub.s32 2, %v451
  %v453 = vrot.slane %v440, %v452
  %v454 = vlaneseq
  %v455 = vshrl.u32 %v454, 7
  %v456 = vsub.s32 3, %v455
  %v457 = vrot.slane %v440, %v456
  %v462 = vmul.f32 %v437, %v445
  %v463 = vmul.f32 %v436, %v449
  %v464 = vmul.f32 %v435, %v453
  %v465 = vmul.f32 %v438, %v457
  %v466 = vpack.c.bf16 %v222, %v182
  %v467 = vpack.c.bf16 %v223, %v183
  %v468 = vpack.c.bf16 %v224, %v184
  %v469 = vpack.c.bf16 %v225, %v185
  %v470 = vpack.c.bf16 %v302, %v262
  %v471 = vpack.c.bf16 %v303, %v263
  %v472 = vpack.c.bf16 %v304, %v264
  %v473 = vpack.c.bf16 %v305, %v265
  %v474 = vpack.c.bf16 %v342, %v140
  %v475 = vpack.c.bf16 %v343, %v141
  %v476 = vpack.c.bf16 %v344, %v142
  %v477 = vpack.c.bf16 %v345, %v143
  %v478 = vpack.c.bf16 %v422, %v382
  %v479 = vpack.c.bf16 %v423, %v383
  %v480 = vpack.c.bf16 %v424, %v384
  %v481 = vpack.c.bf16 %v425, %v385
  %v482 = vpack.c.bf16 %v462, %v462
  %v483 = vpack.c.bf16 %v463, %v463
  %v484 = vpack.c.bf16 %v464, %v464
  %v485 = vpack.c.bf16 %v465, %v465
  %v486 = vld [vmem:[%s2] sm:$0xff]
  %488 = vset.pattern.permute.xlu0 0
  %489 = vperm.xlu0 %488, %v486
  %v490 = vpop.permute.xlu0 %489
  %vm492 = vcmask 588800
  %v494 = vsel %vm492, %v144, 0
  %vm496 = vcmask 1043456
  %v498 = vsel %vm496, %v482, 0
  %v501 = vsel %vm496, %v483, 0
  %v504 = vsel %vm496, %v484, 0
  %v507 = vsel %vm496, %v485, 0
  %509 = vmatprep.subr.bf16.mxu0 %v467
  %510 = vmatpush1.bf16.msra.mxu0 %v466
  %511 = vmatprep.subr.bf16.mxu0 %v471
  %512 = vmatpush1.bf16.msra.mxu0 %v470
  %513 = vmatprep.subr.bf16.mxu0 %v475
  %514 = vmatpush1.bf16.msra.mxu0 %v474
  %515 = vmatprep.subr.bf16.mxu0 %v479
  %516 = vmatpush1.bf16.msra.mxu0 %v478
  %517 = vmatprep.subr.bf16.mxu0 %v501
  %518 = vmatpush1.bf16.msra.mxu0 %v498
  %519 = vmatprep.subr.bf16.mxu0 0
  %520 = vmatpush1.bf16.msra.mxu0 0
  %521 = vmatprep.subr.bf16.mxu0 0
  %522 = vmatpush1.bf16.msra.mxu0 0
  %523 = vmatprep.subr.bf16.mxu0 0
  %524 = vmatpush1.bf16.msra.mxu0 0
  %525 = vmatprep.subr.bf16.mxu0 0
  %526 = vmatpush1.bf16.msra.mxu0 0
  %527 = vmatprep.subr.bf16.mxu0 0
  %528 = vmatpush1.bf16.msra.mxu0 0
  %529 = vmatprep.subr.bf16.mxu0 0
  %530 = vmatpush1.bf16.msra.mxu0 0
  %531 = vmatprep.subr.bf16.mxu0 0
  %532 = vmatpush1.bf16.msra.mxu0 0
  %533 = vmatprep.subr.bf16.mxu0 0
  %534 = vmatpush1.bf16.msra.mxu0 0
  %535 = vmatprep.subr.bf16.mxu0 0
  %536 = vmatpush1.bf16.msra.mxu0 0
  %537 = vmatprep.subr.bf16.mxu0 0
  %538 = vmatpush1.bf16.msra.mxu0 0
  %539 = vmatprep.subr.bf16.mxu0 0
  %540 = vmatpush1.bf16.msra.mxu0 0
  %541 = vmatprep.mubr.bf16.mxu0 0
  %542 = vmatmul.mubr.bf16.gmra.mrb[0].mxu0 %v494
  %v543 = vpop.f32.mrb[0].mxu0
  %v544 = vadd.f32 %v490, %v543
  %v545 = vpop.f32.mrb[0].mxu0
  %v546 = vadd.f32 %v490, %v545
  %v547 = vpop.f32.mrb[0].mxu0
  %v548 = vpop.f32.mrb[0].mxu0
  %549 = vdwg.mxu0
  %550 = vmatprep.subr.bf16.mxu0 %v469
  %551 = vmatpush1.bf16.msra.mxu0 %v468
  %552 = vmatprep.subr.bf16.mxu0 %v473
  %553 = vmatpush1.bf16.msra.mxu0 %v472
  %554 = vmatprep.subr.bf16.mxu0 %v477
  %555 = vmatpush1.bf16.msra.mxu0 %v476
  %556 = vmatprep.subr.bf16.mxu0 %v481
  %557 = vmatpush1.bf16.msra.mxu0 %v480
  %558 = vmatprep.subr.bf16.mxu0 %v507
  %559 = vmatpush1.bf16.msra.mxu0 %v504
  %560 = vmatprep.subr.bf16.mxu0 0
  %561 = vmatpush1.bf16.msra.mxu0 0
  %562 = vmatprep.subr.bf16.mxu0 0
  %563 = vmatpush1.bf16.msra.mxu0 0
  %564 = vmatprep.subr.bf16.mxu0 0
  %565 = vmatpush1.bf16.msra.mxu0 0
  %566 = vmatprep.subr.bf16.mxu0 0
  %567 = vmatpush1.bf16.msra.mxu0 0
  %568 = vmatprep.subr.bf16.mxu0 0
  %569 = vmatpush1.bf16.msra.mxu0 0
  %570 = vmatprep.subr.bf16.mxu0 0
  %571 = vmatpush1.bf16.msra.mxu0 0
  %572 = vmatprep.subr.bf16.mxu0 0
  %573 = vmatpush1.bf16.msra.mxu0 0
  %574 = vmatprep.subr.bf16.mxu0 0
  %575 = vmatpush1.bf16.msra.mxu0 0
  %576 = vmatprep.subr.bf16.mxu0 0
  %577 = vmatpush1.bf16.msra.mxu0 0
  %578 = vmatprep.subr.bf16.mxu0 0
  %579 = vmatpush1.bf16.msra.mxu0 0
  %580 = vmatprep.subr.bf16.mxu0 0
  %581 = vmatpush1.bf16.msra.mxu0 0
  %582 = vmatprep.mubr.bf16.mxu0 0
  %583 = vmatmul.mubr.bf16.gmra.mrb[0].mxu0 %v494
  %v584 = vpop.f32.mrb[0].mxu0
  %v585 = vadd.f32 %v490, %v584
  %v586 = vpop.f32.mrb[0].mxu0
  %v587 = vadd.f32 %v490, %v586
  %v588 = vpop.f32.mrb[0].mxu0
  %v589 = vpop.f32.mrb[0].mxu0
  %590 = vdwg.mxu0
  %v591 = vmax.f32 %v544, 0.0
  %v592 = vmax.f32 %v546, 0.0
  %v593 = vmax.f32 %v585, 0.0
  %v594 = vmax.f32 %v587, 0.0
  %v595 = vld [vmem:[%s1 + $0x10] sm:$0xf]
  %596 = vrot.lane.b32.xlu0 %v591, 17
  %v597 = vpop.permute.xlu0 %596
  %598 = vrot.lane.b32.xlu0 %v592, 17
  %v599 = vpop.permute.xlu0 %598
  %600 = vrot.lane.b32.xlu0 %v593, 17
  %v601 = vpop.permute.xlu0 %600
  %602 = vrot.lane.b32.xlu0 %v594, 17
  %v603 = vpop.permute.xlu0 %602
  %v604 = vsel %vm155, %v601, %v603
  %v605 = vsel %vm155, %v599, %v601
  %v606 = vsel %vm155, %v597, %v599
  %v607 = vsel %vm155, %v603, %v597
  %v608 = vmul.f32 %v607, %v165
  %v609 = vmul.f32 %v606, %v169
  %v610 = vmul.f32 %v605, %v173
  %v611 = vmul.f32 %v604, %v177
  %612 = vrot.lane.b32.xlu0 %v591, 16
  %v613 = vpop.permute.xlu0 %612
  %614 = vrot.lane.b32.xlu0 %v592, 16
  %v615 = vpop.permute.xlu0 %614
  %616 = vrot.lane.b32.xlu0 %v593, 16
  %v617 = vpop.permute.xlu0 %616
  %618 = vrot.lane.b32.xlu0 %v594, 16
  %v619 = vpop.permute.xlu0 %618
  %v620 = vsel %vm194, %v617, %v619
  %v621 = vsel %vm194, %v615, %v617
  %v622 = vsel %vm194, %v613, %v615
  %v623 = vsel %vm194, %v619, %v613
  %v624 = vmul.f32 %v623, %v205
  %v625 = vmul.f32 %v622, %v209
  %v626 = vmul.f32 %v621, %v213
  %v627 = vmul.f32 %v620, %v217
  %628 = vrot.lane.b32.xlu0 %v591, 15
  %v629 = vpop.permute.xlu0 %628
  %630 = vrot.lane.b32.xlu0 %v592, 15
  %v631 = vpop.permute.xlu0 %630
  %632 = vrot.lane.b32.xlu0 %v593, 15
  %v633 = vpop.permute.xlu0 %632
  %634 = vrot.lane.b32.xlu0 %v594, 15
  %v635 = vpop.permute.xlu0 %634
  %v636 = vsel %vm234, %v633, %v635
  %v637 = vsel %vm234, %v631, %v633
  %v638 = vsel %vm234, %v629, %v631
  %v639 = vsel %vm234, %v635, %v629
  %v640 = vmul.f32 %v639, %v245
  %v641 = vmul.f32 %v638, %v249
  %v642 = vmul.f32 %v637, %v253
  %v643 = vmul.f32 %v636, %v257
  %644 = vrot.lane.b32.xlu0 %v591, 1
  %v645 = vpop.permute.xlu0 %644
  %646 = vrot.lane.b32.xlu0 %v592, 1
  %v647 = vpop.permute.xlu0 %646
  %648 = vrot.lane.b32.xlu0 %v593, 1
  %v649 = vpop.permute.xlu0 %648
  %650 = vrot.lane.b32.xlu0 %v594, 1
  %v651 = vpop.permute.xlu0 %650
  %v652 = vsel %vm274, %v649, %v651
  %v653 = vsel %vm274, %v647, %v649
  %v654 = vsel %vm274, %v645, %v647
  %v655 = vsel %vm274, %v651, %v645
  %v656 = vmul.f32 %v655, %v285
  %v657 = vmul.f32 %v654, %v289
  %v658 = vmul.f32 %v653, %v293
  %v659 = vmul.f32 %v652, %v297
  %660 = vrot.lane.b32.xlu0 %v591, 127
  %v661 = vpop.permute.xlu0 %660
  %662 = vrot.lane.b32.xlu0 %v592, 127
  %v663 = vpop.permute.xlu0 %662
  %664 = vrot.lane.b32.xlu0 %v593, 127
  %v665 = vpop.permute.xlu0 %664
  %666 = vrot.lane.b32.xlu0 %v594, 127
  %v667 = vpop.permute.xlu0 %666
  %v668 = vsel %vm314, %v665, %v667
  %v669 = vsel %vm314, %v663, %v665
  %v670 = vsel %vm314, %v661, %v663
  %v671 = vsel %vm314, %v667, %v661
  %v672 = vmul.f32 %v670, %v325
  %v673 = vmul.f32 %v669, %v329
  %v674 = vmul.f32 %v668, %v333
  %v675 = vmul.f32 %v671, %v337
  %676 = vrot.lane.b32.xlu0 %v591, 113
  %v677 = vpop.permute.xlu0 %676
  %678 = vrot.lane.b32.xlu0 %v592, 113
  %v679 = vpop.permute.xlu0 %678
  %680 = vrot.lane.b32.xlu0 %v593, 113
  %v681 = vpop.permute.xlu0 %680
  %682 = vrot.lane.b32.xlu0 %v594, 113
  %v683 = vpop.permute.xlu0 %682
  %v684 = vsel %vm354, %v681, %v683
  %v685 = vsel %vm354, %v679, %v681
  %v686 = vsel %vm354, %v677, %v679
  %v687 = vsel %vm354, %v683, %v677
  %v688 = vmul.f32 %v686, %v365
  %v689 = vmul.f32 %v685, %v369
  %v690 = vmul.f32 %v684, %v373
  %v691 = vmul.f32 %v687, %v377
  %692 = vrot.lane.b32.xlu0 %v591, 112
  %v693 = vpop.permute.xlu0 %692
  %694 = vrot.lane.b32.xlu0 %v592, 112
  %v695 = vpop.permute.xlu0 %694
  %696 = vrot.lane.b32.xlu0 %v593, 112
  %v697 = vpop.permute.xlu0 %696
  %698 = vrot.lane.b32.xlu0 %v594, 112
  %v699 = vpop.permute.xlu0 %698
  %v700 = vsel %vm394, %v697, %v699
  %v701 = vsel %vm394, %v695, %v697
  %v702 = vsel %vm394, %v693, %v695
  %v703 = vsel %vm394, %v699, %v693
  %v704 = vmul.f32 %v702, %v405
  %v705 = vmul.f32 %v701, %v409
  %v706 = vmul.f32 %v700, %v413
  %v707 = vmul.f32 %v703, %v417
  %708 = vrot.lane.b32.xlu0 %v591, 111
  %v709 = vpop.permute.xlu0 %708
  %710 = vrot.lane.b32.xlu0 %v592, 111
  %v711 = vpop.permute.xlu0 %710
  %712 = vrot.lane.b32.xlu0 %v593, 111
  %v713 = vpop.permute.xlu0 %712
  %714 = vrot.lane.b32.xlu0 %v594, 111
  %v715 = vpop.permute.xlu0 %714
  %v716 = vsel %vm434, %v713, %v715
  %v717 = vsel %vm434, %v711, %v713
  %v718 = vsel %vm434, %v709, %v711
  %v719 = vsel %vm434, %v715, %v709
  %v720 = vmul.f32 %v718, %v445
  %v721 = vmul.f32 %v717, %v449
  %v722 = vmul.f32 %v716, %v453
  %v723 = vmul.f32 %v719, %v457
  %v724 = vpack.c.bf16 %v624, %v608
  %v725 = vpack.c.bf16 %v625, %v609
  %v726 = vpack.c.bf16 %v626, %v610
  %v727 = vpack.c.bf16 %v627, %v611
  %v728 = vpack.c.bf16 %v656, %v640
  %v729 = vpack.c.bf16 %v657, %v641
  %v730 = vpack.c.bf16 %v658, %v642
  %v731 = vpack.c.bf16 %v659, %v643
  %v732 = vpack.c.bf16 %v672, %v591
  %v733 = vpack.c.bf16 %v673, %v592
  %v734 = vpack.c.bf16 %v674, %v593
  %v735 = vpack.c.bf16 %v675, %v594
  %v736 = vpack.c.bf16 %v704, %v688
  %v737 = vpack.c.bf16 %v705, %v689
  %v738 = vpack.c.bf16 %v706, %v690
  %v739 = vpack.c.bf16 %v707, %v691
  %v740 = vpack.c.bf16 %v720, %v720
  %v741 = vpack.c.bf16 %v721, %v721
  %v742 = vpack.c.bf16 %v722, %v722
  %v743 = vpack.c.bf16 %v723, %v723
  %v744 = vld [vmem:[%s2 + $0x8] sm:$0xff]
  %746 = vset.pattern.permute.xlu0 0
  %747 = vperm.xlu0 %746, %v744
  %v748 = vpop.permute.xlu0 %747
  %v751 = vsel %vm492, %v595, 0
  %v754 = vsel %vm496, %v740, 0
  %v757 = vsel %vm496, %v741, 0
  %v760 = vsel %vm496, %v742, 0
  %v763 = vsel %vm496, %v743, 0
  %765 = vmatprep.subr.bf16.mxu0 %v725
  %766 = vmatpush1.bf16.msra.mxu0 %v724
  %767 = vmatprep.subr.bf16.mxu0 %v729
  %768 = vmatpush1.bf16.msra.mxu0 %v728
  %769 = vmatprep.subr.bf16.mxu0 %v733
  %770 = vmatpush1.bf16.msra.mxu0 %v732
  %771 = vmatprep.subr.bf16.mxu0 %v737
  %772 = vmatpush1.bf16.msra.mxu0 %v736
  %773 = vmatprep.subr.bf16.mxu0 %v757
  %774 = vmatpush1.bf16.msra.mxu0 %v754
  %775 = vmatprep.subr.bf16.mxu0 0
  %776 = vmatpush1.bf16.msra.mxu0 0
  %777 = vmatprep.subr.bf16.mxu0 0
  %778 = vmatpush1.bf16.msra.mxu0 0
  %779 = vmatprep.subr.bf16.mxu0 0
  %780 = vmatpush1.bf16.msra.mxu0 0
  %781 = vmatprep.subr.bf16.mxu0 0
  %782 = vmatpush1.bf16.msra.mxu0 0
  %783 = vmatprep.subr.bf16.mxu0 0
  %784 = vmatpush1.bf16.msra.mxu0 0
  %785 = vmatprep.subr.bf16.mxu0 0
  %786 = vmatpush1.bf16.msra.mxu0 0
  %787 = vmatprep.subr.bf16.mxu0 0
  %788 = vmatpush1.bf16.msra.mxu0 0
  %789 = vmatprep.subr.bf16.mxu0 0
  %790 = vmatpush1.bf16.msra.mxu0 0
  %791 = vmatprep.subr.bf16.mxu0 0
  %792 = vmatpush1.bf16.msra.mxu0 0
  %793 = vmatprep.subr.bf16.mxu0 0
  %794 = vmatpush1.bf16.msra.mxu0 0
  %795 = vmatprep.subr.bf16.mxu0 0
  %796 = vmatpush1.bf16.msra.mxu0 0
  %797 = vmatprep.mubr.bf16.mxu0 0
  %798 = vmatmul.mubr.bf16.gmra.mrb[0].mxu0 %v751
  %v799 = vpop.f32.mrb[0].mxu0
  %v800 = vadd.f32 %v748, %v799
  %v801 = vpop.f32.mrb[0].mxu0
  %v802 = vadd.f32 %v748, %v801
  %v803 = vpop.f32.mrb[0].mxu0
  %v804 = vpop.f32.mrb[0].mxu0
  %805 = vdwg.mxu0
  %806 = vmatprep.subr.bf16.mxu0 %v727
  %807 = vmatpush1.bf16.msra.mxu0 %v726
  %808 = vmatprep.subr.bf16.mxu0 %v731
  %809 = vmatpush1.bf16.msra.mxu0 %v730
  %810 = vmatprep.subr.bf16.mxu0 %v735
  %811 = vmatpush1.bf16.msra.mxu0 %v734
  %812 = vmatprep.subr.bf16.mxu0 %v739
  %813 = vmatpush1.bf16.msra.mxu0 %v738
  %814 = vmatprep.subr.bf16.mxu0 %v763
  %815 = vmatpush1.bf16.msra.mxu0 %v760
  %816 = vmatprep.subr.bf16.mxu0 0
  %817 = vmatpush1.bf16.msra.mxu0 0
  %818 = vmatprep.subr.bf16.mxu0 0
  %819 = vmatpush1.bf16.msra.mxu0 0
  %820 = vmatprep.subr.bf16.mxu0 0
  %821 = vmatpush1.bf16.msra.mxu0 0
  %822 = vmatprep.subr.bf16.mxu0 0
  %823 = vmatpush1.bf16.msra.mxu0 0
  %824 = vmatprep.subr.bf16.mxu0 0
  %825 = vmatpush1.bf16.msra.mxu0 0
  %826 = vmatprep.subr.bf16.mxu0 0
  %827 = vmatpush1.bf16.msra.mxu0 0
  %828 = vmatprep.subr.bf16.mxu0 0
  %829 = vmatpush1.bf16.msra.mxu0 0
  %830 = vmatprep.subr.bf16.mxu0 0
  %831 = vmatpush1.bf16.msra.mxu0 0
  %832 = vmatprep.subr.bf16.mxu0 0
  %833 = vmatpush1.bf16.msra.mxu0 0
  %834 = vmatprep.subr.bf16.mxu0 0
  %835 = vmatpush1.bf16.msra.mxu0 0
  %836 = vmatprep.subr.bf16.mxu0 0
  %837 = vmatpush1.bf16.msra.mxu0 0
  %838 = vmatprep.mubr.bf16.mxu0 0
  %839 = vmatmul.mubr.bf16.gmra.mrb[0].mxu0 %v751
  %v840 = vpop.f32.mrb[0].mxu0
  %v841 = vadd.f32 %v748, %v840
  %v842 = vpop.f32.mrb[0].mxu0
  %v843 = vadd.f32 %v748, %v842
  %v844 = vpop.f32.mrb[0].mxu0
  %v845 = vpop.f32.mrb[0].mxu0
  %846 = vdwg.mxu0
  %v847 = vmax.f32 %v800, 0.0
  %v848 = vmax.f32 %v802, 0.0
  %v849 = vmax.f32 %v841, 0.0
  %v850 = vmax.f32 %v843, 0.0
  %v851 = vld [vmem:[%s1 + $0x20] sm:$0xff]
  %v852 = vld [vmem:[%s1 + $0x30] sm:$0xff]
  %853 = vrot.lane.b32.xlu0 %v847, 34
  %v854 = vpop.permute.xlu0 %853
  %855 = vrot.lane.b32.xlu0 %v848, 34
  %v856 = vpop.permute.xlu0 %855
  %857 = vrot.lane.b32.xlu0 %v849, 34
  %v858 = vpop.permute.xlu0 %857
  %859 = vrot.lane.b32.xlu0 %v850, 34
  %v860 = vpop.permute.xlu0 %859
  %vm861 = vcmp.lt.s32.totalorder %v154, 34
  %v862 = vsel %vm861, %v858, %v860
  %v863 = vsel %vm861, %v856, %v858
  %v864 = vsel %vm861, %v854, %v856
  %v865 = vsel %vm861, %v860, %v854
  %s866 = scalar_lea.vmem %s5, 33
  %v867 = vld [vmem:[%s866] ss:$8 sm:$0xf]
  %v869 = vlaneseq
  %v870 = vshrl.u32 %v869, 7
  %v871 = vsub.s32 0, %v870
  %v872 = vrot.slane %v867, %v871
  %v873 = vlaneseq
  %v874 = vshrl.u32 %v873, 7
  %v875 = vsub.s32 1, %v874
  %v876 = vrot.slane %v867, %v875
  %v877 = vlaneseq
  %v878 = vshrl.u32 %v877, 7
  %v879 = vsub.s32 2, %v878
  %v880 = vrot.slane %v867, %v879
  %v881 = vlaneseq
  %v882 = vshrl.u32 %v881, 7
  %v883 = vsub.s32 3, %v882
  %v884 = vrot.slane %v867, %v883
  %v889 = vmul.f32 %v865, %v872
  %v890 = vmul.f32 %v864, %v876
  %v891 = vmul.f32 %v863, %v880
  %v892 = vmul.f32 %v862, %v884
  %893 = vrot.lane.b32.xlu0 %v847, 33
  %v894 = vpop.permute.xlu0 %893
  %895 = vrot.lane.b32.xlu0 %v848, 33
  %v896 = vpop.permute.xlu0 %895
  %897 = vrot.lane.b32.xlu0 %v849, 33
  %v898 = vpop.permute.xlu0 %897
  %899 = vrot.lane.b32.xlu0 %v850, 33
  %v900 = vpop.permute.xlu0 %899
  %vm901 = vcmp.lt.s32.totalorder %v154, 33
  %v902 = vsel %vm901, %v898, %v900
  %v903 = vsel %vm901, %v896, %v898
  %v904 = vsel %vm901, %v894, %v896
  %v905 = vsel %vm901, %v900, %v894
  %s906 = scalar_lea.vmem %s5, 34
  %v907 = vld [vmem:[%s906] ss:$8 sm:$0xf]
  %v909 = vlaneseq
  %v910 = vshrl.u32 %v909, 7
  %v911 = vsub.s32 0, %v910
  %v912 = vrot.slane %v907, %v911
  %v913 = vlaneseq
  %v914 = vshrl.u32 %v913, 7
  %v915 = vsub.s32 1, %v914
  %v916 = vrot.slane %v907, %v915
  %v917 = vlaneseq
  %v918 = vshrl.u32 %v917, 7
  %v919 = vsub.s32 2, %v918
  %v920 = vrot.slane %v907, %v919
  %v921 = vlaneseq
  %v922 = vshrl.u32 %v921, 7
  %v923 = vsub.s32 3, %v922
  %v924 = vrot.slane %v907, %v923
  %v929 = vmul.f32 %v905, %v912
  %v930 = vmul.f32 %v904, %v916
  %v931 = vmul.f32 %v903, %v920
  %v932 = vmul.f32 %v902, %v924
  %933 = vrot.lane.b32.xlu0 %v847, 32
  %v934 = vpop.permute.xlu0 %933
  %935 = vrot.lane.b32.xlu0 %v848, 32
  %v936 = vpop.permute.xlu0 %935
  %937 = vrot.lane.b32.xlu0 %v849, 32
  %v938 = vpop.permute.xlu0 %937
  %939 = vrot.lane.b32.xlu0 %v850, 32
  %v940 = vpop.permute.xlu0 %939
  %vm941 = vcmp.lt.s32.totalorder %v154, 32
  %v942 = vsel %vm941, %v938, %v940
  %v943 = vsel %vm941, %v936, %v938
  %v944 = vsel %vm941, %v934, %v936
  %v945 = vsel %vm941, %v940, %v934
  %s946 = scalar_lea.vmem %s5, 35
  %v947 = vld [vmem:[%s946] ss:$8 sm:$0xf]
  %v949 = vlaneseq
  %v950 = vshrl.u32 %v949, 7
  %v951 = vsub.s32 0, %v950
  %v952 = vrot.slane %v947, %v951
  %v953 = vlaneseq
  %v954 = vshrl.u32 %v953, 7
  %v955 = vsub.s32 1, %v954
  %v956 = vrot.slane %v947, %v955
  %v957 = vlaneseq
  %v958 = vshrl.u32 %v957, 7
  %v959 = vsub.s32 2, %v958
  %v960 = vrot.slane %v947, %v959
  %v961 = vlaneseq
  %v962 = vshrl.u32 %v961, 7
  %v963 = vsub.s32 3, %v962
  %v964 = vrot.slane %v947, %v963
  %v969 = vmul.f32 %v945, %v952
  %v970 = vmul.f32 %v944, %v956
  %v971 = vmul.f32 %v943, %v960
  %v972 = vmul.f32 %v942, %v964
  %973 = vrot.lane.b32.xlu0 %v847, 31
  %v974 = vpop.permute.xlu0 %973
  %975 = vrot.lane.b32.xlu0 %v848, 31
  %v976 = vpop.permute.xlu0 %975
  %977 = vrot.lane.b32.xlu0 %v849, 31
  %v978 = vpop.permute.xlu0 %977
  %979 = vrot.lane.b32.xlu0 %v850, 31
  %v980 = vpop.permute.xlu0 %979
  %vm981 = vcmp.lt.s32.totalorder %v154, 31
  %v982 = vsel %vm981, %v978, %v980
  %v983 = vsel %vm981, %v976, %v978
  %v984 = vsel %vm981, %v974, %v976
  %v985 = vsel %vm981, %v980, %v974
  %s986 = scalar_lea.vmem %s5, 36
  %v987 = vld [vmem:[%s986] ss:$8 sm:$0xf]
  %v989 = vlaneseq
  %v990 = vshrl.u32 %v989, 7
  %v991 = vsub.s32 0, %v990
  %v992 = vrot.slane %v987, %v991
  %v993 = vlaneseq
  %v994 = vshrl.u32 %v993, 7
  %v995 = vsub.s32 1, %v994
  %v996 = vrot.slane %v987, %v995
  %v997 = vlaneseq
  %v998 = vshrl.u32 %v997, 7
  %v999 = vsub.s32 2, %v998
  %v1000 = vrot.slane %v987, %v999
  %v1001 = vlaneseq
  %v1002 = vshrl.u32 %v1001, 7
  %v1003 = vsub.s32 3, %v1002
  %v1004 = vrot.slane %v987, %v1003
  %v1009 = vmul.f32 %v985, %v992
  %v1010 = vmul.f32 %v984, %v996
  %v1011 = vmul.f32 %v983, %v1000
  %v1012 = vmul.f32 %v982, %v1004
  %1013 = vrot.lane.b32.xlu0 %v847, 30
  %v1014 = vpop.permute.xlu0 %1013
  %1015 = vrot.lane.b32.xlu0 %v848, 30
  %v1016 = vpop.permute.xlu0 %1015
  %1017 = vrot.lane.b32.xlu0 %v849, 30
  %v1018 = vpop.permute.xlu0 %1017
  %1019 = vrot.lane.b32.xlu0 %v850, 30
  %v1020 = vpop.permute.xlu0 %1019
  %vm1021 = vcmp.lt.s32.totalorder %v154, 30
  %v1022 = vsel %vm1021, %v1018, %v1020
  %v1023 = vsel %vm1021, %v1016, %v1018
  %v1024 = vsel %vm1021, %v1014, %v1016
  %v1025 = vsel %vm1021, %v1020, %v1014
  %s1026 = scalar_lea.vmem %s5, 37
  %v1027 = vld [vmem:[%s1026] ss:$8 sm:$0xf]
  %v1029 = vlaneseq
  %v1030 = vshrl.u32 %v1029, 7
  %v1031 = vsub.s32 0, %v1030
  %v1032 = vrot.slane %v1027, %v1031
  %v1033 = vlaneseq
  %v1034 = vshrl.u32 %v1033, 7
  %v1035 = vsub.s32 1, %v1034
  %v1036 = vrot.slane %v1027, %v1035
  %v1037 = vlaneseq
  %v1038 = vshrl.u32 %v1037, 7
  %v1039 = vsub.s32 2, %v1038
  %v1040 = vrot.slane %v1027, %v1039
  %v1041 = vlaneseq
  %v1042 = vshrl.u32 %v1041, 7
  %v1043 = vsub.s32 3, %v1042
  %v1044 = vrot.slane %v1027, %v1043
  %v1049 = vmul.f32 %v1025, %v1032
  %v1050 = vmul.f32 %v1024, %v1036
  %v1051 = vmul.f32 %v1023, %v1040
  %v1052 = vmul.f32 %v1022, %v1044
  %1053 = vrot.lane.b32.xlu0 %v847, 18
  %v1054 = vpop.permute.xlu0 %1053
  %1055 = vrot.lane.b32.xlu0 %v848, 18
  %v1056 = vpop.permute.xlu0 %1055
  %1057 = vrot.lane.b32.xlu0 %v849, 18
  %v1058 = vpop.permute.xlu0 %1057
  %1059 = vrot.lane.b32.xlu0 %v850, 18
  %v1060 = vpop.permute.xlu0 %1059
  %vm1061 = vcmp.lt.s32.totalorder %v154, 18
  %v1062 = vsel %vm1061, %v1058, %v1060
  %v1063 = vsel %vm1061, %v1056, %v1058
  %v1064 = vsel %vm1061, %v1054, %v1056
  %v1065 = vsel %vm1061, %v1060, %v1054
  %s1066 = scalar_lea.vmem %s5, 38
  %v1067 = vld [vmem:[%s1066] ss:$8 sm:$0xf]
  %v1069 = vlaneseq
  %v1070 = vshrl.u32 %v1069, 7
  %v1071 = vsub.s32 0, %v1070
  %v1072 = vrot.slane %v1067, %v1071
  %v1073 = vlaneseq
  %v1074 = vshrl.u32 %v1073, 7
  %v1075 = vsub.s32 1, %v1074
  %v1076 = vrot.slane %v1067, %v1075
  %v1077 = vlaneseq
  %v1078 = vshrl.u32 %v1077, 7
  %v1079 = vsub.s32 2, %v1078
  %v1080 = vrot.slane %v1067, %v1079
  %v1081 = vlaneseq
  %v1082 = vshrl.u32 %v1081, 7
  %v1083 = vsub.s32 3, %v1082
  %v1084 = vrot.slane %v1067, %v1083
  %v1089 = vmul.f32 %v1065, %v1072
  %v1090 = vmul.f32 %v1064, %v1076
  %v1091 = vmul.f32 %v1063, %v1080
  %v1092 = vmul.f32 %v1062, %v1084
  %1093 = vrot.lane.b32.xlu0 %v847, 17
  %v1094 = vpop.permute.xlu0 %1093
  %1095 = vrot.lane.b32.xlu0 %v848, 17
  %v1096 = vpop.permute.xlu0 %1095
  %1097 = vrot.lane.b32.xlu0 %v849, 17
  %v1098 = vpop.permute.xlu0 %1097
  %1099 = vrot.lane.b32.xlu0 %v850, 17
  %v1100 = vpop.permute.xlu0 %1099
  %v1101 = vsel %vm155, %v1098, %v1100
  %v1102 = vsel %vm155, %v1096, %v1098
  %v1103 = vsel %vm155, %v1094, %v1096
  %v1104 = vsel %vm155, %v1100, %v1094
  %s1105 = scalar_lea.vmem %s5, 39
  %v1106 = vld [vmem:[%s1105] ss:$8 sm:$0xf]
  %v1108 = vlaneseq
  %v1109 = vshrl.u32 %v1108, 7
  %v1110 = vsub.s32 0, %v1109
  %v1111 = vrot.slane %v1106, %v1110
  %v1112 = vlaneseq
  %v1113 = vshrl.u32 %v1112, 7
  %v1114 = vsub.s32 1, %v1113
  %v1115 = vrot.slane %v1106, %v1114
  %v1116 = vlaneseq
  %v1117 = vshrl.u32 %v1116, 7
  %v1118 = vsub.s32 2, %v1117
  %v1119 = vrot.slane %v1106, %v1118
  %v1120 = vlaneseq
  %v1121 = vshrl.u32 %v1120, 7
  %v1122 = vsub.s32 3, %v1121
  %v1123 = vrot.slane %v1106, %v1122
  %v1128 = vmul.f32 %v1104, %v1111
  %v1129 = vmul.f32 %v1103, %v1115
  %v1130 = vmul.f32 %v1102, %v1119
  %v1131 = vmul.f32 %v1101, %v1123
  %1132 = vrot.lane.b32.xlu0 %v847, 16
  %v1133 = vpop.permute.xlu0 %1132
  %1134 = vrot.lane.b32.xlu0 %v848, 16
  %v1135 = vpop.permute.xlu0 %1134
  %1136 = vrot.lane.b32.xlu0 %v849, 16
  %v1137 = vpop.permute.xlu0 %1136
  %1138 = vrot.lane.b32.xlu0 %v850, 16
  %v1139 = vpop.permute.xlu0 %1138
  %v1140 = vsel %vm194, %v1137, %v1139
  %v1141 = vsel %vm194, %v1135, %v1137
  %v1142 = vsel %vm194, %v1133, %v1135
  %v1143 = vsel %vm194, %v1139, %v1133
  %s1144 = scalar_lea.vmem %s5, 64
  %v1145 = vld [vmem:[%s1144] ss:$8 sm:$0xf]
  %v1147 = vlaneseq
  %v1148 = vshrl.u32 %v1147, 7
  %v1149 = vsub.s32 0, %v1148
  %v1150 = vrot.slane %v1145, %v1149
  %v1151 = vlaneseq
  %v1152 = vshrl.u32 %v1151, 7
  %v1153 = vsub.s32 1, %v1152
  %v1154 = vrot.slane %v1145, %v1153
  %v1155 = vlaneseq
  %v1156 = vshrl.u32 %v1155, 7
  %v1157 = vsub.s32 2, %v1156
  %v1158 = vrot.slane %v1145, %v1157
  %v1159 = vlaneseq
  %v1160 = vshrl.u32 %v1159, 7
  %v1161 = vsub.s32 3, %v1160
  %v1162 = vrot.slane %v1145, %v1161
  %v1167 = vmul.f32 %v1143, %v1150
  %v1168 = vmul.f32 %v1142, %v1154
  %v1169 = vmul.f32 %v1141, %v1158
  %v1170 = vmul.f32 %v1140, %v1162
  %1171 = vrot.lane.b32.xlu0 %v847, 15
  %v1172 = vpop.permute.xlu0 %1171
  %1173 = vrot.lane.b32.xlu0 %v848, 15
  %v1174 = vpop.permute.xlu0 %1173
  %1175 = vrot.lane.b32.xlu0 %v849, 15
  %v1176 = vpop.permute.xlu0 %1175
  %1177 = vrot.lane.b32.xlu0 %v850, 15
  %v1178 = vpop.permute.xlu0 %1177
  %v1179 = vsel %vm234, %v1176, %v1178
  %v1180 = vsel %vm234, %v1174, %v1176
  %v1181 = vsel %vm234, %v1172, %v1174
  %v1182 = vsel %vm234, %v1178, %v1172
  %s1183 = scalar_lea.vmem %s5, 65
  %v1184 = vld [vmem:[%s1183] ss:$8 sm:$0xf]
  %v1186 = vlaneseq
  %v1187 = vshrl.u32 %v1186, 7
  %v1188 = vsub.s32 0, %v1187
  %v1189 = vrot.slane %v1184, %v1188
  %v1190 = vlaneseq
  %v1191 = vshrl.u32 %v1190, 7
  %v1192 = vsub.s32 1, %v1191
  %v1193 = vrot.slane %v1184, %v1192
  %v1194 = vlaneseq
  %v1195 = vshrl.u32 %v1194, 7
  %v1196 = vsub.s32 2, %v1195
  %v1197 = vrot.slane %v1184, %v1196
  %v1198 = vlaneseq
  %v1199 = vshrl.u32 %v1198, 7
  %v1200 = vsub.s32 3, %v1199
  %v1201 = vrot.slane %v1184, %v1200
  %v1206 = vmul.f32 %v1182, %v1189
  %v1207 = vmul.f32 %v1181, %v1193
  %v1208 = vmul.f32 %v1180, %v1197
  %v1209 = vmul.f32 %v1179, %v1201
  %1210 = vrot.lane.b32.xlu0 %v847, 14
  %v1211 = vpop.permute.xlu0 %1210
  %1212 = vrot.lane.b32.xlu0 %v848, 14
  %v1213 = vpop.permute.xlu0 %1212
  %1214 = vrot.lane.b32.xlu0 %v849, 14
  %v1215 = vpop.permute.xlu0 %1214
  %1216 = vrot.lane.b32.xlu0 %v850, 14
  %v1217 = vpop.permute.xlu0 %1216
  %vm1218 = vcmp.lt.s32.totalorder %v154, 14
  %v1219 = vsel %vm1218, %v1215, %v1217
  %v1220 = vsel %vm1218, %v1213, %v1215
  %v1221 = vsel %vm1218, %v1211, %v1213
  %v1222 = vsel %vm1218, %v1217, %v1211
  %s1223 = scalar_lea.vmem %s5, 66
  %v1224 = vld [vmem:[%s1223] ss:$8 sm:$0xf]
  %v1226 = vlaneseq
  %v1227 = vshrl.u32 %v1226, 7
  %v1228 = vsub.s32 0, %v1227
  %v1229 = vrot.slane %v1224, %v1228
  %v1230 = vlaneseq
  %v1231 = vshrl.u32 %v1230, 7
  %v1232 = vsub.s32 1, %v1231
  %v1233 = vrot.slane %v1224, %v1232
  %v1234 = vlaneseq
  %v1235 = vshrl.u32 %v1234, 7
  %v1236 = vsub.s32 2, %v1235
  %v1237 = vrot.slane %v1224, %v1236
  %v1238 = vlaneseq
  %v1239 = vshrl.u32 %v1238, 7
  %v1240 = vsub.s32 3, %v1239
  %v1241 = vrot.slane %v1224, %v1240
  %v1246 = vmul.f32 %v1222, %v1229
  %v1247 = vmul.f32 %v1221, %v1233
  %v1248 = vmul.f32 %v1220, %v1237
  %v1249 = vmul.f32 %v1219, %v1241
  %1250 = vrot.lane.b32.xlu0 %v847, 2
  %v1251 = vpop.permute.xlu0 %1250
  %1252 = vrot.lane.b32.xlu0 %v848, 2
  %v1253 = vpop.permute.xlu0 %1252
  %1254 = vrot.lane.b32.xlu0 %v849, 2
  %v1255 = vpop.permute.xlu0 %1254
  %1256 = vrot.lane.b32.xlu0 %v850, 2
  %v1257 = vpop.permute.xlu0 %1256
  %vm1258 = vcmp.lt.s32.totalorder %v154, 2
  %v1259 = vsel %vm1258, %v1255, %v1257
  %v1260 = vsel %vm1258, %v1253, %v1255
  %v1261 = vsel %vm1258, %v1251, %v1253
  %v1262 = vsel %vm1258, %v1257, %v1251
  %s1263 = scalar_lea.vmem %s5, 67
  %v1264 = vld [vmem:[%s1263] ss:$8 sm:$0xf]
  %v1266 = vlaneseq
  %v1267 = vshrl.u32 %v1266, 7
  %v1268 = vsub.s32 0, %v1267
  %v1269 = vrot.slane %v1264, %v1268
  %v1270 = vlaneseq
  %v1271 = vshrl.u32 %v1270, 7
  %v1272 = vsub.s32 1, %v1271
  %v1273 = vrot.slane %v1264, %v1272
  %v1274 = vlaneseq
  %v1275 = vshrl.u32 %v1274, 7
  %v1276 = vsub.s32 2, %v1275
  %v1277 = vrot.slane %v1264, %v1276
  %v1278 = vlaneseq
  %v1279 = vshrl.u32 %v1278, 7
  %v1280 = vsub.s32 3, %v1279
  %v1281 = vrot.slane %v1264, %v1280
  %v1286 = vmul.f32 %v1262, %v1269
  %v1287 = vmul.f32 %v1261, %v1273
  %v1288 = vmul.f32 %v1260, %v1277
  %v1289 = vmul.f32 %v1259, %v1281
  %1290 = vrot.lane.b32.xlu0 %v847, 1
  %v1291 = vpop.permute.xlu0 %1290
  %1292 = vrot.lane.b32.xlu0 %v848, 1
  %v1293 = vpop.permute.xlu0 %1292
  %1294 = vrot.lane.b32.xlu0 %v849, 1
  %v1295 = vpop.permute.xlu0 %1294
  %1296 = vrot.lane.b32.xlu0 %v850, 1
  %v1297 = vpop.permute.xlu0 %1296
  %v1298 = vsel %vm274, %v1295, %v1297
  %v1299 = vsel %vm274, %v1293, %v1295
  %v1300 = vsel %vm274, %v1291, %v1293
  %v1301 = vsel %vm274, %v1297, %v1291
  %s1302 = scalar_lea.vmem %s5, 68
  %v1303 = vld [vmem:[%s1302] ss:$8 sm:$0xf]
  %v1305 = vlaneseq
  %v1306 = vshrl.u32 %v1305, 7
  %v1307 = vsub.s32 0, %v1306
  %v1308 = vrot.slane %v1303, %v1307
  %v1309 = vlaneseq
  %v1310 = vshrl.u32 %v1309, 7
  %v1311 = vsub.s32 1, %v1310
  %v1312 = vrot.slane %v1303, %v1311
  %v1313 = vlaneseq
  %v1314 = vshrl.u32 %v1313, 7
  %v1315 = vsub.s32 2, %v1314
  %v1316 = vrot.slane %v1303, %v1315
  %v1317 = vlaneseq
  %v1318 = vshrl.u32 %v1317, 7
  %v1319 = vsub.s32 3, %v1318
  %v1320 = vrot.slane %v1303, %v1319
  %v1325 = vmul.f32 %v1301, %v1308
  %v1326 = vmul.f32 %v1300, %v1312
  %v1327 = vmul.f32 %v1299, %v1316
  %v1328 = vmul.f32 %v1298, %v1320
  %1329 = vrot.lane.b32.xlu0 %v847, 127
  %v1330 = vpop.permute.xlu0 %1329
  %1331 = vrot.lane.b32.xlu0 %v848, 127
  %v1332 = vpop.permute.xlu0 %1331
  %1333 = vrot.lane.b32.xlu0 %v849, 127
  %v1334 = vpop.permute.xlu0 %1333
  %1335 = vrot.lane.b32.xlu0 %v850, 127
  %v1336 = vpop.permute.xlu0 %1335
  %v1337 = vsel %vm314, %v1334, %v1336
  %v1338 = vsel %vm314, %v1332, %v1334
  %v1339 = vsel %vm314, %v1330, %v1332
  %v1340 = vsel %vm314, %v1336, %v1330
  %s1341 = scalar_lea.vmem %s5, 70
  %v1342 = vld [vmem:[%s1341] ss:$8 sm:$0xf]
  %v1344 = vlaneseq
  %v1345 = vshrl.u32 %v1344, 7
  %v1346 = vsub.s32 0, %v1345
  %v1347 = vrot.slane %v1342, %v1346
  %v1348 = vlaneseq
  %v1349 = vshrl.u32 %v1348, 7
  %v1350 = vsub.s32 1, %v1349
  %v1351 = vrot.slane %v1342, %v1350
  %v1352 = vlaneseq
  %v1353 = vshrl.u32 %v1352, 7
  %v1354 = vsub.s32 2, %v1353
  %v1355 = vrot.slane %v1342, %v1354
  %v1356 = vlaneseq
  %v1357 = vshrl.u32 %v1356, 7
  %v1358 = vsub.s32 3, %v1357
  %v1359 = vrot.slane %v1342, %v1358
  %v1364 = vmul.f32 %v1339, %v1347
  %v1365 = vmul.f32 %v1338, %v1351
  %v1366 = vmul.f32 %v1337, %v1355
  %v1367 = vmul.f32 %v1340, %v1359
  %1368 = vrot.lane.b32.xlu0 %v847, 126
  %v1369 = vpop.permute.xlu0 %1368
  %1370 = vrot.lane.b32.xlu0 %v848, 126
  %v1371 = vpop.permute.xlu0 %1370
  %1372 = vrot.lane.b32.xlu0 %v849, 126
  %v1373 = vpop.permute.xlu0 %1372
  %1374 = vrot.lane.b32.xlu0 %v850, 126
  %v1375 = vpop.permute.xlu0 %1374
  %vm1376 = vcmp.lt.s32.totalorder %v154, 126
  %v1377 = vsel %vm1376, %v1373, %v1375
  %v1378 = vsel %vm1376, %v1371, %v1373
  %v1379 = vsel %vm1376, %v1369, %v1371
  %v1380 = vsel %vm1376, %v1375, %v1369
  %s1381 = scalar_lea.vmem %s5, 71
  %v1382 = vld [vmem:[%s1381] ss:$8 sm:$0xf]
  %v1384 = vlaneseq
  %v1385 = vshrl.u32 %v1384, 7
  %v1386 = vsub.s32 0, %v1385
  %v1387 = vrot.slane %v1382, %v1386
  %v1388 = vlaneseq
  %v1389 = vshrl.u32 %v1388, 7
  %v1390 = vsub.s32 1, %v1389
  %v1391 = vrot.slane %v1382, %v1390
  %v1392 = vlaneseq
  %v1393 = vshrl.u32 %v1392, 7
  %v1394 = vsub.s32 2, %v1393
  %v1395 = vrot.slane %v1382, %v1394
  %v1396 = vlaneseq
  %v1397 = vshrl.u32 %v1396, 7
  %v1398 = vsub.s32 3, %v1397
  %v1399 = vrot.slane %v1382, %v1398
  %v1404 = vmul.f32 %v1379, %v1387
  %v1405 = vmul.f32 %v1378, %v1391
  %v1406 = vmul.f32 %v1377, %v1395
  %v1407 = vmul.f32 %v1380, %v1399
  %1408 = vrot.lane.b32.xlu0 %v847, 114
  %v1409 = vpop.permute.xlu0 %1408
  %1410 = vrot.lane.b32.xlu0 %v848, 114
  %v1411 = vpop.permute.xlu0 %1410
  %1412 = vrot.lane.b32.xlu0 %v849, 114
  %v1413 = vpop.permute.xlu0 %1412
  %1414 = vrot.lane.b32.xlu0 %v850, 114
  %v1415 = vpop.permute.xlu0 %1414
  %vm1416 = vcmp.lt.s32.totalorder %v154, 114
  %v1417 = vsel %vm1416, %v1413, %v1415
  %v1418 = vsel %vm1416, %v1411, %v1413
  %v1419 = vsel %vm1416, %v1409, %v1411
  %v1420 = vsel %vm1416, %v1415, %v1409
  %s1421 = scalar_lea.vmem %s5, 96
  %v1422 = vld [vmem:[%s1421] ss:$8 sm:$0xf]
  %v1424 = vlaneseq
  %v1425 = vshrl.u32 %v1424, 7
  %v1426 = vsub.s32 0, %v1425
  %v1427 = vrot.slane %v1422, %v1426
  %v1428 = vlaneseq
  %v1429 = vshrl.u32 %v1428, 7
  %v1430 = vsub.s32 1, %v1429
  %v1431 = vrot.slane %v1422, %v1430
  %v1432 = vlaneseq
  %v1433 = vshrl.u32 %v1432, 7
  %v1434 = vsub.s32 2, %v1433
  %v1435 = vrot.slane %v1422, %v1434
  %v1436 = vlaneseq
  %v1437 = vshrl.u32 %v1436, 7
  %v1438 = vsub.s32 3, %v1437
  %v1439 = vrot.slane %v1422, %v1438
  %v1444 = vmul.f32 %v1419, %v1427
  %v1445 = vmul.f32 %v1418, %v1431
  %v1446 = vmul.f32 %v1417, %v1435
  %v1447 = vmul.f32 %v1420, %v1439
  %1448 = vrot.lane.b32.xlu0 %v847, 113
  %v1449 = vpop.permute.xlu0 %1448
  %1450 = vrot.lane.b32.xlu0 %v848, 113
  %v1451 = vpop.permute.xlu0 %1450
  %1452 = vrot.lane.b32.xlu0 %v849, 113
  %v1453 = vpop.permute.xlu0 %1452
  %1454 = vrot.lane.b32.xlu0 %v850, 113
  %v1455 = vpop.permute.xlu0 %1454
  %v1456 = vsel %vm354, %v1453, %v1455
  %v1457 = vsel %vm354, %v1451, %v1453
  %v1458 = vsel %vm354, %v1449, %v1451
  %v1459 = vsel %vm354, %v1455, %v1449
  %s1460 = scalar_lea.vmem %s5, 97
  %v1461 = vld [vmem:[%s1460] ss:$8 sm:$0xf]
  %v1463 = vlaneseq
  %v1464 = vshrl.u32 %v1463, 7
  %v1465 = vsub.s32 0, %v1464
  %v1466 = vrot.slane %v1461, %v1465
  %v1467 = vlaneseq
  %v1468 = vshrl.u32 %v1467, 7
  %v1469 = vsub.s32 1, %v1468
  %v1470 = vrot.slane %v1461, %v1469
  %v1471 = vlaneseq
  %v1472 = vshrl.u32 %v1471, 7
  %v1473 = vsub.s32 2, %v1472
  %v1474 = vrot.slane %v1461, %v1473
  %v1475 = vlaneseq
  %v1476 = vshrl.u32 %v1475, 7
  %v1477 = vsub.s32 3, %v1476
  %v1478 = vrot.slane %v1461, %v1477
  %v1483 = vmul.f32 %v1458, %v1466
  %v1484 = vmul.f32 %v1457, %v1470
  %v1485 = vmul.f32 %v1456, %v1474
  %v1486 = vmul.f32 %v1459, %v1478
  %1487 = vrot.lane.b32.xlu0 %v847, 112
  %v1488 = vpop.permute.xlu0 %1487
  %1489 = vrot.lane.b32.xlu0 %v848, 112
  %v1490 = vpop.permute.xlu0 %1489
  %1491 = vrot.lane.b32.xlu0 %v849, 112
  %v1492 = vpop.permute.xlu0 %1491
  %1493 = vrot.lane.b32.xlu0 %v850, 112
  %v1494 = vpop.permute.xlu0 %1493
  %v1495 = vsel %vm394, %v1492, %v1494
  %v1496 = vsel %vm394, %v1490, %v1492
  %v1497 = vsel %vm394, %v1488, %v1490
  %v1498 = vsel %vm394, %v1494, %v1488
  %s1499 = scalar_lea.vmem %s5, 98
  %v1500 = vld [vmem:[%s1499] ss:$8 sm:$0xf]
  %v1502 = vlaneseq
  %v1503 = vshrl.u32 %v1502, 7
  %v1504 = vsub.s32 0, %v1503
  %v1505 = vrot.slane %v1500, %v1504
  %v1506 = vlaneseq
  %v1507 = vshrl.u32 %v1506, 7
  %v1508 = vsub.s32 1, %v1507
  %v1509 = vrot.slane %v1500, %v1508
  %v1510 = vlaneseq
  %v1511 = vshrl.u32 %v1510, 7
  %v1512 = vsub.s32 2, %v1511
  %v1513 = vrot.slane %v1500, %v1512
  %v1514 = vlaneseq
  %v1515 = vshrl.u32 %v1514, 7
  %v1516 = vsub.s32 3, %v1515
  %v1517 = vrot.slane %v1500, %v1516
  %v1522 = vmul.f32 %v1497, %v1505
  %v1523 = vmul.f32 %v1496, %v1509
  %v1524 = vmul.f32 %v1495, %v1513
  %v1525 = vmul.f32 %v1498, %v1517
  %1526 = vrot.lane.b32.xlu0 %v847, 111
  %v1527 = vpop.permute.xlu0 %1526
  %1528 = vrot.lane.b32.xlu0 %v848, 111
  %v1529 = vpop.permute.xlu0 %1528
  %1530 = vrot.lane.b32.xlu0 %v849, 111
  %v1531 = vpop.permute.xlu0 %1530
  %1532 = vrot.lane.b32.xlu0 %v850, 111
  %v1533 = vpop.permute.xlu0 %1532
  %v1534 = vsel %vm434, %v1531, %v1533
  %v1535 = vsel %vm434, %v1529, %v1531
  %v1536 = vsel %vm434, %v1527, %v1529
  %v1537 = vsel %vm434, %v1533, %v1527
  %s1538 = scalar_lea.vmem %s5, 99
  %v1539 = vld [vmem:[%s1538] ss:$8 sm:$0xf]
  %v1541 = vlaneseq
  %v1542 = vshrl.u32 %v1541, 7
  %v1543 = vsub.s32 0, %v1542
  %v1544 = vrot.slane %v1539, %v1543
  %v1545 = vlaneseq
  %v1546 = vshrl.u32 %v1545, 7
  %v1547 = vsub.s32 1, %v1546
  %v1548 = vrot.slane %v1539, %v1547
  %v1549 = vlaneseq
  %v1550 = vshrl.u32 %v1549, 7
  %v1551 = vsub.s32 2, %v1550
  %v1552 = vrot.slane %v1539, %v1551
  %v1553 = vlaneseq
  %v1554 = vshrl.u32 %v1553, 7
  %v1555 = vsub.s32 3, %v1554
  %v1556 = vrot.slane %v1539, %v1555
  %v1561 = vmul.f32 %v1536, %v1544
  %v1562 = vmul.f32 %v1535, %v1548
  %v1563 = vmul.f32 %v1534, %v1552
  %v1564 = vmul.f32 %v1537, %v1556
  %1565 = vrot.lane.b32.xlu0 %v847, 110
  %v1566 = vpop.permute.xlu0 %1565
  %1567 = vrot.lane.b32.xlu0 %v848, 110
  %v1568 = vpop.permute.xlu0 %1567
  %1569 = vrot.lane.b32.xlu0 %v849, 110
  %v1570 = vpop.permute.xlu0 %1569
  %1571 = vrot.lane.b32.xlu0 %v850, 110
  %v1572 = vpop.permute.xlu0 %1571
  %vm1573 = vcmp.lt.s32.totalorder %v154, 110
  %v1574 = vsel %vm1573, %v1570, %v1572
  %v1575 = vsel %vm1573, %v1568, %v1570
  %v1576 = vsel %vm1573, %v1566, %v1568
  %v1577 = vsel %vm1573, %v1572, %v1566
  %s1578 = scalar_lea.vmem %s5, 100
  %v1579 = vld [vmem:[%s1578] ss:$8 sm:$0xf]
  %v1581 = vlaneseq
  %v1582 = vshrl.u32 %v1581, 7
  %v1583 = vsub.s32 0, %v1582
  %v1584 = vrot.slane %v1579, %v1583
  %v1585 = vlaneseq
  %v1586 = vshrl.u32 %v1585, 7
  %v1587 = vsub.s32 1, %v1586
  %v1588 = vrot.slane %v1579, %v1587
  %v1589 = vlaneseq
  %v1590 = vshrl.u32 %v1589, 7
  %v1591 = vsub.s32 2, %v1590
  %v1592 = vrot.slane %v1579, %v1591
  %v1593 = vlaneseq
  %v1594 = vshrl.u32 %v1593, 7
  %v1595 = vsub.s32 3, %v1594
  %v1596 = vrot.slane %v1579, %v1595
  %v1601 = vmul.f32 %v1576, %v1584
  %v1602 = vmul.f32 %v1575, %v1588
  %v1603 = vmul.f32 %v1574, %v1592
  %v1604 = vmul.f32 %v1577, %v1596
  %1605 = vrot.lane.b32.xlu0 %v847, 98
  %v1606 = vpop.permute.xlu0 %1605
  %1607 = vrot.lane.b32.xlu0 %v848, 98
  %v1608 = vpop.permute.xlu0 %1607
  %1609 = vrot.lane.b32.xlu0 %v849, 98
  %v1610 = vpop.permute.xlu0 %1609
  %1611 = vrot.lane.b32.xlu0 %v850, 98
  %v1612 = vpop.permute.xlu0 %1611
  %vm1613 = vcmp.lt.s32.totalorder %v154, 98
  %v1614 = vsel %vm1613, %v1610, %v1612
  %v1615 = vsel %vm1613, %v1608, %v1610
  %v1616 = vsel %vm1613, %v1606, %v1608
  %v1617 = vsel %vm1613, %v1612, %v1606
  %s1618 = scalar_lea.vmem %s5, 101
  %v1619 = vld [vmem:[%s1618] ss:$8 sm:$0xf]
  %v1621 = vlaneseq
  %v1622 = vshrl.u32 %v1621, 7
  %v1623 = vsub.s32 0, %v1622
  %v1624 = vrot.slane %v1619, %v1623
  %v1625 = vlaneseq
  %v1626 = vshrl.u32 %v1625, 7
  %v1627 = vsub.s32 1, %v1626
  %v1628 = vrot.slane %v1619, %v1627
  %v1629 = vlaneseq
  %v1630 = vshrl.u32 %v1629, 7
  %v1631 = vsub.s32 2, %v1630
  %v1632 = vrot.slane %v1619, %v1631
  %v1633 = vlaneseq
  %v1634 = vshrl.u32 %v1633, 7
  %v1635 = vsub.s32 3, %v1634
  %v1636 = vrot.slane %v1619, %v1635
  %v1641 = vmul.f32 %v1616, %v1624
  %v1642 = vmul.f32 %v1615, %v1628
  %v1643 = vmul.f32 %v1614, %v1632
  %v1644 = vmul.f32 %v1617, %v1636
  %1645 = vrot.lane.b32.xlu0 %v847, 97
  %v1646 = vpop.permute.xlu0 %1645
  %1647 = vrot.lane.b32.xlu0 %v848, 97
  %v1648 = vpop.permute.xlu0 %1647
  %1649 = vrot.lane.b32.xlu0 %v849, 97
  %v1650 = vpop.permute.xlu0 %1649
  %1651 = vrot.lane.b32.xlu0 %v850, 97
  %v1652 = vpop.permute.xlu0 %1651
  %vm1653 = vcmp.lt.s32.totalorder %v154, 97
  %v1654 = vsel %vm1653, %v1650, %v1652
  %v1655 = vsel %vm1653, %v1648, %v1650
  %v1656 = vsel %vm1653, %v1646, %v1648
  %v1657 = vsel %vm1653, %v1652, %v1646
  %s1658 = scalar_lea.vmem %s5, 102
  %v1659 = vld [vmem:[%s1658] ss:$8 sm:$0xf]
  %v1661 = vlaneseq
  %v1662 = vshrl.u32 %v1661, 7
  %v1663 = vsub.s32 0, %v1662
  %v1664 = vrot.slane %v1659, %v1663
  %v1665 = vlaneseq
  %v1666 = vshrl.u32 %v1665, 7
  %v1667 = vsub.s32 1, %v1666
  %v1668 = vrot.slane %v1659, %v1667
  %v1669 = vlaneseq
  %v1670 = vshrl.u32 %v1669, 7
  %v1671 = vsub.s32 2, %v1670
  %v1672 = vrot.slane %v1659, %v1671
  %v1673 = vlaneseq
  %v1674 = vshrl.u32 %v1673, 7
  %v1675 = vsub.s32 3, %v1674
  %v1676 = vrot.slane %v1659, %v1675
  %v1681 = vmul.f32 %v1656, %v1664
  %v1682 = vmul.f32 %v1655, %v1668
  %v1683 = vmul.f32 %v1654, %v1672
  %v1684 = vmul.f32 %v1657, %v1676
  %1685 = vrot.lane.b32.xlu0 %v847, 96
  %v1686 = vpop.permute.xlu0 %1685
  %1687 = vrot.lane.b32.xlu0 %v848, 96
  %v1688 = vpop.permute.xlu0 %1687
  %1689 = vrot.lane.b32.xlu0 %v849, 96
  %v1690 = vpop.permute.xlu0 %1689
  %1691 = vrot.lane.b32.xlu0 %v850, 96
  %v1692 = vpop.permute.xlu0 %1691
  %vm1693 = vcmp.lt.s32.totalorder %v154, 96
  %v1694 = vsel %vm1693, %v1690, %v1692
  %v1695 = vsel %vm1693, %v1688, %v1690
  %v1696 = vsel %vm1693, %v1686, %v1688
  %v1697 = vsel %vm1693, %v1692, %v1686
  %s1698 = scalar_lea.vmem %s5, 103
  %v1699 = vld [vmem:[%s1698] ss:$8 sm:$0xf]
  %v1701 = vlaneseq
  %v1702 = vshrl.u32 %v1701, 7
  %v1703 = vsub.s32 0, %v1702
  %v1704 = vrot.slane %v1699, %v1703
  %v1705 = vlaneseq
  %v1706 = vshrl.u32 %v1705, 7
  %v1707 = vsub.s32 1, %v1706
  %v1708 = vrot.slane %v1699, %v1707
  %v1709 = vlaneseq
  %v1710 = vshrl.u32 %v1709, 7
  %v1711 = vsub.s32 2, %v1710
  %v1712 = vrot.slane %v1699, %v1711
  %v1713 = vlaneseq
  %v1714 = vshrl.u32 %v1713, 7
  %v1715 = vsub.s32 3, %v1714
  %v1716 = vrot.slane %v1699, %v1715
  %v1721 = vmul.f32 %v1696, %v1704
  %v1722 = vmul.f32 %v1695, %v1708
  %v1723 = vmul.f32 %v1694, %v1712
  %v1724 = vmul.f32 %v1697, %v1716
  %1725 = vrot.lane.b32.xlu0 %v847, 95
  %v1726 = vpop.permute.xlu0 %1725
  %1727 = vrot.lane.b32.xlu0 %v848, 95
  %v1728 = vpop.permute.xlu0 %1727
  %1729 = vrot.lane.b32.xlu0 %v849, 95
  %v1730 = vpop.permute.xlu0 %1729
  %1731 = vrot.lane.b32.xlu0 %v850, 95
  %v1732 = vpop.permute.xlu0 %1731
  %vm1733 = vcmp.lt.s32.totalorder %v154, 95
  %v1734 = vsel %vm1733, %v1730, %v1732
  %v1735 = vsel %vm1733, %v1728, %v1730
  %v1736 = vsel %vm1733, %v1726, %v1728
  %v1737 = vsel %vm1733, %v1732, %v1726
  %s1738 = scalar_lea.vmem %s5, 128
  %v1739 = vld [vmem:[%s1738] ss:$8 sm:$0xf]
  %v1741 = vlaneseq
  %v1742 = vshrl.u32 %v1741, 7
  %v1743 = vsub.s32 0, %v1742
  %v1744 = vrot.slane %v1739, %v1743
  %v1745 = vlaneseq
  %v1746 = vshrl.u32 %v1745, 7
  %v1747 = vsub.s32 1, %v1746
  %v1748 = vrot.slane %v1739, %v1747
  %v1749 = vlaneseq
  %v1750 = vshrl.u32 %v1749, 7
  %v1751 = vsub.s32 2, %v1750
  %v1752 = vrot.slane %v1739, %v1751
  %v1753 = vlaneseq
  %v1754 = vshrl.u32 %v1753, 7
  %v1755 = vsub.s32 3, %v1754
  %v1756 = vrot.slane %v1739, %v1755
  %v1761 = vmul.f32 %v1736, %v1744
  %v1762 = vmul.f32 %v1735, %v1748
  %v1763 = vmul.f32 %v1734, %v1752
  %v1764 = vmul.f32 %v1737, %v1756
  %1765 = vrot.lane.b32.xlu0 %v847, 94
  %v1766 = vpop.permute.xlu0 %1765
  %1767 = vrot.lane.b32.xlu0 %v848, 94
  %v1768 = vpop.permute.xlu0 %1767
  %1769 = vrot.lane.b32.xlu0 %v849, 94
  %v1770 = vpop.permute.xlu0 %1769
  %1771 = vrot.lane.b32.xlu0 %v850, 94
  %v1772 = vpop.permute.xlu0 %1771
  %vm1773 = vcmp.lt.s32.totalorder %v154, 94
  %v1774 = vsel %vm1773, %v1770, %v1772
  %v1775 = vsel %vm1773, %v1768, %v1770
  %v1776 = vsel %vm1773, %v1766, %v1768
  %v1777 = vsel %vm1773, %v1772, %v1766
  %s1778 = scalar_lea.vmem %s5, 129
  %v1779 = vld [vmem:[%s1778] ss:$8 sm:$0xf]
  %v1781 = vlaneseq
  %v1782 = vshrl.u32 %v1781, 7
  %v1783 = vsub.s32 0, %v1782
  %v1784 = vrot.slane %v1779, %v1783
  %v1785 = vlaneseq
  %v1786 = vshrl.u32 %v1785, 7
  %v1787 = vsub.s32 1, %v1786
  %v1788 = vrot.slane %v1779, %v1787
  %v1789 = vlaneseq
  %v1790 = vshrl.u32 %v1789, 7
  %v1791 = vsub.s32 2, %v1790
  %v1792 = vrot.slane %v1779, %v1791
  %v1793 = vlaneseq
  %v1794 = vshrl.u32 %v1793, 7
  %v1795 = vsub.s32 3, %v1794
  %v1796 = vrot.slane %v1779, %v1795
  %v1801 = vmul.f32 %v1776, %v1784
  %v1802 = vmul.f32 %v1775, %v1788
  %v1803 = vmul.f32 %v1774, %v1792
  %v1804 = vmul.f32 %v1777, %v1796
  %v1805 = vpack.c.bf16 %v929, %v889
  %v1806 = vpack.c.bf16 %v930, %v890
  %v1807 = vpack.c.bf16 %v931, %v891
  %v1808 = vpack.c.bf16 %v932, %v892
  %v1809 = vpack.c.bf16 %v1009, %v969
  %v1810 = vpack.c.bf16 %v1010, %v970
  %v1811 = vpack.c.bf16 %v1011, %v971
  %v1812 = vpack.c.bf16 %v1012, %v972
  %v1813 = vpack.c.bf16 %v1089, %v1049
  %v1814 = vpack.c.bf16 %v1090, %v1050
  %v1815 = vpack.c.bf16 %v1091, %v1051
  %v1816 = vpack.c.bf16 %v1092, %v1052
  %v1817 = vpack.c.bf16 %v1167, %v1128
  %v1818 = vpack.c.bf16 %v1168, %v1129
  %v1819 = vpack.c.bf16 %v1169, %v1130
  %v1820 = vpack.c.bf16 %v1170, %v1131
  %v1821 = vpack.c.bf16 %v1246, %v1206
  %v1822 = vpack.c.bf16 %v1247, %v1207
  %v1823 = vpack.c.bf16 %v1248, %v1208
  %v1824 = vpack.c.bf16 %v1249, %v1209
  %v1825 = vpack.c.bf16 %v1325, %v1286
  %v1826 = vpack.c.bf16 %v1326, %v1287
  %v1827 = vpack.c.bf16 %v1327, %v1288
  %v1828 = vpack.c.bf16 %v1328, %v1289
  %v1829 = vpack.c.bf16 %v1364, %v847
  %v1830 = vpack.c.bf16 %v1365, %v848
  %v1831 = vpack.c.bf16 %v1366, %v849
  %v1832 = vpack.c.bf16 %v1367, %v850
  %v1833 = vpack.c.bf16 %v1444, %v1404
  %v1834 = vpack.c.bf16 %v1445, %v1405
  %v1835 = vpack.c.bf16 %v1446, %v1406
  %v1836 = vpack.c.bf16 %v1447, %v1407
  %v1837 = vpack.c.bf16 %v1522, %v1483
  %v1838 = vpack.c.bf16 %v1523, %v1484
  %v1839 = vpack.c.bf16 %v1524, %v1485
  %v1840 = vpack.c.bf16 %v1525, %v1486
  %v1841 = vpack.c.bf16 %v1601, %v1561
  %v1842 = vpack.c.bf16 %v1602, %v1562
  %v1843 = vpack.c.bf16 %v1603, %v1563
  %v1844 = vpack.c.bf16 %v1604, %v1564
  %v1845 = vpack.c.bf16 %v1681, %v1641
  %v1846 = vpack.c.bf16 %v1682, %v1642
  %v1847 = vpack.c.bf16 %v1683, %v1643
  %v1848 = vpack.c.bf16 %v1684, %v1644
  %v1849 = vpack.c.bf16 %v1761, %v1721
  %v1850 = vpack.c.bf16 %v1762, %v1722
  %v1851 = vpack.c.bf16 %v1763, %v1723
  %v1852 = vpack.c.bf16 %v1764, %v1724
  %v1853 = vpack.c.bf16 %v1801, %v1801
  %v1854 = vpack.c.bf16 %v1802, %v1802
  %v1855 = vpack.c.bf16 %v1803, %v1803
  %v1856 = vpack.c.bf16 %v1804, %v1804
  %v1859 = vunpack.c.l.b16 %v851
  %v1860 = vunpack.c.h.b16 %v851
  %v1861 = vunpack.c.l.b16 %v852
  %v1862 = vunpack.c.h.b16 %v852
  %v1863 = vpack.c.b16 %v1861, %v1859
  %v1864 = vpack.c.b16 %v1862, %v1860
  %v1867 = vsel %vm492, %v1864, 0
  %v1870 = vsel %vm496, %v1853, 0
  %v1873 = vsel %vm496, %v1854, 0
  %v1876 = vsel %vm496, %v1855, 0
  %v1879 = vsel %vm496, %v1856, 0
  %1881 = vmatprep.subr.bf16.mxu0 %v1806
  %1882 = vmatpush1.bf16.msra.mxu0 %v1805
  %1883 = vmatprep.subr.bf16.mxu0 %v1810
  %1884 = vmatpush1.bf16.msra.mxu0 %v1809
  %1885 = vmatprep.subr.bf16.mxu0 %v1814
  %1886 = vmatpush1.bf16.msra.mxu0 %v1813
  %1887 = vmatprep.subr.bf16.mxu0 %v1818
  %1888 = vmatpush1.bf16.msra.mxu0 %v1817
  %1889 = vmatprep.subr.bf16.mxu0 %v1822
  %1890 = vmatpush1.bf16.msra.mxu0 %v1821
  %1891 = vmatprep.subr.bf16.mxu0 %v1826
  %1892 = vmatpush1.bf16.msra.mxu0 %v1825
  %1893 = vmatprep.subr.bf16.mxu0 %v1830
  %1894 = vmatpush1.bf16.msra.mxu0 %v1829
  %1895 = vmatprep.subr.bf16.mxu0 %v1834
  %1896 = vmatpush1.bf16.msra.mxu0 %v1833
  %1897 = vmatprep.subr.bf16.mxu0 %v1838
  %1898 = vmatpush1.bf16.msra.mxu0 %v1837
  %1899 = vmatprep.subr.bf16.mxu0 %v1842
  %1900 = vmatpush1.bf16.msra.mxu0 %v1841
  %1901 = vmatprep.subr.bf16.mxu0 %v1846
  %1902 = vmatpush1.bf16.msra.mxu0 %v1845
  %1903 = vmatprep.subr.bf16.mxu0 %v1850
  %1904 = vmatpush1.bf16.msra.mxu0 %v1849
  %1905 = vmatprep.subr.bf16.mxu0 %v1873
  %1906 = vmatpush1.bf16.msra.mxu0 %v1870
  %1907 = vmatprep.subr.bf16.mxu0 0
  %1908 = vmatpush1.bf16.msra.mxu0 0
  %1909 = vmatprep.subr.bf16.mxu0 0
  %1910 = vmatpush1.bf16.msra.mxu0 0
  %1911 = vmatprep.subr.bf16.mxu0 0
  %1912 = vmatpush1.bf16.msra.mxu0 0
  %1913 = vmatprep.mubr.bf16.mxu0 %v1867
  %1914 = vmatmul.mubr.bf16.gmra.mrb[0].mxu0 %v1863
  %v1915 = vpop.f32.mrb[0].mxu0
  %v1916 = vadd.f32 0.0, %v1915
  %v1917 = vpop.f32.mrb[0].mxu0
  %v1918 = vadd.f32 0.0, %v1917
  %v1919 = vpop.f32.mrb[0].mxu0
  %v1920 = vadd.f32 0.0, %v1919
  %v1921 = vpop.f32.mrb[0].mxu0
  %v1922 = vadd.f32 0.0, %v1921
  %1923 = vdwg.mxu0
  %1924 = vmatprep.subr.bf16.mxu0 %v1808
  %1925 = vmatpush1.bf16.msra.mxu0 %v1807
  %1926 = vmatprep.subr.bf16.mxu0 %v1812
  %1927 = vmatpush1.bf16.msra.mxu0 %v1811
  %1928 = vmatprep.subr.bf16.mxu0 %v1816
  %1929 = vmatpush1.bf16.msra.mxu0 %v1815
  %1930 = vmatprep.subr.bf16.mxu0 %v1820
  %1931 = vmatpush1.bf16.msra.mxu0 %v1819
  %1932 = vmatprep.subr.bf16.mxu0 %v1824
  %1933 = vmatpush1.bf16.msra.mxu0 %v1823
  %1934 = vmatprep.subr.bf16.mxu0 %v1828
  %1935 = vmatpush1.bf16.msra.mxu0 %v1827
  %1936 = vmatprep.subr.bf16.mxu0 %v1832
  %1937 = vmatpush1.bf16.msra.mxu0 %v1831
  %1938 = vmatprep.subr.bf16.mxu0 %v1836
  %1939 = vmatpush1.bf16.msra.mxu0 %v1835
  %1940 = vmatprep.subr.bf16.mxu0 %v1840
  %1941 = vmatpush1.bf16.msra.mxu0 %v1839
  %1942 = vmatprep.subr.bf16.mxu0 %v1844
  %1943 = vmatpush1.bf16.msra.mxu0 %v1843
  %1944 = vmatprep.subr.bf16.mxu0 %v1848
  %1945 = vmatpush1.bf16.msra.mxu0 %v1847
  %1946 = vmatprep.subr.bf16.mxu0 %v1852
  %1947 = vmatpush1.bf16.msra.mxu0 %v1851
  %1948 = vmatprep.subr.bf16.mxu0 %v1879
  %1949 = vmatpush1.bf16.msra.mxu0 %v1876
  %1950 = vmatprep.subr.bf16.mxu0 0
  %1951 = vmatpush1.bf16.msra.mxu0 0
  %1952 = vmatprep.subr.bf16.mxu0 0
  %1953 = vmatpush1.bf16.msra.mxu0 0
  %1954 = vmatprep.subr.bf16.mxu0 0
  %1955 = vmatpush1.bf16.msra.mxu0 0
  %1956 = vmatprep.mubr.bf16.mxu0 %v1867
  %1957 = vmatmul.mubr.bf16.gmra.mrb[0].mxu0 %v1863
  %v1958 = vpop.f32.mrb[0].mxu0
  %v1959 = vadd.f32 0.0, %v1958
  %v1960 = vpop.f32.mrb[0].mxu0
  %v1961 = vadd.f32 0.0, %v1960
  %v1962 = vpop.f32.mrb[0].mxu0
  %v1963 = vadd.f32 0.0, %v1962
  %v1964 = vpop.f32.mrb[0].mxu0
  %v1965 = vadd.f32 0.0, %v1964
  %1966 = vdwg.mxu0
  %v1967 = vpack.c.bf16 %v1920, %v1916
  %v1968 = vpack.c.bf16 %v1922, %v1918
  %v1969 = vpack.c.bf16 %v1963, %v1959
  %v1970 = vpack.c.bf16 %v1965, %v1961
  %v1971 = vld [vmem:[%s2 + $0x10] sm:$0xff]
  %v1972 = vld [vmem:[%s2 + $0x18] sm:$0xff]
  %1974 = vset.pattern.permute.xlu0 0
  %1975 = vperm.xlu0 %1974, %v1971
  %v1976 = vpop.permute.xlu0 %1975
  %1979 = vset.pattern.permute.xlu0 0
  %1980 = vperm.xlu0 %1979, %v1972
  %v1981 = vpop.permute.xlu0 %1980
  %v2047 = vunpack.c.l.b16 %v24
  %v2048 = vunpack.c.l.b16 %v25
  %v2049 = vunpack.c.l.b16 %v26
  %v2050 = vunpack.c.l.b16 %v27
  %v2051 = vunpack.c.l.b16 %v28
  %v2052 = vunpack.c.l.b16 %v29
  %v2053 = vunpack.c.l.b16 %v30
  %v2054 = vunpack.c.l.b16 %v31
  %v2055 = vunpack.c.l.b16 %v32
  %v2056 = vunpack.c.l.b16 %v33
  %v2057 = vunpack.c.l.b16 %v34
  %v2058 = vunpack.c.l.b16 %v35
  %v2059 = vunpack.c.l.b16 %v36
  %v2060 = vunpack.c.l.b16 %v37
  %v2061 = vunpack.c.l.b16 %v38
  %v2062 = vunpack.c.l.b16 %v39
  %v2063 = vunpack.c.l.b16 %v40
  %v2064 = vunpack.c.l.b16 %v41
  %v2065 = vunpack.c.l.b16 %v42
  %v2066 = vunpack.c.l.b16 %v43
  %v2067 = vunpack.c.l.b16 %v44
  %v2068 = vunpack.c.l.b16 %v45
  %v2069 = vunpack.c.l.b16 %v46
  %v2070 = vunpack.c.l.b16 %v47
  %v2071 = vunpack.c.l.b16 %v48
  %v2072 = vunpack.c.l.b16 %v49
  %v2073 = vunpack.c.l.b16 %v50
  %v2074 = vunpack.c.l.b16 %v51
  %v2075 = vunpack.c.l.b16 %v52
  %v2076 = vunpack.c.l.b16 %v53
  %v2077 = vunpack.c.l.b16 %v54
  %v2078 = vunpack.c.l.b16 %v55
  %v2079 = vunpack.c.l.b16 %v56
  %v2080 = vunpack.c.l.b16 %v57
  %v2081 = vunpack.c.l.b16 %v58
  %v2082 = vunpack.c.l.b16 %v59
  %v2083 = vunpack.c.l.b16 %v60
  %v2084 = vunpack.c.l.b16 %v61
  %v2085 = vunpack.c.l.b16 %v62
  %v2086 = vunpack.c.l.b16 %v63
  %v2087 = vunpack.c.l.b16 %v64
  %v2088 = vunpack.c.l.b16 %v65
  %v2089 = vunpack.c.l.b16 %v66
  %v2090 = vunpack.c.l.b16 %v67
  %v2091 = vunpack.c.l.b16 %v68
  %v2092 = vunpack.c.l.b16 %v69
  %v2093 = vunpack.c.l.b16 %v70
  %v2094 = vunpack.c.l.b16 %v71
  %v2095 = vunpack.c.l.b16 %v72
  %v2096 = vunpack.c.l.b16 %v73
  %v2097 = vunpack.c.l.b16 %v74
  %v2098 = vunpack.c.l.b16 %v75
  %v2099 = vunpack.c.l.b16 %v76
  %v2100 = vunpack.c.l.b16 %v77
  %v2101 = vunpack.c.l.b16 %v78
  %v2102 = vunpack.c.l.b16 %v79
  %v2103 = vunpack.c.l.b16 %v80
  %v2104 = vunpack.c.l.b16 %v81
  %v2105 = vunpack.c.l.b16 %v82
  %v2106 = vunpack.c.l.b16 %v83
  %v2107 = vunpack.c.l.b16 %v84
  %v2108 = vunpack.c.l.b16 %v85
  %v2109 = vunpack.c.l.b16 %v86
  %v2110 = vunpack.c.l.b16 %v87
  %v2111 = vpack.c.b16 %v2048, %v2047
  %v2112 = vpack.c.b16 %v2050, %v2049
  %v2113 = vpack.c.b16 %v2052, %v2051
  %v2114 = vpack.c.b16 %v2054, %v2053
  %v2115 = vpack.c.b16 %v2056, %v2055
  %v2116 = vpack.c.b16 %v2058, %v2057
  %v2117 = vpack.c.b16 %v2060, %v2059
  %v2118 = vpack.c.b16 %v2062, %v2061
  %v2119 = vpack.c.b16 %v2064, %v2063
  %v2120 = vpack.c.b16 %v2066, %v2065
  %v2121 = vpack.c.b16 %v2068, %v2067
  %v2122 = vpack.c.b16 %v2070, %v2069
  %v2123 = vpack.c.b16 %v2072, %v2071
  %v2124 = vpack.c.b16 %v2074, %v2073
  %v2125 = vpack.c.b16 %v2076, %v2075
  %v2126 = vpack.c.b16 %v2078, %v2077
  %v2127 = vpack.c.b16 %v2080, %v2079
  %v2128 = vpack.c.b16 %v2082, %v2081
  %v2129 = vpack.c.b16 %v2084, %v2083
  %v2130 = vpack.c.b16 %v2086, %v2085
  %v2131 = vpack.c.b16 %v2088, %v2087
  %v2132 = vpack.c.b16 %v2090, %v2089
  %v2133 = vpack.c.b16 %v2092, %v2091
  %v2134 = vpack.c.b16 %v2094, %v2093
  %v2135 = vpack.c.b16 %v2096, %v2095
  %v2136 = vpack.c.b16 %v2098, %v2097
  %v2137 = vpack.c.b16 %v2100, %v2099
  %v2138 = vpack.c.b16 %v2102, %v2101
  %v2139 = vpack.c.b16 %v2104, %v2103
  %v2140 = vpack.c.b16 %v2106, %v2105
  %v2141 = vpack.c.b16 %v2108, %v2107
  %v2142 = vpack.c.b16 %v2110, %v2109
  %2175 = vmatprep.subr.bf16.mxu0 0
  %2176 = vmatpush1.bf16.msra.mxu0 %v2111
  %2177 = vmatprep.subr.bf16.mxu0 0
  %2178 = vmatpush1.bf16.msra.mxu0 %v2112
  %2179 = vmatprep.subr.bf16.mxu0 0
  %2180 = vmatpush1.bf16.msra.mxu0 %v2113
  %2181 = vmatprep.subr.bf16.mxu0 0
  %2182 = vmatpush1.bf16.msra.mxu0 %v2114
  %2183 = vmatprep.subr.bf16.mxu0 0
  %2184 = vmatpush1.bf16.msra.mxu0 %v2115
  %2185 = vmatprep.subr.bf16.mxu0 0
  %2186 = vmatpush1.bf16.msra.mxu0 %v2116
  %2187 = vmatprep.subr.bf16.mxu0 0
  %2188 = vmatpush1.bf16.msra.mxu0 %v2117
  %2189 = vmatprep.subr.bf16.mxu0 0
  %2190 = vmatpush1.bf16.msra.mxu0 %v2118
  %2191 = vmatprep.subr.bf16.mxu0 0
  %2192 = vmatpush1.bf16.msra.mxu0 %v2119
  %2193 = vmatprep.subr.bf16.mxu0 0
  %2194 = vmatpush1.bf16.msra.mxu0 %v2120
  %2195 = vmatprep.subr.bf16.mxu0 0
  %2196 = vmatpush1.bf16.msra.mxu0 %v2121
  %2197 = vmatprep.subr.bf16.mxu0 0
  %2198 = vmatpush1.bf16.msra.mxu0 %v2122
  %2199 = vmatprep.subr.bf16.mxu0 0
  %2200 = vmatpush1.bf16.msra.mxu0 %v2123
  %2201 = vmatprep.subr.bf16.mxu0 0
  %2202 = vmatpush1.bf16.msra.mxu0 %v2124
  %2203 = vmatprep.subr.bf16.mxu0 0
  %2204 = vmatpush1.bf16.msra.mxu0 %v2125
  %2205 = vmatprep.subr.bf16.mxu0 0
  %2206 = vmatpush1.bf16.msra.mxu0 %v2126
  %2207 = vmatprep.mubr.bf16.mxu0 %v1968
  %2208 = vmatmul.mubr.bf16.gmra.mrb[0].mxu0 %v1967
  %v2209 = vpop.f32.mrb[0].mxu0
  %v2210 = vadd.f32 %v1976, %v2209
  %v2211 = vpop.f32.mrb[0].mxu0
  %v2212 = vpop.f32.mrb[0].mxu0
  %v2213 = vadd.f32 %v1981, %v2212
  %v2214 = vpop.f32.mrb[0].mxu0
  %2215 = vdwg.mxu0
  %2216 = vmatprep.subr.bf16.mxu0 0
  %2217 = vmatpush1.bf16.msra.mxu0 %v2127
  %2218 = vmatprep.subr.bf16.mxu0 0
  %2219 = vmatpush1.bf16.msra.mxu0 %v2128
  %2220 = vmatprep.subr.bf16.mxu0 0
  %2221 = vmatpush1.bf16.msra.mxu0 %v2129
  %2222 = vmatprep.subr.bf16.mxu0 0
  %2223 = vmatpush1.bf16.msra.mxu0 %v2130
  %2224 = vmatprep.subr.bf16.mxu0 0
  %2225 = vmatpush1.bf16.msra.mxu0 %v2131
  %2226 = vmatprep.subr.bf16.mxu0 0
  %2227 = vmatpush1.bf16.msra.mxu0 %v2132
  %2228 = vmatprep.subr.bf16.mxu0 0
  %2229 = vmatpush1.bf16.msra.mxu0 %v2133
  %2230 = vmatprep.subr.bf16.mxu0 0
  %2231 = vmatpush1.bf16.msra.mxu0 %v2134
  %2232 = vmatprep.subr.bf16.mxu0 0
  %2233 = vmatpush1.bf16.msra.mxu0 %v2135
  %2234 = vmatprep.subr.bf16.mxu0 0
  %2235 = vmatpush1.bf16.msra.mxu0 %v2136
  %2236 = vmatprep.subr.bf16.mxu0 0
  %2237 = vmatpush1.bf16.msra.mxu0 %v2137
  %2238 = vmatprep.subr.bf16.mxu0 0
  %2239 = vmatpush1.bf16.msra.mxu0 %v2138
  %2240 = vmatprep.subr.bf16.mxu0 0
  %2241 = vmatpush1.bf16.msra.mxu0 %v2139
  %2242 = vmatprep.subr.bf16.mxu0 0
  %2243 = vmatpush1.bf16.msra.mxu0 %v2140
  %2244 = vmatprep.subr.bf16.mxu0 0
  %2245 = vmatpush1.bf16.msra.mxu0 %v2141
  %2246 = vmatprep.subr.bf16.mxu0 0
  %2247 = vmatpush1.bf16.msra.mxu0 %v2142
  %2248 = vmatprep.mubr.bf16.mxu0 %v1970
  %2249 = vmatmul.mubr.bf16.gmra.mrb[0].mxu0 %v1969
  %v2250 = vpop.f32.mrb[0].mxu0
  %v2251 = vadd.f32 %v2210, %v2250
  %v2252 = vpop.f32.mrb[0].mxu0
  %v2253 = vpop.f32.mrb[0].mxu0
  %v2254 = vadd.f32 %v2213, %v2253
  %v2255 = vpop.f32.mrb[0].mxu0
  %2256 = vdwg.mxu0
  %v2257 = vmax.f32 %v2251, 0.0
  %v2258 = vmax.f32 %v2254, 0.0
  %v2259 = vld [vmem:[%s1 + $0x40] sm:$0xff]
  %v2260 = vld [vmem:[%s1 + $0x50] sm:$0xff]
  %2261 = vrot.lane.b32.xlu0 %v2257, 9
  %v2262 = vpop.permute.xlu0 %2261
  %2263 = vrot.lane.b32.xlu0 %v2258, 9
  %v2264 = vpop.permute.xlu0 %2263
  %v2265 = vld [vmem:[%s5 + $0x82] ss:$0 sm:$0xff]
  %v2266 = vmul.f32 %v2262, %v2265
  %v2267 = vmul.f32 %v2264, %v2265
  %2268 = vrot.lane.b32.xlu0 %v2257, 8
  %v2269 = vpop.permute.xlu0 %2268
  %2270 = vrot.lane.b32.xlu0 %v2258, 8
  %v2271 = vpop.permute.xlu0 %2270
  %v2272 = vld [vmem:[%s5 + $0x83] ss:$0 sm:$0xff]
  %v2273 = vmul.f32 %v2269, %v2272
  %v2274 = vmul.f32 %v2271, %v2272
  %2275 = vrot.lane.b32.xlu0 %v2257, 7
  %v2276 = vpop.permute.xlu0 %2275
  %2277 = vrot.lane.b32.xlu0 %v2258, 7
  %v2278 = vpop.permute.xlu0 %2277
  %v2279 = vld [vmem:[%s5 + $0x84] ss:$0 sm:$0xff]
  %v2280 = vmul.f32 %v2276, %v2279
  %v2281 = vmul.f32 %v2278, %v2279
  %2282 = vrot.lane.b32.xlu0 %v2257, 1
  %v2283 = vpop.permute.xlu0 %2282
  %2284 = vrot.lane.b32.xlu0 %v2258, 1
  %v2285 = vpop.permute.xlu0 %2284
  %v2286 = vld [vmem:[%s5 + $0x85] ss:$0 sm:$0xff]
  %v2287 = vmul.f32 %v2283, %v2286
  %v2288 = vmul.f32 %v2285, %v2286
  %2289 = vrot.lane.b32.xlu0 %v2257, 127
  %v2290 = vpop.permute.xlu0 %2289
  %2291 = vrot.lane.b32.xlu0 %v2258, 127
  %v2292 = vpop.permute.xlu0 %2291
  %v2293 = vld [vmem:[%s5 + $0x87] ss:$0 sm:$0xff]
  %v2294 = vmul.f32 %v2290, %v2293
  %v2295 = vmul.f32 %v2292, %v2293
  %2296 = vrot.lane.b32.xlu0 %v2257, 121
  %v2297 = vpop.permute.xlu0 %2296
  %2298 = vrot.lane.b32.xlu0 %v2258, 121
  %v2299 = vpop.permute.xlu0 %2298
  %v2300 = vld [vmem:[%s5 + $0xa0] ss:$0 sm:$0xff]
  %v2301 = vmul.f32 %v2297, %v2300
  %v2302 = vmul.f32 %v2299, %v2300
  %2303 = vrot.lane.b32.xlu0 %v2257, 120
  %v2304 = vpop.permute.xlu0 %2303
  %2305 = vrot.lane.b32.xlu0 %v2258, 120
  %v2306 = vpop.permute.xlu0 %2305
  %v2307 = vld [vmem:[%s5 + $0xa1] ss:$0 sm:$0xff]
  %v2308 = vmul.f32 %v2304, %v2307
  %v2309 = vmul.f32 %v2306, %v2307
  %2310 = vrot.lane.b32.xlu0 %v2257, 119
  %v2311 = vpop.permute.xlu0 %2310
  %2312 = vrot.lane.b32.xlu0 %v2258, 119
  %v2313 = vpop.permute.xlu0 %2312
  %v2314 = vld [vmem:[%s5 + $0xa2] ss:$0 sm:$0xff]
  %v2315 = vmul.f32 %v2311, %v2314
  %v2316 = vmul.f32 %v2313, %v2314
  %v2317 = vpack.c.bf16 %v2267, %v2266
  %v2318 = vpack.c.bf16 %v2274, %v2273
  %v2319 = vpack.c.bf16 %v2281, %v2280
  %v2320 = vpack.c.bf16 %v2288, %v2287
  %v2321 = vpack.c.bf16 %v2258, %v2257
  %v2322 = vpack.c.bf16 %v2295, %v2294
  %v2323 = vpack.c.bf16 %v2302, %v2301
  %v2324 = vpack.c.bf16 %v2309, %v2308
  %v2325 = vpack.c.bf16 %v2316, %v2315
  %v2326 = vld [vmem:[%s2 + $0x20] sm:$0xff]
  %v2327 = vld [vmem:[%s2 + $0x28] sm:$0xff]
  %2329 = vset.pattern.permute.xlu0 0
  %2330 = vperm.xlu0 %2329, %v2326
  %v2331 = vpop.permute.xlu0 %2330
  %2334 = vset.pattern.permute.xlu0 0
  %2335 = vperm.xlu0 %2334, %v2327
  %v2336 = vpop.permute.xlu0 %2335
  %v2340 = vunpack.c.l.b16 %v2259
  %v2341 = vunpack.c.h.b16 %v2259
  %v2342 = vunpack.c.l.b16 %v2260
  %v2343 = vunpack.c.h.b16 %v2260
  %v2344 = vpack.c.b16 %v2342, %v2340
  %v2345 = vpack.c.b16 %v2343, %v2341
  %vm2347 = vcmask 130048
  %v2349 = vsel %vm2347, %v2345, 0
  %2351 = vmatprep.subr.bf16.mxu0 0
  %2352 = vmatpush1.bf16.msra.mxu0 %v2317
  %2353 = vmatprep.subr.bf16.mxu0 0
  %2354 = vmatpush1.bf16.msra.mxu0 %v2318
  %2355 = vmatprep.subr.bf16.mxu0 0
  %2356 = vmatpush1.bf16.msra.mxu0 %v2319
  %2357 = vmatprep.subr.bf16.mxu0 0
  %2358 = vmatpush1.bf16.msra.mxu0 %v2320
  %2359 = vmatprep.subr.bf16.mxu0 0
  %2360 = vmatpush1.bf16.msra.mxu0 %v2321
  %2361 = vmatprep.subr.bf16.mxu0 0
  %2362 = vmatpush1.bf16.msra.mxu0 %v2322
  %2363 = vmatprep.subr.bf16.mxu0 0
  %2364 = vmatpush1.bf16.msra.mxu0 %v2323
  %2365 = vmatprep.subr.bf16.mxu0 0
  %2366 = vmatpush1.bf16.msra.mxu0 %v2324
  %2367 = vmatprep.subr.bf16.mxu0 0
  %2368 = vmatpush1.bf16.msra.mxu0 %v2325
  %2369 = vmatprep.subr.bf16.mxu0 0
  %2370 = vmatpush1.bf16.msra.mxu0 0
  %2371 = vmatprep.subr.bf16.mxu0 0
  %2372 = vmatpush1.bf16.msra.mxu0 0
  %2373 = vmatprep.subr.bf16.mxu0 0
  %2374 = vmatpush1.bf16.msra.mxu0 0
  %2375 = vmatprep.subr.bf16.mxu0 0
  %2376 = vmatpush1.bf16.msra.mxu0 0
  %2377 = vmatprep.subr.bf16.mxu0 0
  %2378 = vmatpush1.bf16.msra.mxu0 0
  %2379 = vmatprep.subr.bf16.mxu0 0
  %2380 = vmatpush1.bf16.msra.mxu0 0
  %2381 = vmatprep.subr.bf16.mxu0 0
  %2382 = vmatpush1.bf16.msra.mxu0 0
  %2383 = vmatprep.mubr.bf16.mxu0 %v2349
  %2384 = vmatmul.mubr.bf16.gmra.mrb[0].mxu0 %v2344
  %v2385 = vpop.f32.mrb[0].mxu0
  %v2386 = vadd.f32 %v2331, %v2385
  %v2387 = vpop.f32.mrb[0].mxu0
  %v2388 = vpop.f32.mrb[0].mxu0
  %v2389 = vadd.f32 %v2336, %v2388
  %v2390 = vpop.f32.mrb[0].mxu0
  %2391 = vdwg.mxu0
  %v2392 = vmax.f32 %v2386, 0.0
  %v2393 = vmax.f32 %v2389, 0.0
  %v2394 = vld [vmem:[%s1 + $0x60] sm:$0xff]
  %v2395 = vld [vmem:[%s1 + $0x68] sm:$0xff]
  %v2396 = vld [vmem:[%s1 + $0x70] sm:$0xff]
  %v2397 = vld [vmem:[%s1 + $0x78] sm:$0xff]
  %v2398 = vld [vmem:[%s1 + $0x80] sm:$0xff]
  %v2399 = vld [vmem:[%s1 + $0x88] sm:$0xff]
  %v2400 = vld [vmem:[%s1 + $0x90] sm:$0xff]
  %v2401 = vld [vmem:[%s1 + $0x98] sm:$0xff]
  %2402 = vrot.lane.b32.xlu0 %v2392, 18
  %v2403 = vpop.permute.xlu0 %2402
  %2404 = vrot.lane.b32.xlu0 %v2393, 18
  %v2405 = vpop.permute.xlu0 %2404
  %v2406 = vld [vmem:[%s5 + $0xa3] ss:$0 sm:$0xff]
  %v2407 = vmul.f32 %v2403, %v2406
  %v2408 = vmul.f32 %v2405, %v2406
  %2409 = vrot.lane.b32.xlu0 %v2392, 17
  %v2410 = vpop.permute.xlu0 %2409
  %2411 = vrot.lane.b32.xlu0 %v2393, 17
  %v2412 = vpop.permute.xlu0 %2411
  %v2413 = vld [vmem:[%s5 + $0xa4] ss:$0 sm:$0xff]
  %v2414 = vmul.f32 %v2410, %v2413
  %v2415 = vmul.f32 %v2412, %v2413
  %2416 = vrot.lane.b32.xlu0 %v2392, 16
  %v2417 = vpop.permute.xlu0 %2416
  %2418 = vrot.lane.b32.xlu0 %v2393, 16
  %v2419 = vpop.permute.xlu0 %2418
  %v2420 = vld [vmem:[%s5 + $0xa5] ss:$0 sm:$0xff]
  %v2421 = vmul.f32 %v2417, %v2420
  %v2422 = vmul.f32 %v2419, %v2420
  %2423 = vrot.lane.b32.xlu0 %v2392, 15
  %v2424 = vpop.permute.xlu0 %2423
  %2425 = vrot.lane.b32.xlu0 %v2393, 15
  %v2426 = vpop.permute.xlu0 %2425
  %v2427 = vld [vmem:[%s5 + $0xa6] ss:$0 sm:$0xff]
  %v2428 = vmul.f32 %v2424, %v2427
  %v2429 = vmul.f32 %v2426, %v2427
  %2430 = vrot.lane.b32.xlu0 %v2392, 14
  %v2431 = vpop.permute.xlu0 %2430
  %2432 = vrot.lane.b32.xlu0 %v2393, 14
  %v2433 = vpop.permute.xlu0 %2432
  %v2434 = vld [vmem:[%s5 + $0xa7] ss:$0 sm:$0xff]
  %v2435 = vmul.f32 %v2431, %v2434
  %v2436 = vmul.f32 %v2433, %v2434
  %2437 = vrot.lane.b32.xlu0 %v2392, 10
  %v2438 = vpop.permute.xlu0 %2437
  %2439 = vrot.lane.b32.xlu0 %v2393, 10
  %v2440 = vpop.permute.xlu0 %2439
  %v2441 = vld [vmem:[%s5 + $0xc0] ss:$0 sm:$0xff]
  %v2442 = vmul.f32 %v2438, %v2441
  %v2443 = vmul.f32 %v2440, %v2441
  %2444 = vrot.lane.b32.xlu0 %v2392, 9
  %v2445 = vpop.permute.xlu0 %2444
  %2446 = vrot.lane.b32.xlu0 %v2393, 9
  %v2447 = vpop.permute.xlu0 %2446
  %v2448 = vld [vmem:[%s5 + $0xc1] ss:$0 sm:$0xff]
  %v2449 = vmul.f32 %v2445, %v2448
  %v2450 = vmul.f32 %v2447, %v2448
  %2451 = vrot.lane.b32.xlu0 %v2392, 8
  %v2452 = vpop.permute.xlu0 %2451
  %2453 = vrot.lane.b32.xlu0 %v2393, 8
  %v2454 = vpop.permute.xlu0 %2453
  %v2455 = vld [vmem:[%s5 + $0xc2] ss:$0 sm:$0xff]
  %v2456 = vmul.f32 %v2452, %v2455
  %v2457 = vmul.f32 %v2454, %v2455
  %2458 = vrot.lane.b32.xlu0 %v2392, 7
  %v2459 = vpop.permute.xlu0 %2458
  %2460 = vrot.lane.b32.xlu0 %v2393, 7
  %v2461 = vpop.permute.xlu0 %2460
  %v2462 = vld [vmem:[%s5 + $0xc3] ss:$0 sm:$0xff]
  %v2463 = vmul.f32 %v2459, %v2462
  %v2464 = vmul.f32 %v2461, %v2462
  %2465 = vrot.lane.b32.xlu0 %v2392, 6
  %v2466 = vpop.permute.xlu0 %2465
  %2467 = vrot.lane.b32.xlu0 %v2393, 6
  %v2468 = vpop.permute.xlu0 %2467
  %v2469 = vld [vmem:[%s5 + $0xc4] ss:$0 sm:$0xff]
  %v2470 = vmul.f32 %v2466, %v2469
  %v2471 = vmul.f32 %v2468, %v2469
  %2472 = vrot.lane.b32.xlu0 %v2392, 2
  %v2473 = vpop.permute.xlu0 %2472
  %2474 = vrot.lane.b32.xlu0 %v2393, 2
  %v2475 = vpop.permute.xlu0 %2474
  %v2476 = vld [vmem:[%s5 + $0xc5] ss:$0 sm:$0xff]
  %v2477 = vmul.f32 %v2473, %v2476
  %v2478 = vmul.f32 %v2475, %v2476
  %2479 = vrot.lane.b32.xlu0 %v2392, 1
  %v2480 = vpop.permute.xlu0 %2479
  %2481 = vrot.lane.b32.xlu0 %v2393, 1
  %v2482 = vpop.permute.xlu0 %2481
  %v2483 = vld [vmem:[%s5 + $0xc6] ss:$0 sm:$0xff]
  %v2484 = vmul.f32 %v2480, %v2483
  %v2485 = vmul.f32 %v2482, %v2483
  %2486 = vrot.lane.b32.xlu0 %v2392, 127
  %v2487 = vpop.permute.xlu0 %2486
  %2488 = vrot.lane.b32.xlu0 %v2393, 127
  %v2489 = vpop.permute.xlu0 %2488
  %v2490 = vld [vmem:[%s5 + $0xe0] ss:$0 sm:$0xff]
  %v2491 = vmul.f32 %v2487, %v2490
  %v2492 = vmul.f32 %v2489, %v2490
  %2493 = vrot.lane.b32.xlu0 %v2392, 126
  %v2494 = vpop.permute.xlu0 %2493
  %2495 = vrot.lane.b32.xlu0 %v2393, 126
  %v2496 = vpop.permute.xlu0 %2495
  %v2497 = vld [vmem:[%s5 + $0xe1] ss:$0 sm:$0xff]
  %v2498 = vmul.f32 %v2494, %v2497
  %v2499 = vmul.f32 %v2496, %v2497
  %2500 = vrot.lane.b32.xlu0 %v2392, 122
  %v2501 = vpop.permute.xlu0 %2500
  %2502 = vrot.lane.b32.xlu0 %v2393, 122
  %v2503 = vpop.permute.xlu0 %2502
  %v2504 = vld [vmem:[%s5 + $0xe2] ss:$0 sm:$0xff]
  %v2505 = vmul.f32 %v2501, %v2504
  %v2506 = vmul.f32 %v2503, %v2504
  %2507 = vrot.lane.b32.xlu0 %v2392, 121
  %v2508 = vpop.permute.xlu0 %2507
  %2509 = vrot.lane.b32.xlu0 %v2393, 121
  %v2510 = vpop.permute.xlu0 %2509
  %v2511 = vld [vmem:[%s5 + $0xe3] ss:$0 sm:$0xff]
  %v2512 = vmul.f32 %v2508, %v2511
  %v2513 = vmul.f32 %v2510, %v2511
  %2514 = vrot.lane.b32.xlu0 %v2392, 120
  %v2515 = vpop.permute.xlu0 %2514
  %2516 = vrot.lane.b32.xlu0 %v2393, 120
  %v2517 = vpop.permute.xlu0 %2516
  %v2518 = vld [vmem:[%s5 + $0xe4] ss:$0 sm:$0xff]
  %v2519 = vmul.f32 %v2515, %v2518
  %v2520 = vmul.f32 %v2517, %v2518
  %2521 = vrot.lane.b32.xlu0 %v2392, 119
  %v2522 = vpop.permute.xlu0 %2521
  %2523 = vrot.lane.b32.xlu0 %v2393, 119
  %v2524 = vpop.permute.xlu0 %2523
  %v2525 = vld [vmem:[%s5 + $0xe5] ss:$0 sm:$0xff]
  %v2526 = vmul.f32 %v2522, %v2525
  %v2527 = vmul.f32 %v2524, %v2525
  %2528 = vrot.lane.b32.xlu0 %v2392, 118
  %v2529 = vpop.permute.xlu0 %2528
  %2530 = vrot.lane.b32.xlu0 %v2393, 118
  %v2531 = vpop.permute.xlu0 %2530
  %v2532 = vld [vmem:[%s5 + $0xe6] ss:$0 sm:$0xff]
  %v2533 = vmul.f32 %v2529, %v2532
  %v2534 = vmul.f32 %v2531, %v2532
  %2535 = vrot.lane.b32.xlu0 %v2392, 114
  %v2536 = vpop.permute.xlu0 %2535
  %2537 = vrot.lane.b32.xlu0 %v2393, 114
  %v2538 = vpop.permute.xlu0 %2537
  %v2539 = vld [vmem:[%s5 + $0xe7] ss:$0 sm:$0xff]
  %v2540 = vmul.f32 %v2536, %v2539
  %v2541 = vmul.f32 %v2538, %v2539
  %2542 = vrot.lane.b32.xlu0 %v2392, 113
  %v2543 = vpop.permute.xlu0 %2542
  %2544 = vrot.lane.b32.xlu0 %v2393, 113
  %v2545 = vpop.permute.xlu0 %2544
  %v2546 = vld [vmem:[%s5 + $0x100] ss:$0 sm:$0xff]
  %v2547 = vmul.f32 %v2543, %v2546
  %v2548 = vmul.f32 %v2545, %v2546
  %2549 = vrot.lane.b32.xlu0 %v2392, 112
  %v2550 = vpop.permute.xlu0 %2549
  %2551 = vrot.lane.b32.xlu0 %v2393, 112
  %v2552 = vpop.permute.xlu0 %2551
  %v2553 = vld [vmem:[%s5 + $0x101] ss:$0 sm:$0xff]
  %v2554 = vmul.f32 %v2550, %v2553
  %v2555 = vmul.f32 %v2552, %v2553
  %2556 = vrot.lane.b32.xlu0 %v2392, 111
  %v2557 = vpop.permute.xlu0 %2556
  %2558 = vrot.lane.b32.xlu0 %v2393, 111
  %v2559 = vpop.permute.xlu0 %2558
  %v2560 = vld [vmem:[%s5 + $0x102] ss:$0 sm:$0xff]
  %v2561 = vmul.f32 %v2557, %v2560
  %v2562 = vmul.f32 %v2559, %v2560
  %2563 = vrot.lane.b32.xlu0 %v2392, 110
  %v2564 = vpop.permute.xlu0 %2563
  %2565 = vrot.lane.b32.xlu0 %v2393, 110
  %v2566 = vpop.permute.xlu0 %2565
  %v2567 = vld [vmem:[%s5 + $0x103] ss:$0 sm:$0xff]
  %v2568 = vmul.f32 %v2564, %v2567
  %v2569 = vmul.f32 %v2566, %v2567
  %v2570 = vpack.c.bf16 %v2408, %v2407
  %v2571 = vpack.c.bf16 %v2415, %v2414
  %v2572 = vpack.c.bf16 %v2422, %v2421
  %v2573 = vpack.c.bf16 %v2429, %v2428
  %v2574 = vpack.c.bf16 %v2436, %v2435
  %v2575 = vpack.c.bf16 %v2443, %v2442
  %v2576 = vpack.c.bf16 %v2450, %v2449
  %v2577 = vpack.c.bf16 %v2457, %v2456
  %v2578 = vpack.c.bf16 %v2464, %v2463
  %v2579 = vpack.c.bf16 %v2471, %v2470
  %v2580 = vpack.c.bf16 %v2478, %v2477
  %v2581 = vpack.c.bf16 %v2485, %v2484
  %v2582 = vpack.c.bf16 %v2393, %v2392
  %v2583 = vpack.c.bf16 %v2492, %v2491
  %v2584 = vpack.c.bf16 %v2499, %v2498
  %v2585 = vpack.c.bf16 %v2506, %v2505
  %v2586 = vpack.c.bf16 %v2513, %v2512
  %v2587 = vpack.c.bf16 %v2520, %v2519
  %v2588 = vpack.c.bf16 %v2527, %v2526
  %v2589 = vpack.c.bf16 %v2534, %v2533
  %v2590 = vpack.c.bf16 %v2541, %v2540
  %v2591 = vpack.c.bf16 %v2548, %v2547
  %v2592 = vpack.c.bf16 %v2555, %v2554
  %v2593 = vpack.c.bf16 %v2562, %v2561
  %v2594 = vpack.c.bf16 %v2569, %v2568
  %v2603 = vunpack.c.l.b16 %v2394
  %v2604 = vunpack.c.h.b16 %v2394
  %v2605 = vunpack.c.l.b16 %v2395
  %v2606 = vunpack.c.h.b16 %v2395
  %v2607 = vunpack.c.l.b16 %v2396
  %v2608 = vunpack.c.h.b16 %v2396
  %v2609 = vunpack.c.l.b16 %v2397
  %v2610 = vunpack.c.h.b16 %v2397
  %v2611 = vunpack.c.l.b16 %v2398
  %v2612 = vunpack.c.h.b16 %v2398
  %v2613 = vunpack.c.l.b16 %v2399
  %v2614 = vunpack.c.h.b16 %v2399
  %v2615 = vunpack.c.l.b16 %v2400
  %v2616 = vunpack.c.h.b16 %v2400
  %v2617 = vunpack.c.l.b16 %v2401
  %v2618 = vunpack.c.h.b16 %v2401
  %v2619 = vpack.c.b16 %v2607, %v2603
  %v2620 = vpack.c.b16 %v2608, %v2604
  %v2621 = vpack.c.b16 %v2609, %v2605
  %v2622 = vpack.c.b16 %v2610, %v2606
  %v2623 = vpack.c.b16 %v2615, %v2611
  %v2624 = vpack.c.b16 %v2616, %v2612
  %v2625 = vpack.c.b16 %v2617, %v2613
  %v2626 = vpack.c.b16 %v2618, %v2614
  %v2634 = vsel %vm2347, %v2622, 0
  %v2637 = vsel %vm2347, %v2626, 0
  %2639 = vmatprep.subr.bf16.mxu0 0
  %2640 = vmatpush1.bf16.msra.mxu0 %v2570
  %2641 = vmatprep.subr.bf16.mxu0 0
  %2642 = vmatpush1.bf16.msra.mxu0 %v2571
  %2643 = vmatprep.subr.bf16.mxu0 0
  %2644 = vmatpush1.bf16.msra.mxu0 %v2572
  %2645 = vmatprep.subr.bf16.mxu0 0
  %2646 = vmatpush1.bf16.msra.mxu0 %v2573
  %2647 = vmatprep.subr.bf16.mxu0 0
  %2648 = vmatpush1.bf16.msra.mxu0 %v2574
  %2649 = vmatprep.subr.bf16.mxu0 0
  %2650 = vmatpush1.bf16.msra.mxu0 %v2575
  %2651 = vmatprep.subr.bf16.mxu0 0
  %2652 = vmatpush1.bf16.msra.mxu0 %v2576
  %2653 = vmatprep.subr.bf16.mxu0 0
  %2654 = vmatpush1.bf16.msra.mxu0 %v2577
  %2655 = vmatprep.subr.bf16.mxu0 0
  %2656 = vmatpush1.bf16.msra.mxu0 %v2578
  %2657 = vmatprep.subr.bf16.mxu0 0
  %2658 = vmatpush1.bf16.msra.mxu0 %v2579
  %2659 = vmatprep.subr.bf16.mxu0 0
  %2660 = vmatpush1.bf16.msra.mxu0 %v2580
  %2661 = vmatprep.subr.bf16.mxu0 0
  %2662 = vmatpush1.bf16.msra.mxu0 %v2581
  %2663 = vmatprep.subr.bf16.mxu0 0
  %2664 = vmatpush1.bf16.msra.mxu0 %v2582
  %2665 = vmatprep.subr.bf16.mxu0 0
  %2666 = vmatpush1.bf16.msra.mxu0 %v2583
  %2667 = vmatprep.subr.bf16.mxu0 0
  %2668 = vmatpush1.bf16.msra.mxu0 %v2584
  %2669 = vmatprep.subr.bf16.mxu0 0
  %2670 = vmatpush1.bf16.msra.mxu0 %v2585
  %2671 = vmatprep.mubr.bf16.mxu0 %v2620
  %2672 = vmatmul.mubr.bf16.gmra.mrb[0].mxu0 %v2619
  %v2673 = vpop.f32.mrb[0].mxu0
  %v2674 = vadd.f32 0.0, %v2673
  %v2675 = vpop.f32.mrb[0].mxu0
  %v2676 = vpop.f32.mrb[0].mxu0
  %v2677 = vadd.f32 0.0, %v2676
  %v2678 = vpop.f32.mrb[0].mxu0
  %2679 = vmatprep.mubr.bf16.mxu0 %v2624
  %2680 = vmatmul.mubr.bf16.gmra.mrb[0].mxu0 %v2623
  %v2681 = vpop.f32.mrb[0].mxu0
  %v2682 = vadd.f32 0.0, %v2681
  %v2683 = vpop.f32.mrb[0].mxu0
  %v2684 = vpop.f32.mrb[0].mxu0
  %v2685 = vadd.f32 0.0, %v2684
  %v2686 = vpop.f32.mrb[0].mxu0
  %2687 = vdwg.mxu0
  %2688 = vmatprep.subr.bf16.mxu0 0
  %2689 = vmatpush1.bf16.msra.mxu0 %v2586
  %2690 = vmatprep.subr.bf16.mxu0 0
  %2691 = vmatpush1.bf16.msra.mxu0 %v2587
  %2692 = vmatprep.subr.bf16.mxu0 0
  %2693 = vmatpush1.bf16.msra.mxu0 %v2588
  %2694 = vmatprep.subr.bf16.mxu0 0
  %2695 = vmatpush1.bf16.msra.mxu0 %v2589
  %2696 = vmatprep.subr.bf16.mxu0 0
  %2697 = vmatpush1.bf16.msra.mxu0 %v2590
  %2698 = vmatprep.subr.bf16.mxu0 0
  %2699 = vmatpush1.bf16.msra.mxu0 %v2591
  %2700 = vmatprep.subr.bf16.mxu0 0
  %2701 = vmatpush1.bf16.msra.mxu0 %v2592
  %2702 = vmatprep.subr.bf16.mxu0 0
  %2703 = vmatpush1.bf16.msra.mxu0 %v2593
  %2704 = vmatprep.subr.bf16.mxu0 0
  %2705 = vmatpush1.bf16.msra.mxu0 %v2594
  %2706 = vmatprep.subr.bf16.mxu0 0
  %2707 = vmatpush1.bf16.msra.mxu0 0
  %2708 = vmatprep.subr.bf16.mxu0 0
  %2709 = vmatpush1.bf16.msra.mxu0 0
  %2710 = vmatprep.subr.bf16.mxu0 0
  %2711 = vmatpush1.bf16.msra.mxu0 0
  %2712 = vmatprep.subr.bf16.mxu0 0
  %2713 = vmatpush1.bf16.msra.mxu0 0
  %2714 = vmatprep.subr.bf16.mxu0 0
  %2715 = vmatpush1.bf16.msra.mxu0 0
  %2716 = vmatprep.subr.bf16.mxu0 0
  %2717 = vmatpush1.bf16.msra.mxu0 0
  %2718 = vmatprep.subr.bf16.mxu0 0
  %2719 = vmatpush1.bf16.msra.mxu0 0
  %2720 = vmatprep.mubr.bf16.mxu0 %v2634
  %2721 = vmatmul.mubr.bf16.gmra.mrb[0].mxu0 %v2621
  %v2722 = vpop.f32.mrb[0].mxu0
  %v2723 = vadd.f32 %v2674, %v2722
  %v2724 = vpop.f32.mrb[0].mxu0
  %v2725 = vpop.f32.mrb[0].mxu0
  %v2726 = vadd.f32 %v2677, %v2725
  %v2727 = vpop.f32.mrb[0].mxu0
  %2728 = vmatprep.mubr.bf16.mxu0 %v2637
  %2729 = vmatmul.mubr.bf16.gmra.mrb[0].mxu0 %v2625
  %v2730 = vpop.f32.mrb[0].mxu0
  %v2731 = vadd.f32 %v2682, %v2730
  %v2732 = vpop.f32.mrb[0].mxu0
  %v2733 = vpop.f32.mrb[0].mxu0
  %v2734 = vadd.f32 %v2685, %v2733
  %v2735 = vpop.f32.mrb[0].mxu0
  %2736 = vdwg.mxu0
  %v2737 = vpack.c.bf16 %v2726, %v2723
  %v2738 = vpack.c.bf16 %v2734, %v2731
  %v2739 = vld [vmem:[%s2 + $0x30] sm:$0xff]
  %v2740 = vld [vmem:[%s2 + $0x38] sm:$0xff]
  %v2741 = vld [vmem:[%s2 + $0x40] sm:$0xff]
  %v2742 = vld [vmem:[%s2 + $0x48] sm:$0xff]
  %2744 = vset.pattern.permute.xlu0 0
  %2745 = vperm.xlu0 %2744, %v2739
  %v2746 = vpop.permute.xlu0 %2745
  %2749 = vset.pattern.permute.xlu0 0
  %2750 = vperm.xlu0 %2749, %v2740
  %v2751 = vpop.permute.xlu0 %2750
  %2754 = vset.pattern.permute.xlu0 0
  %2755 = vperm.xlu0 %2754, %v2741
  %v2756 = vpop.permute.xlu0 %2755
  %2759 = vset.pattern.permute.xlu0 0
  %2760 = vperm.xlu0 %2759, %v2742
  %v2761 = vpop.permute.xlu0 %2760
  %v2779 = vunpack.c.l.b16 %v124
  %v2780 = vunpack.c.l.b16 %v125
  %v2781 = vunpack.c.l.b16 %v126
  %v2782 = vunpack.c.l.b16 %v127
  %v2783 = vunpack.c.l.b16 %v128
  %v2784 = vunpack.c.l.b16 %v129
  %v2785 = vunpack.c.l.b16 %v130
  %v2786 = vunpack.c.l.b16 %v131
  %v2787 = vunpack.c.l.b16 %v132
  %v2788 = vunpack.c.l.b16 %v133
  %v2789 = vunpack.c.l.b16 %v134
  %v2790 = vunpack.c.l.b16 %v135
  %v2791 = vunpack.c.l.b16 %v136
  %v2792 = vunpack.c.l.b16 %v137
  %v2793 = vunpack.c.l.b16 %v138
  %v2794 = vunpack.c.l.b16 %v139
  %v2795 = vpack.c.b16 %v2780, %v2779
  %v2796 = vpack.c.b16 %v2782, %v2781
  %v2797 = vpack.c.b16 %v2784, %v2783
  %v2798 = vpack.c.b16 %v2786, %v2785
  %v2799 = vpack.c.b16 %v2788, %v2787
  %v2800 = vpack.c.b16 %v2790, %v2789
  %v2801 = vpack.c.b16 %v2792, %v2791
  %v2802 = vpack.c.b16 %v2794, %v2793
  %2811 = vmatprep.subr.bf16.mxu0 0
  %2812 = vmatpush1.bf16.msra.mxu0 %v2795
  %2813 = vmatprep.subr.bf16.mxu0 0
  %2814 = vmatpush1.bf16.msra.mxu0 %v2796
  %2815 = vmatprep.subr.bf16.mxu0 0
  %2816 = vmatpush1.bf16.msra.mxu0 %v2797
  %2817 = vmatprep.subr.bf16.mxu0 0
  %2818 = vmatpush1.bf16.msra.mxu0 %v2798
  %2819 = vmatprep.subr.bf16.mxu0 0
  %2820 = vmatpush1.bf16.msra.mxu0 %v2799
  %2821 = vmatprep.subr.bf16.mxu0 0
  %2822 = vmatpush1.bf16.msra.mxu0 %v2800
  %2823 = vmatprep.subr.bf16.mxu0 0
  %2824 = vmatpush1.bf16.msra.mxu0 %v2801
  %2825 = vmatprep.subr.bf16.mxu0 0
  %2826 = vmatpush1.bf16.msra.mxu0 %v2802
  %2827 = vmatprep.subr.bf16.mxu0 0
  %2828 = vmatpush1.bf16.msra.mxu0 0
  %2829 = vmatprep.subr.bf16.mxu0 0
  %2830 = vmatpush1.bf16.msra.mxu0 0
  %2831 = vmatprep.subr.bf16.mxu0 0
  %2832 = vmatpush1.bf16.msra.mxu0 0
  %2833 = vmatprep.subr.bf16.mxu0 0
  %2834 = vmatpush1.bf16.msra.mxu0 0
  %2835 = vmatprep.subr.bf16.mxu0 0
  %2836 = vmatpush1.bf16.msra.mxu0 0
  %2837 = vmatprep.subr.bf16.mxu0 0
  %2838 = vmatpush1.bf16.msra.mxu0 0
  %2839 = vmatprep.subr.bf16.mxu0 0
  %2840 = vmatpush1.bf16.msra.mxu0 0
  %2841 = vmatprep.subr.bf16.mxu0 0
  %2842 = vmatpush1.bf16.msra.mxu0 0
  %2843 = vmatprep.mubr.bf16.mxu0 0
  %2844 = vmatmul.mubr.bf16.gmra.mrb[0].mxu0 %v2737
  %v2845 = vpop.f32.mrb[0].mxu0
  %v2846 = vadd.f32 %v2746, %v2845
  %v2847 = vpop.f32.mrb[0].mxu0
  %v2848 = vpop.f32.mrb[0].mxu0
  %v2849 = vadd.f32 %v2751, %v2848
  %v2850 = vpop.f32.mrb[0].mxu0
  %2851 = vmatprep.mubr.bf16.mxu0 0
  %2852 = vmatmul.mubr.bf16.gmra.mrb[0].mxu0 %v2738
  %v2853 = vpop.f32.mrb[0].mxu0
  %v2854 = vadd.f32 %v2756, %v2853
  %v2855 = vpop.f32.mrb[0].mxu0
  %v2856 = vpop.f32.mrb[0].mxu0
  %v2857 = vadd.f32 %v2761, %v2856
  %v2858 = vpop.f32.mrb[0].mxu0
  %2859 = vdwg.mxu0
  %v2860 = vmax.f32 %v2846, 0.0
  %v2861 = vmax.f32 %v2849, 0.0
  %v2862 = vmax.f32 %v2854, 0.0
  %v2863 = vmax.f32 %v2857, 0.0
  %v2864 = vld [vmem:[%s1 + $0xa0] sm:$0xff]
  %v2865 = vld [vmem:[%s1 + $0xa8] sm:$0xf]
  %v2866 = vld [vmem:[%s1 + $0xb0] sm:$0xff]
  %v2867 = vld [vmem:[%s1 + $0xb8] sm:$0xf]
  %v2868 = vld [vmem:[%s1 + $0xc0] sm:$0xff]
  %v2869 = vld [vmem:[%s1 + $0xc8] sm:$0xf]
  %v2870 = vld [vmem:[%s1 + $0xd0] sm:$0xff]
  %v2871 = vld [vmem:[%s1 + $0xd8] sm:$0xf]
  %vm2872 = vcmask 1047808
  %2873 = vrot.lane.b32.xlu0 %v2860, 32
  %v2874 = vpop.permute.xlu0 %2873
  %v2875 = vsel %vm2872, %v2874, %v2860
  %2876 = vrot.lane.b32.xlu0 %v2861, 32
  %v2877 = vpop.permute.xlu0 %2876
  %v2878 = vsel %vm2872, %v2877, %v2861
  %2879 = vrot.lane.b32.xlu0 %v2862, 32
  %v2880 = vpop.permute.xlu0 %2879
  %v2881 = vsel %vm2872, %v2880, %v2862
  %2882 = vrot.lane.b32.xlu0 %v2863, 32
  %v2883 = vpop.permute.xlu0 %2882
  %v2884 = vsel %vm2872, %v2883, %v2863
  %2885 = vrot.lane.b32.xlu0 %v2875, 32
  %v2886 = vpop.permute.xlu0 %2885
  %2887 = vrot.lane.b32.xlu0 %v2878, 32
  %v2888 = vpop.permute.xlu0 %2887
  %2889 = vrot.lane.b32.xlu0 %v2881, 32
  %v2890 = vpop.permute.xlu0 %2889
  %2891 = vrot.lane.b32.xlu0 %v2884, 32
  %v2892 = vpop.permute.xlu0 %2891
  %v2893 = vsel %vm2872, %v2886, %v2860
  %v2894 = vsel %vm2872, %v2888, %v2861
  %v2895 = vsel %vm2872, %v2890, %v2862
  %v2896 = vsel %vm2872, %v2892, %v2863
  %v2897 = vld [vmem:[%s5 + $0x104] ss:$0 sm:$0xff]
  %2899 = vrot.lane.b32.xlu0 %v2897, 27
  %v2900 = vpop.permute.xlu0 %2899
  %v2902 = vmul.f32 %v2893, %v2900
  %v2903 = vmul.f32 %v2894, %v2900
  %v2904 = vmul.f32 %v2895, %v2900
  %v2905 = vmul.f32 %v2896, %v2900
  %v2906 = vld [vmem:[%s5 + $0x105] ss:$0 sm:$0xff]
  %2908 = vrot.lane.b32.xlu0 %v2906, 28
  %v2909 = vpop.permute.xlu0 %2908
  %v2911 = vmul.f32 %v2893, %v2909
  %v2912 = vmul.f32 %v2894, %v2909
  %v2913 = vmul.f32 %v2895, %v2909
  %v2914 = vmul.f32 %v2896, %v2909
  %v2915 = vld [vmem:[%s5 + $0x106] ss:$0 sm:$0xff]
  %2917 = vrot.lane.b32.xlu0 %v2915, 29
  %v2918 = vpop.permute.xlu0 %2917
  %v2920 = vmul.f32 %v2893, %v2918
  %v2921 = vmul.f32 %v2894, %v2918
  %v2922 = vmul.f32 %v2895, %v2918
  %v2923 = vmul.f32 %v2896, %v2918
  %v2924 = vld [vmem:[%s5 + $0x107] ss:$0 sm:$0xff]
  %2926 = vrot.lane.b32.xlu0 %v2924, 31
  %v2927 = vpop.permute.xlu0 %2926
  %v2929 = vmul.f32 %v2893, %v2927
  %v2930 = vmul.f32 %v2894, %v2927
  %v2931 = vmul.f32 %v2895, %v2927
  %v2932 = vmul.f32 %v2896, %v2927
  %v2933 = vld [vmem:[%s5 + $0x121] ss:$0 sm:$0xff]
  %2935 = vrot.lane.b32.xlu0 %v2933, 1
  %v2936 = vpop.permute.xlu0 %2935
  %v2938 = vmul.f32 %v2893, %v2936
  %v2939 = vmul.f32 %v2894, %v2936
  %v2940 = vmul.f32 %v2895, %v2936
  %v2941 = vmul.f32 %v2896, %v2936
  %v2942 = vld [vmem:[%s5 + $0x122] ss:$0 sm:$0xff]
  %2944 = vrot.lane.b32.xlu0 %v2942, 3
  %v2945 = vpop.permute.xlu0 %2944
  %v2947 = vmul.f32 %v2893, %v2945
  %v2948 = vmul.f32 %v2894, %v2945
  %v2949 = vmul.f32 %v2895, %v2945
  %v2950 = vmul.f32 %v2896, %v2945
  %v2951 = vld [vmem:[%s5 + $0x123] ss:$0 sm:$0xff]
  %2953 = vrot.lane.b32.xlu0 %v2951, 4
  %v2954 = vpop.permute.xlu0 %2953
  %v2956 = vmul.f32 %v2893, %v2954
  %v2957 = vmul.f32 %v2894, %v2954
  %v2958 = vmul.f32 %v2895, %v2954
  %v2959 = vmul.f32 %v2896, %v2954
  %v2960 = vld [vmem:[%s5 + $0x124] ss:$0 sm:$0xff]
  %2962 = vrot.lane.b32.xlu0 %v2960, 5
  %v2963 = vpop.permute.xlu0 %2962
  %v2965 = vmul.f32 %v2893, %v2963
  %v2966 = vmul.f32 %v2894, %v2963
  %v2967 = vmul.f32 %v2895, %v2963
  %v2968 = vmul.f32 %v2896, %v2963
  %2973 = vrot.lane.b32.xlu0 %v2911, 127
  %v2974 = vpop.permute.xlu0 %2973
  %2975 = vrot.lane.b32.xlu0 %v2912, 127
  %v2976 = vpop.permute.xlu0 %2975
  %2977 = vrot.lane.b32.xlu0 %v2913, 127
  %v2978 = vpop.permute.xlu0 %2977
  %2979 = vrot.lane.b32.xlu0 %v2914, 127
  %v2980 = vpop.permute.xlu0 %2979
  %2989 = vrot.lane.b32.xlu0 %v2920, 126
  %v2990 = vpop.permute.xlu0 %2989
  %2991 = vrot.lane.b32.xlu0 %v2921, 126
  %v2992 = vpop.permute.xlu0 %2991
  %2993 = vrot.lane.b32.xlu0 %v2922, 126
  %v2994 = vpop.permute.xlu0 %2993
  %2995 = vrot.lane.b32.xlu0 %v2923, 126
  %v2996 = vpop.permute.xlu0 %2995
  %3005 = vrot.lane.b32.xlu0 %v2929, 124
  %v3006 = vpop.permute.xlu0 %3005
  %3007 = vrot.lane.b32.xlu0 %v2930, 124
  %v3008 = vpop.permute.xlu0 %3007
  %3009 = vrot.lane.b32.xlu0 %v2931, 124
  %v3010 = vpop.permute.xlu0 %3009
  %3011 = vrot.lane.b32.xlu0 %v2932, 124
  %v3012 = vpop.permute.xlu0 %3011
  %3021 = vrot.lane.b32.xlu0 %v2860, 27
  %v3022 = vpop.permute.xlu0 %3021
  %3023 = vrot.lane.b32.xlu0 %v2861, 27
  %v3024 = vpop.permute.xlu0 %3023
  %3025 = vrot.lane.b32.xlu0 %v2862, 27
  %v3026 = vpop.permute.xlu0 %3025
  %3027 = vrot.lane.b32.xlu0 %v2863, 27
  %v3028 = vpop.permute.xlu0 %3027
  %3037 = vrot.lane.b32.xlu0 %v2938, 26
  %v3038 = vpop.permute.xlu0 %3037
  %3039 = vrot.lane.b32.xlu0 %v2939, 26
  %v3040 = vpop.permute.xlu0 %3039
  %3041 = vrot.lane.b32.xlu0 %v2940, 26
  %v3042 = vpop.permute.xlu0 %3041
  %3043 = vrot.lane.b32.xlu0 %v2941, 26
  %v3044 = vpop.permute.xlu0 %3043
  %3053 = vrot.lane.b32.xlu0 %v2947, 24
  %v3054 = vpop.permute.xlu0 %3053
  %3055 = vrot.lane.b32.xlu0 %v2948, 24
  %v3056 = vpop.permute.xlu0 %3055
  %3057 = vrot.lane.b32.xlu0 %v2949, 24
  %v3058 = vpop.permute.xlu0 %3057
  %3059 = vrot.lane.b32.xlu0 %v2950, 24
  %v3060 = vpop.permute.xlu0 %3059
  %3069 = vrot.lane.b32.xlu0 %v2956, 23
  %v3070 = vpop.permute.xlu0 %3069
  %3071 = vrot.lane.b32.xlu0 %v2957, 23
  %v3072 = vpop.permute.xlu0 %3071
  %3073 = vrot.lane.b32.xlu0 %v2958, 23
  %v3074 = vpop.permute.xlu0 %3073
  %3075 = vrot.lane.b32.xlu0 %v2959, 23
  %v3076 = vpop.permute.xlu0 %3075
  %3085 = vrot.lane.b32.xlu0 %v2965, 22
  %v3086 = vpop.permute.xlu0 %3085
  %3087 = vrot.lane.b32.xlu0 %v2966, 22
  %v3088 = vpop.permute.xlu0 %3087
  %3089 = vrot.lane.b32.xlu0 %v2967, 22
  %v3090 = vpop.permute.xlu0 %3089
  %3091 = vrot.lane.b32.xlu0 %v2968, 22
  %v3092 = vpop.permute.xlu0 %3091
  %v3097 = vpack.c.bf16 %v2903, %v2902
  %v3098 = vpack.c.bf16 %v2905, %v2904
  %v3099 = vpack.c.bf16 %v2976, %v2974
  %v3100 = vpack.c.bf16 %v2980, %v2978
  %v3101 = vpack.c.bf16 %v2992, %v2990
  %v3102 = vpack.c.bf16 %v2996, %v2994
  %v3103 = vpack.c.bf16 %v3008, %v3006
  %v3104 = vpack.c.bf16 %v3012, %v3010
  %v3105 = vpack.c.bf16 %v3024, %v3022
  %v3106 = vpack.c.bf16 %v3028, %v3026
  %v3107 = vpack.c.bf16 %v3040, %v3038
  %v3108 = vpack.c.bf16 %v3044, %v3042
  %v3109 = vpack.c.bf16 %v3056, %v3054
  %v3110 = vpack.c.bf16 %v3060, %v3058
  %v3111 = vpack.c.bf16 %v3072, %v3070
  %v3112 = vpack.c.bf16 %v3076, %v3074
  %v3113 = vpack.c.bf16 %v3088, %v3086
  %v3114 = vpack.c.bf16 %v3092, %v3090
  %v3115 = vld [vmem:[%s2 + $0x50] sm:$0xff]
  %v3116 = vld [vmem:[%s2 + $0x58] sm:$0xff]
  %v3117 = vld [vmem:[%s2 + $0x60] sm:$0xff]
  %v3118 = vld [vmem:[%s2 + $0x68] sm:$0xff]
  %3120 = vset.pattern.permute.xlu0 0
  %3121 = vperm.xlu0 %3120, %v3115
  %v3122 = vpop.permute.xlu0 %3121
  %3125 = vset.pattern.permute.xlu0 0
  %3126 = vperm.xlu0 %3125, %v3116
  %v3127 = vpop.permute.xlu0 %3126
  %3130 = vset.pattern.permute.xlu0 0
  %3131 = vperm.xlu0 %3130, %v3117
  %v3132 = vpop.permute.xlu0 %3131
  %3135 = vset.pattern.permute.xlu0 0
  %3136 = vperm.xlu0 %3135, %v3118
  %v3137 = vpop.permute.xlu0 %3136
  %v3147 = vunpack.c.l.b16 %v2864
  %v3148 = vunpack.c.h.b16 %v2864
  %v3149 = vunpack.c.l.b16 %v2865
  %v3150 = vunpack.c.l.b16 %v2866
  %v3151 = vunpack.c.h.b16 %v2866
  %v3152 = vunpack.c.l.b16 %v2867
  %v3153 = vunpack.c.l.b16 %v2868
  %v3154 = vunpack.c.h.b16 %v2868
  %v3155 = vunpack.c.l.b16 %v2869
  %v3156 = vunpack.c.l.b16 %v2870
  %v3157 = vunpack.c.h.b16 %v2870
  %v3158 = vunpack.c.l.b16 %v2871
  %v3159 = vpack.c.b16 %v3150, %v3147
  %v3160 = vpack.c.b16 %v3151, %v3148
  %v3161 = vpack.c.b16 %v3152, %v3149
  %v3162 = vpack.c.b16 %v3156, %v3153
  %v3163 = vpack.c.b16 %v3157, %v3154
  %v3164 = vpack.c.b16 %v3158, %v3155
  %3187 = vrot.lane.b32.xlu0 %v3097, 101
  %v3188 = vpop.permute.xlu0 %3187
  %3189 = vrot.lane.b32.xlu0 %v3098, 101
  %v3190 = vpop.permute.xlu0 %3189
  %3191 = vrot.lane.b32.xlu0 %v3099, 101
  %v3192 = vpop.permute.xlu0 %3191
  %3193 = vrot.lane.b32.xlu0 %v3100, 101
  %v3194 = vpop.permute.xlu0 %3193
  %3195 = vrot.lane.b32.xlu0 %v3101, 101
  %v3196 = vpop.permute.xlu0 %3195
  %3197 = vrot.lane.b32.xlu0 %v3102, 101
  %v3198 = vpop.permute.xlu0 %3197
  %3199 = vrot.lane.b32.xlu0 %v3103, 101
  %v3200 = vpop.permute.xlu0 %3199
  %3201 = vrot.lane.b32.xlu0 %v3104, 101
  %v3202 = vpop.permute.xlu0 %3201
  %3203 = vrot.lane.b32.xlu0 %v3105, 101
  %v3204 = vpop.permute.xlu0 %3203
  %3205 = vrot.lane.b32.xlu0 %v3106, 101
  %v3206 = vpop.permute.xlu0 %3205
  %3207 = vrot.lane.b32.xlu0 %v3107, 101
  %v3208 = vpop.permute.xlu0 %3207
  %3209 = vrot.lane.b32.xlu0 %v3108, 101
  %v3210 = vpop.permute.xlu0 %3209
  %3211 = vrot.lane.b32.xlu0 %v3109, 101
  %v3212 = vpop.permute.xlu0 %3211
  %3213 = vrot.lane.b32.xlu0 %v3110, 101
  %v3214 = vpop.permute.xlu0 %3213
  %3215 = vrot.lane.b32.xlu0 %v3111, 101
  %v3216 = vpop.permute.xlu0 %3215
  %3217 = vrot.lane.b32.xlu0 %v3112, 101
  %v3218 = vpop.permute.xlu0 %3217
  %3219 = vrot.lane.b32.xlu0 %v3113, 101
  %v3220 = vpop.permute.xlu0 %3219
  %3221 = vrot.lane.b32.xlu0 %v3114, 101
  %v3222 = vpop.permute.xlu0 %3221
  %vm3241 = vcmask 261120
  %v3243 = vsel %vm3241, %v3161, 0
  %v3246 = vsel %vm3241, %v3164, 0
  %3248 = vmatprep.subr.bf16.mxu0 0
  %3249 = vmatpush1.bf16.msra.mxu0 %v3188
  %3250 = vmatprep.subr.bf16.mxu0 0
  %3251 = vmatpush1.bf16.msra.mxu0 %v3190
  %3252 = vmatprep.subr.bf16.mxu0 0
  %3253 = vmatpush1.bf16.msra.mxu0 %v3192
  %3254 = vmatprep.subr.bf16.mxu0 0
  %3255 = vmatpush1.bf16.msra.mxu0 %v3194
  %3256 = vmatprep.subr.bf16.mxu0 0
  %3257 = vmatpush1.bf16.msra.mxu0 %v3196
  %3258 = vmatprep.subr.bf16.mxu0 0
  %3259 = vmatpush1.bf16.msra.mxu0 %v3198
  %3260 = vmatprep.subr.bf16.mxu0 0
  %3261 = vmatpush1.bf16.msra.mxu0 %v3200
  %3262 = vmatprep.subr.bf16.mxu0 0
  %3263 = vmatpush1.bf16.msra.mxu0 %v3202
  %3264 = vmatprep.subr.bf16.mxu0 0
  %3265 = vmatpush1.bf16.msra.mxu0 %v3204
  %3266 = vmatprep.subr.bf16.mxu0 0
  %3267 = vmatpush1.bf16.msra.mxu0 %v3206
  %3268 = vmatprep.subr.bf16.mxu0 0
  %3269 = vmatpush1.bf16.msra.mxu0 %v3208
  %3270 = vmatprep.subr.bf16.mxu0 0
  %3271 = vmatpush1.bf16.msra.mxu0 %v3210
  %3272 = vmatprep.subr.bf16.mxu0 0
  %3273 = vmatpush1.bf16.msra.mxu0 %v3212
  %3274 = vmatprep.subr.bf16.mxu0 0
  %3275 = vmatpush1.bf16.msra.mxu0 %v3214
  %3276 = vmatprep.subr.bf16.mxu0 0
  %3277 = vmatpush1.bf16.msra.mxu0 %v3216
  %3278 = vmatprep.subr.bf16.mxu0 0
  %3279 = vmatpush1.bf16.msra.mxu0 %v3218
  %3280 = vmatprep.mubr.bf16.mxu0 %v3160
  %3281 = vmatmul.mubr.bf16.gmra.mrb[0].mxu0 %v3159
  %v3282 = vpop.f32.mrb[0].mxu0
  %v3283 = vadd.f32 %v3122, %v3282
  %v3284 = vpop.f32.mrb[0].mxu0
  %v3285 = vpop.f32.mrb[0].mxu0
  %v3286 = vadd.f32 %v3127, %v3285
  %v3287 = vpop.f32.mrb[0].mxu0
  %3288 = vmatprep.mubr.bf16.mxu0 %v3163
  %3289 = vmatmul.mubr.bf16.gmra.mrb[0].mxu0 %v3162
  %v3290 = vpop.f32.mrb[0].mxu0
  %v3291 = vadd.f32 %v3132, %v3290
  %v3292 = vpop.f32.mrb[0].mxu0
  %v3293 = vpop.f32.mrb[0].mxu0
  %v3294 = vadd.f32 %v3137, %v3293
  %v3295 = vpop.f32.mrb[0].mxu0
  %3296 = vdwg.mxu0
  %3297 = vmatprep.subr.bf16.mxu0 0
  %3298 = vmatpush1.bf16.msra.mxu0 %v3220
  %3299 = vmatprep.subr.bf16.mxu0 0
  %3300 = vmatpush1.bf16.msra.mxu0 %v3222
  %3301 = vmatprep.subr.bf16.mxu0 0
  %3302 = vmatpush1.bf16.msra.mxu0 0
  %3303 = vmatprep.subr.bf16.mxu0 0
  %3304 = vmatpush1.bf16.msra.mxu0 0
  %3305 = vmatprep.subr.bf16.mxu0 0
  %3306 = vmatpush1.bf16.msra.mxu0 0
  %3307 = vmatprep.subr.bf16.mxu0 0
  %3308 = vmatpush1.bf16.msra.mxu0 0
  %3309 = vmatprep.subr.bf16.mxu0 0
  %3310 = vmatpush1.bf16.msra.mxu0 0
  %3311 = vmatprep.subr.bf16.mxu0 0
  %3312 = vmatpush1.bf16.msra.mxu0 0
  %3313 = vmatprep.subr.bf16.mxu0 0
  %3314 = vmatpush1.bf16.msra.mxu0 0
  %3315 = vmatprep.subr.bf16.mxu0 0
  %3316 = vmatpush1.bf16.msra.mxu0 0
  %3317 = vmatprep.subr.bf16.mxu0 0
  %3318 = vmatpush1.bf16.msra.mxu0 0
  %3319 = vmatprep.subr.bf16.mxu0 0
  %3320 = vmatpush1.bf16.msra.mxu0 0
  %3321 = vmatprep.subr.bf16.mxu0 0
  %3322 = vmatpush1.bf16.msra.mxu0 0
  %3323 = vmatprep.subr.bf16.mxu0 0
  %3324 = vmatpush1.bf16.msra.mxu0 0
  %3325 = vmatprep.subr.bf16.mxu0 0
  %3326 = vmatpush1.bf16.msra.mxu0 0
  %3327 = vmatprep.subr.bf16.mxu0 0
  %3328 = vmatpush1.bf16.msra.mxu0 0
  %3329 = vmatprep.mubr.bf16.mxu0 0
  %3330 = vmatmul.mubr.bf16.gmra.mrb[0].mxu0 %v3243
  %v3331 = vpop.f32.mrb[0].mxu0
  %v3332 = vadd.f32 %v3283, %v3331
  %v3333 = vpop.f32.mrb[0].mxu0
  %v3334 = vpop.f32.mrb[0].mxu0
  %v3335 = vadd.f32 %v3286, %v3334
  %v3336 = vpop.f32.mrb[0].mxu0
  %3337 = vmatprep.mubr.bf16.mxu0 0
  %3338 = vmatmul.mubr.bf16.gmra.mrb[0].mxu0 %v3246
  %v3339 = vpop.f32.mrb[0].mxu0
  %v3340 = vadd.f32 %v3291, %v3339
  %v3341 = vpop.f32.mrb[0].mxu0
  %v3342 = vpop.f32.mrb[0].mxu0
  %v3343 = vadd.f32 %v3294, %v3342
  %v3344 = vpop.f32.mrb[0].mxu0
  %3345 = vdwg.mxu0
  %v3346 = vmax.f32 %v3332, 0.0
  %v3347 = vmax.f32 %v3335, 0.0
  %v3348 = vmax.f32 %v3340, 0.0
  %v3349 = vmax.f32 %v3343, 0.0
  %v3350 = vld [vmem:[%s1 + $0xe0] sm:$0xf]
  %v3351 = vld [vmem:[%s1 + $0xf0] sm:$0xf]
  %v3352 = vld [vmem:[%s1 + $0x100] sm:$0xf]
  %v3353 = vld [vmem:[%s1 + $0x110] sm:$0xf]
  %v3354 = vpack.c.bf16 %v3347, %v3346
  %v3355 = vpack.c.bf16 %v3349, %v3348
  %v3356 = vld [vmem:[%s2 + $0x70] sm:$0xff]
  %v3357 = vld [vmem:[%s2 + $0x78] sm:$0xff]
  %v3358 = vld [vmem:[%s2 + $0x80] sm:$0xff]
  %v3359 = vld [vmem:[%s2 + $0x88] sm:$0xff]
  %3361 = vset.pattern.permute.xlu0 0
  %3362 = vperm.xlu0 %3361, %v3356
  %v3363 = vpop.permute.xlu0 %3362
  %3366 = vset.pattern.permute.xlu0 0
  %3367 = vperm.xlu0 %3366, %v3357
  %v3368 = vpop.permute.xlu0 %3367
  %3371 = vset.pattern.permute.xlu0 0
  %3372 = vperm.xlu0 %3371, %v3358
  %v3373 = vpop.permute.xlu0 %3372
  %3376 = vset.pattern.permute.xlu0 0
  %3377 = vperm.xlu0 %3376, %v3359
  %v3378 = vpop.permute.xlu0 %3377
  %v3384 = vunpack.c.l.b16 %v3350
  %v3385 = vunpack.c.l.b16 %v3351
  %v3386 = vunpack.c.l.b16 %v3352
  %v3387 = vunpack.c.l.b16 %v3353
  %v3388 = vpack.c.b16 %v3385, %v3384
  %v3389 = vpack.c.b16 %v3387, %v3386
  %v3391 = vsel %vm3241, %v3388, 0
  %v3394 = vsel %vm3241, %v3389, 0
  %3396 = vmatprep.subr.bf16.mxu0 0
  %3397 = vmatpush1.bf16.msra.mxu0 %v3354
  %3398 = vmatprep.subr.bf16.mxu0 0
  %3399 = vmatpush1.bf16.msra.mxu0 %v3355
  %3400 = vmatprep.subr.bf16.mxu0 0
  %3401 = vmatpush1.bf16.msra.mxu0 0
  %3402 = vmatprep.subr.bf16.mxu0 0
  %3403 = vmatpush1.bf16.msra.mxu0 0
  %3404 = vmatprep.subr.bf16.mxu0 0
  %3405 = vmatpush1.bf16.msra.mxu0 0
  %3406 = vmatprep.subr.bf16.mxu0 0
  %3407 = vmatpush1.bf16.msra.mxu0 0
  %3408 = vmatprep.subr.bf16.mxu0 0
  %3409 = vmatpush1.bf16.msra.mxu0 0
  %3410 = vmatprep.subr.bf16.mxu0 0
  %3411 = vmatpush1.bf16.msra.mxu0 0
  %3412 = vmatprep.subr.bf16.mxu0 0
  %3413 = vmatpush1.bf16.msra.mxu0 0
  %3414 = vmatprep.subr.bf16.mxu0 0
  %3415 = vmatpush1.bf16.msra.mxu0 0
  %3416 = vmatprep.subr.bf16.mxu0 0
  %3417 = vmatpush1.bf16.msra.mxu0 0
  %3418 = vmatprep.subr.bf16.mxu0 0
  %3419 = vmatpush1.bf16.msra.mxu0 0
  %3420 = vmatprep.subr.bf16.mxu0 0
  %3421 = vmatpush1.bf16.msra.mxu0 0
  %3422 = vmatprep.subr.bf16.mxu0 0
  %3423 = vmatpush1.bf16.msra.mxu0 0
  %3424 = vmatprep.subr.bf16.mxu0 0
  %3425 = vmatpush1.bf16.msra.mxu0 0
  %3426 = vmatprep.subr.bf16.mxu0 0
  %3427 = vmatpush1.bf16.msra.mxu0 0
  %3428 = vmatprep.mubr.bf16.mxu0 0
  %3429 = vmatmul.mubr.bf16.gmra.mrb[0].mxu0 %v3391
  %v3430 = vpop.f32.mrb[0].mxu0
  %v3431 = vadd.f32 %v3363, %v3430
  %v3432 = vpop.f32.mrb[0].mxu0
  %v3433 = vpop.f32.mrb[0].mxu0
  %v3434 = vadd.f32 %v3368, %v3433
  %v3435 = vpop.f32.mrb[0].mxu0
  %3436 = vmatprep.mubr.bf16.mxu0 0
  %3437 = vmatmul.mubr.bf16.gmra.mrb[0].mxu0 %v3394
  %v3438 = vpop.f32.mrb[0].mxu0
  %v3439 = vadd.f32 %v3373, %v3438
  %v3440 = vpop.f32.mrb[0].mxu0
  %v3441 = vpop.f32.mrb[0].mxu0
  %v3442 = vadd.f32 %v3378, %v3441
  %v3443 = vpop.f32.mrb[0].mxu0
  %3444 = vdwg.mxu0
  %v3445 = vpack.c.bf16 %v3434, %v3431
  %v3446 = vpack.c.bf16 %v3442, %v3439
  %v3447 = vld [vmem:[%s1 + $0x120] sm:$0xf]
  %v3448 = vld [vmem:[%s1 + $0x130] sm:$0xf]
  %v3449 = vld [vmem:[%s1 + $0x140] sm:$0xf]
  %v3450 = vld [vmem:[%s1 + $0x150] sm:$0xf]
  %v3451 = vld [vmem:[%s2 + $0x90] sm:$0xff]
  %v3452 = vld [vmem:[%s2 + $0x98] sm:$0xff]
  %v3453 = vld [vmem:[%s2 + $0xa0] sm:$0xff]
  %v3454 = vld [vmem:[%s2 + $0xa8] sm:$0xff]
  %3456 = vset.pattern.permute.xlu0 0
  %3457 = vperm.xlu0 %3456, %v3451
  %v3458 = vpop.permute.xlu0 %3457
  %3461 = vset.pattern.permute.xlu0 0
  %3462 = vperm.xlu0 %3461, %v3452
  %v3463 = vpop.permute.xlu0 %3462
  %3466 = vset.pattern.permute.xlu0 0
  %3467 = vperm.xlu0 %3466, %v3453
  %v3468 = vpop.permute.xlu0 %3467
  %3471 = vset.pattern.permute.xlu0 0
  %3472 = vperm.xlu0 %3471, %v3454
  %v3473 = vpop.permute.xlu0 %3472
  %v3479 = vunpack.c.l.b16 %v3447
  %v3480 = vunpack.c.l.b16 %v3448
  %v3481 = vunpack.c.l.b16 %v3449
  %v3482 = vunpack.c.l.b16 %v3450
  %v3483 = vpack.c.b16 %v3480, %v3479
  %v3484 = vpack.c.b16 %v3482, %v3481
  %v3486 = vsel %vm2347, %v3483, 0
  %v3489 = vsel %vm2347, %v3484, 0
  %3491 = vmatprep.subr.bf16.mxu0 0
  %3492 = vmatpush1.bf16.msra.mxu0 %v2582
  %3493 = vmatprep.subr.bf16.mxu0 0
  %3494 = vmatpush1.bf16.msra.mxu0 0
  %3495 = vmatprep.subr.bf16.mxu0 0
  %3496 = vmatpush1.bf16.msra.mxu0 0
  %3497 = vmatprep.subr.bf16.mxu0 0
  %3498 = vmatpush1.bf16.msra.mxu0 0
  %3499 = vmatprep.subr.bf16.mxu0 0
  %3500 = vmatpush1.bf16.msra.mxu0 0
  %3501 = vmatprep.subr.bf16.mxu0 0
  %3502 = vmatpush1.bf16.msra.mxu0 0
  %3503 = vmatprep.subr.bf16.mxu0 0
  %3504 = vmatpush1.bf16.msra.mxu0 0
  %3505 = vmatprep.subr.bf16.mxu0 0
  %3506 = vmatpush1.bf16.msra.mxu0 0
  %3507 = vmatprep.subr.bf16.mxu0 0
  %3508 = vmatpush1.bf16.msra.mxu0 0
  %3509 = vmatprep.subr.bf16.mxu0 0
  %3510 = vmatpush1.bf16.msra.mxu0 0
  %3511 = vmatprep.subr.bf16.mxu0 0
  %3512 = vmatpush1.bf16.msra.mxu0 0
  %3513 = vmatprep.subr.bf16.mxu0 0
  %3514 = vmatpush1.bf16.msra.mxu0 0
  %3515 = vmatprep.subr.bf16.mxu0 0
  %3516 = vmatpush1.bf16.msra.mxu0 0
  %3517 = vmatprep.subr.bf16.mxu0 0
  %3518 = vmatpush1.bf16.msra.mxu0 0
  %3519 = vmatprep.subr.bf16.mxu0 0
  %3520 = vmatpush1.bf16.msra.mxu0 0
  %3521 = vmatprep.subr.bf16.mxu0 0
  %3522 = vmatpush1.bf16.msra.mxu0 0
  %3523 = vmatprep.mubr.bf16.mxu0 0
  %3524 = vmatmul.mubr.bf16.gmra.mrb[0].mxu0 %v3486
  %v3525 = vpop.f32.mrb[0].mxu0
  %v3526 = vadd.f32 %v3458, %v3525
  %v3527 = vpop.f32.mrb[0].mxu0
  %v3528 = vpop.f32.mrb[0].mxu0
  %v3529 = vadd.f32 %v3463, %v3528
  %v3530 = vpop.f32.mrb[0].mxu0
  %3531 = vmatprep.mubr.bf16.mxu0 0
  %3532 = vmatmul.mubr.bf16.gmra.mrb[0].mxu0 %v3489
  %v3533 = vpop.f32.mrb[0].mxu0
  %v3534 = vadd.f32 %v3468, %v3533
  %v3535 = vpop.f32.mrb[0].mxu0
  %v3536 = vpop.f32.mrb[0].mxu0
  %v3537 = vadd.f32 %v3473, %v3536
  %v3538 = vpop.f32.mrb[0].mxu0
  %3539 = vdwg.mxu0
  %v3544 = vunpack.c.l.b16 %v88
  %v3545 = vunpack.c.l.b16 %v89
  %v3546 = vunpack.c.l.b16 %v90
  %v3547 = vunpack.c.l.b16 %v91
  %v3548 = vpack.c.b16 %v3545, %v3544
  %v3549 = vpack.c.b16 %v3547, %v3546
  %v3553 = vsel %vm3241, %v3445, 0
  %v3556 = vsel %vm3241, %v3446, 0
  %3558 = vmatprep.subr.bf16.mxu0 0
  %3559 = vmatpush1.bf16.msra.mxu0 %v3548
  %3560 = vmatprep.subr.bf16.mxu0 0
  %3561 = vmatpush1.bf16.msra.mxu0 %v3549
  %3562 = vmatprep.subr.bf16.mxu0 0
  %3563 = vmatpush1.bf16.msra.mxu0 0
  %3564 = vmatprep.subr.bf16.mxu0 0
  %3565 = vmatpush1.bf16.msra.mxu0 0
  %3566 = vmatprep.subr.bf16.mxu0 0
  %3567 = vmatpush1.bf16.msra.mxu0 0
  %3568 = vmatprep.subr.bf16.mxu0 0
  %3569 = vmatpush1.bf16.msra.mxu0 0
  %3570 = vmatprep.subr.bf16.mxu0 0
  %3571 = vmatpush1.bf16.msra.mxu0 0
  %3572 = vmatprep.subr.bf16.mxu0 0
  %3573 = vmatpush1.bf16.msra.mxu0 0
  %3574 = vmatprep.subr.bf16.mxu0 0
  %3575 = vmatpush1.bf16.msra.mxu0 0
  %3576 = vmatprep.subr.bf16.mxu0 0
  %3577 = vmatpush1.bf16.msra.mxu0 0
  %3578 = vmatprep.subr.bf16.mxu0 0
  %3579 = vmatpush1.bf16.msra.mxu0 0
  %3580 = vmatprep.subr.bf16.mxu0 0
  %3581 = vmatpush1.bf16.msra.mxu0 0
  %3582 = vmatprep.subr.bf16.mxu0 0
  %3583 = vmatpush1.bf16.msra.mxu0 0
  %3584 = vmatprep.subr.bf16.mxu0 0
  %3585 = vmatpush1.bf16.msra.mxu0 0
  %3586 = vmatprep.subr.bf16.mxu0 0
  %3587 = vmatpush1.bf16.msra.mxu0 0
  %3588 = vmatprep.subr.bf16.mxu0 0
  %3589 = vmatpush1.bf16.msra.mxu0 0
  %3590 = vmatprep.mubr.bf16.mxu0 0
  %3591 = vmatmul.mubr.bf16.gmra.mrb[0].mxu0 %v3553
  %v3592 = vpop.f32.mrb[0].mxu0
  %v3593 = vadd.f32 %v3526, %v3592
  %v3594 = vpop.f32.mrb[0].mxu0
  %v3595 = vpop.f32.mrb[0].mxu0
  %v3596 = vadd.f32 %v3529, %v3595
  %v3597 = vpop.f32.mrb[0].mxu0
  %3598 = vmatprep.mubr.bf16.mxu0 0
  %3599 = vmatmul.mubr.bf16.gmra.mrb[0].mxu0 %v3556
  %v3600 = vpop.f32.mrb[0].mxu0
  %v3601 = vadd.f32 %v3534, %v3600
  %v3602 = vpop.f32.mrb[0].mxu0
  %v3603 = vpop.f32.mrb[0].mxu0
  %v3604 = vadd.f32 %v3537, %v3603
  %v3605 = vpop.f32.mrb[0].mxu0
  %3606 = vdwg.mxu0
  %v3607 = vpack.c.bf16 %v3596, %v3593
  %v3608 = vpack.c.bf16 %v3604, %v3601
  %v3609 = vld [vmem:[%s1 + $0x160] sm:$0xf]
  %v3610 = vld [vmem:[%s1 + $0x170] sm:$0xf]
  %v3611 = vld [vmem:[%s1 + $0x180] sm:$0xf]
  %v3612 = vld [vmem:[%s1 + $0x190] sm:$0xf]
  %v3613 = vpack.c.bf16 %v847, %v847
  %v3614 = vpack.c.bf16 %v848, %v848
  %v3615 = vpack.c.bf16 %v849, %v849
  %v3616 = vpack.c.bf16 %v850, %v850
  %v3617 = vld [vmem:[%s2 + $0xb0] sm:$0xff]
  %v3618 = vld [vmem:[%s2 + $0xb8] sm:$0xff]
  %v3619 = vld [vmem:[%s2 + $0xc0] sm:$0xff]
  %v3620 = vld [vmem:[%s2 + $0xc8] sm:$0xff]
  %3622 = vset.pattern.permute.xlu0 0
  %3623 = vperm.xlu0 %3622, %v3617
  %v3624 = vpop.permute.xlu0 %3623
  %3627 = vset.pattern.permute.xlu0 0
  %3628 = vperm.xlu0 %3627, %v3618
  %v3629 = vpop.permute.xlu0 %3628
  %3632 = vset.pattern.permute.xlu0 0
  %3633 = vperm.xlu0 %3632, %v3619
  %v3634 = vpop.permute.xlu0 %3633
  %3637 = vset.pattern.permute.xlu0 0
  %3638 = vperm.xlu0 %3637, %v3620
  %v3639 = vpop.permute.xlu0 %3638
  %v3645 = vunpack.c.l.b16 %v3609
  %v3646 = vunpack.c.l.b16 %v3610
  %v3647 = vunpack.c.l.b16 %v3611
  %v3648 = vunpack.c.l.b16 %v3612
  %v3649 = vpack.c.b16 %v3646, %v3645
  %v3650 = vpack.c.b16 %v3648, %v3647
  %vm3651 = vcmask 64512
  %v3653 = vsel %vm3651, %v3649, 0
  %v3656 = vsel %vm3651, %v3650, 0
  %v3659 = vsel %vm496, %v3613, 0
  %v3662 = vsel %vm496, %v3614, 0
  %v3665 = vsel %vm496, %v3615, 0
  %v3668 = vsel %vm496, %v3616, 0
  %3670 = vmatprep.subr.bf16.mxu0 %v3662
  %3671 = vmatpush1.bf16.msra.mxu0 %v3659
  %3672 = vmatprep.subr.bf16.mxu0 0
  %3673 = vmatpush1.bf16.msra.mxu0 0
  %3674 = vmatprep.subr.bf16.mxu0 0
  %3675 = vmatpush1.bf16.msra.mxu0 0
  %3676 = vmatprep.subr.bf16.mxu0 0
  %3677 = vmatpush1.bf16.msra.mxu0 0
  %3678 = vmatprep.subr.bf16.mxu0 0
  %3679 = vmatpush1.bf16.msra.mxu0 0
  %3680 = vmatprep.subr.bf16.mxu0 0
  %3681 = vmatpush1.bf16.msra.mxu0 0
  %3682 = vmatprep.subr.bf16.mxu0 0
  %3683 = vmatpush1.bf16.msra.mxu0 0
  %3684 = vmatprep.subr.bf16.mxu0 0
  %3685 = vmatpush1.bf16.msra.mxu0 0
  %3686 = vmatprep.subr.bf16.mxu0 0
  %3687 = vmatpush1.bf16.msra.mxu0 0
  %3688 = vmatprep.subr.bf16.mxu0 0
  %3689 = vmatpush1.bf16.msra.mxu0 0
  %3690 = vmatprep.subr.bf16.mxu0 0
  %3691 = vmatpush1.bf16.msra.mxu0 0
  %3692 = vmatprep.subr.bf16.mxu0 0
  %3693 = vmatpush1.bf16.msra.mxu0 0
  %3694 = vmatprep.subr.bf16.mxu0 0
  %3695 = vmatpush1.bf16.msra.mxu0 0
  %3696 = vmatprep.subr.bf16.mxu0 0
  %3697 = vmatpush1.bf16.msra.mxu0 0
  %3698 = vmatprep.subr.bf16.mxu0 0
  %3699 = vmatpush1.bf16.msra.mxu0 0
  %3700 = vmatprep.subr.bf16.mxu0 0
  %3701 = vmatpush1.bf16.msra.mxu0 0
  %3702 = vmatprep.mubr.bf16.mxu0 0
  %3703 = vmatmul.mubr.bf16.gmra.mrb[0].mxu0 %v3653
  %v3704 = vpop.f32.mrb[0].mxu0
  %v3705 = vadd.f32 %v3624, %v3704
  %v3706 = vpop.f32.mrb[0].mxu0
  %v3707 = vadd.f32 %v3624, %v3706
  %v3708 = vpop.f32.mrb[0].mxu0
  %v3709 = vadd.f32 %v3629, %v3708
  %v3710 = vpop.f32.mrb[0].mxu0
  %v3711 = vadd.f32 %v3629, %v3710
  %3712 = vmatprep.mubr.bf16.mxu0 0
  %3713 = vmatmul.mubr.bf16.gmra.mrb[0].mxu0 %v3656
  %v3714 = vpop.f32.mrb[0].mxu0
  %v3715 = vadd.f32 %v3634, %v3714
  %v3716 = vpop.f32.mrb[0].mxu0
  %v3717 = vadd.f32 %v3634, %v3716
  %v3718 = vpop.f32.mrb[0].mxu0
  %v3719 = vadd.f32 %v3639, %v3718
  %v3720 = vpop.f32.mrb[0].mxu0
  %v3721 = vadd.f32 %v3639, %v3720
  %3722 = vdwg.mxu0
  %3723 = vmatprep.subr.bf16.mxu0 %v3668
  %3724 = vmatpush1.bf16.msra.mxu0 %v3665
  %3725 = vmatprep.subr.bf16.mxu0 0
  %3726 = vmatpush1.bf16.msra.mxu0 0
  %3727 = vmatprep.subr.bf16.mxu0 0
  %3728 = vmatpush1.bf16.msra.mxu0 0
  %3729 = vmatprep.subr.bf16.mxu0 0
  %3730 = vmatpush1.bf16.msra.mxu0 0
  %3731 = vmatprep.subr.bf16.mxu0 0
  %3732 = vmatpush1.bf16.msra.mxu0 0
  %3733 = vmatprep.subr.bf16.mxu0 0
  %3734 = vmatpush1.bf16.msra.mxu0 0
  %3735 = vmatprep.subr.bf16.mxu0 0
  %3736 = vmatpush1.bf16.msra.mxu0 0
  %3737 = vmatprep.subr.bf16.mxu0 0
  %3738 = vmatpush1.bf16.msra.mxu0 0
  %3739 = vmatprep.subr.bf16.mxu0 0
  %3740 = vmatpush1.bf16.msra.mxu0 0
  %3741 = vmatprep.subr.bf16.mxu0 0
  %3742 = vmatpush1.bf16.msra.mxu0 0
  %3743 = vmatprep.subr.bf16.mxu0 0
  %3744 = vmatpush1.bf16.msra.mxu0 0
  %3745 = vmatprep.subr.bf16.mxu0 0
  %3746 = vmatpush1.bf16.msra.mxu0 0
  %3747 = vmatprep.subr.bf16.mxu0 0
  %3748 = vmatpush1.bf16.msra.mxu0 0
  %3749 = vmatprep.subr.bf16.mxu0 0
  %3750 = vmatpush1.bf16.msra.mxu0 0
  %3751 = vmatprep.subr.bf16.mxu0 0
  %3752 = vmatpush1.bf16.msra.mxu0 0
  %3753 = vmatprep.subr.bf16.mxu0 0
  %3754 = vmatpush1.bf16.msra.mxu0 0
  %3755 = vmatprep.mubr.bf16.mxu0 0
  %3756 = vmatmul.mubr.bf16.gmra.mrb[0].mxu0 %v3653
  %v3757 = vpop.f32.mrb[0].mxu0
  %v3758 = vadd.f32 %v3624, %v3757
  %v3759 = vpop.f32.mrb[0].mxu0
  %v3760 = vadd.f32 %v3624, %v3759
  %v3761 = vpop.f32.mrb[0].mxu0
  %v3762 = vadd.f32 %v3629, %v3761
  %v3763 = vpop.f32.mrb[0].mxu0
  %v3764 = vadd.f32 %v3629, %v3763
  %3765 = vmatprep.mubr.bf16.mxu0 0
  %3766 = vmatmul.mubr.bf16.gmra.mrb[0].mxu0 %v3656
  %v3767 = vpop.f32.mrb[0].mxu0
  %v3768 = vadd.f32 %v3634, %v3767
  %v3769 = vpop.f32.mrb[0].mxu0
  %v3770 = vadd.f32 %v3634, %v3769
  %v3771 = vpop.f32.mrb[0].mxu0
  %v3772 = vadd.f32 %v3639, %v3771
  %v3773 = vpop.f32.mrb[0].mxu0
  %v3774 = vadd.f32 %v3639, %v3773
  %3775 = vdwg.mxu0
  %v3808 = vunpack.c.l.b16 %v92
  %v3809 = vunpack.c.h.b16 %v92
  %v3810 = vunpack.c.l.b16 %v93
  %v3811 = vunpack.c.h.b16 %v93
  %v3812 = vunpack.c.l.b16 %v94
  %v3813 = vunpack.c.h.b16 %v94
  %v3814 = vunpack.c.l.b16 %v95
  %v3815 = vunpack.c.h.b16 %v95
  %v3816 = vunpack.c.l.b16 %v96
  %v3817 = vunpack.c.h.b16 %v96
  %v3818 = vunpack.c.l.b16 %v97
  %v3819 = vunpack.c.h.b16 %v97
  %v3820 = vunpack.c.l.b16 %v98
  %v3821 = vunpack.c.h.b16 %v98
  %v3822 = vunpack.c.l.b16 %v99
  %v3823 = vunpack.c.h.b16 %v99
  %v3824 = vunpack.c.l.b16 %v100
  %v3825 = vunpack.c.h.b16 %v100
  %v3826 = vunpack.c.l.b16 %v101
  %v3827 = vunpack.c.h.b16 %v101
  %v3828 = vunpack.c.l.b16 %v102
  %v3829 = vunpack.c.h.b16 %v102
  %v3830 = vunpack.c.l.b16 %v103
  %v3831 = vunpack.c.h.b16 %v103
  %v3832 = vunpack.c.l.b16 %v104
  %v3833 = vunpack.c.h.b16 %v104
  %v3834 = vunpack.c.l.b16 %v105
  %v3835 = vunpack.c.h.b16 %v105
  %v3836 = vunpack.c.l.b16 %v106
  %v3837 = vunpack.c.h.b16 %v106
  %v3838 = vunpack.c.l.b16 %v107
  %v3839 = vunpack.c.h.b16 %v107
  %v3840 = vunpack.c.l.b16 %v108
  %v3841 = vunpack.c.h.b16 %v108
  %v3842 = vunpack.c.l.b16 %v109
  %v3843 = vunpack.c.h.b16 %v109
  %v3844 = vunpack.c.l.b16 %v110
  %v3845 = vunpack.c.h.b16 %v110
  %v3846 = vunpack.c.l.b16 %v111
  %v3847 = vunpack.c.h.b16 %v111
  %v3848 = vunpack.c.l.b16 %v112
  %v3849 = vunpack.c.h.b16 %v112
  %v3850 = vunpack.c.l.b16 %v113
  %v3851 = vunpack.c.h.b16 %v113
  %v3852 = vunpack.c.l.b16 %v114
  %v3853 = vunpack.c.h.b16 %v114
  %v3854 = vunpack.c.l.b16 %v115
  %v3855 = vunpack.c.h.b16 %v115
  %v3856 = vunpack.c.l.b16 %v116
  %v3857 = vunpack.c.h.b16 %v116
  %v3858 = vunpack.c.l.b16 %v117
  %v3859 = vunpack.c.h.b16 %v117
  %v3860 = vunpack.c.l.b16 %v118
  %v3861 = vunpack.c.h.b16 %v118
  %v3862 = vunpack.c.l.b16 %v119
  %v3863 = vunpack.c.h.b16 %v119
  %v3864 = vunpack.c.l.b16 %v120
  %v3865 = vunpack.c.h.b16 %v120
  %v3866 = vunpack.c.l.b16 %v121
  %v3867 = vunpack.c.h.b16 %v121
  %v3868 = vunpack.c.l.b16 %v122
  %v3869 = vunpack.c.h.b16 %v122
  %v3870 = vunpack.c.l.b16 %v123
  %v3871 = vunpack.c.h.b16 %v123
  %v3872 = vpack.c.b16 %v3812, %v3808
  %v3873 = vpack.c.b16 %v3813, %v3809
  %v3874 = vpack.c.b16 %v3814, %v3810
  %v3875 = vpack.c.b16 %v3815, %v3811
  %v3876 = vpack.c.b16 %v3820, %v3816
  %v3877 = vpack.c.b16 %v3821, %v3817
  %v3878 = vpack.c.b16 %v3822, %v3818
  %v3879 = vpack.c.b16 %v3823, %v3819
  %v3880 = vpack.c.b16 %v3828, %v3824
  %v3881 = vpack.c.b16 %v3829, %v3825
  %v3882 = vpack.c.b16 %v3830, %v3826
  %v3883 = vpack.c.b16 %v3831, %v3827
  %v3884 = vpack.c.b16 %v3836, %v3832
  %v3885 = vpack.c.b16 %v3837, %v3833
  %v3886 = vpack.c.b16 %v3838, %v3834
  %v3887 = vpack.c.b16 %v3839, %v3835
  %v3888 = vpack.c.b16 %v3844, %v3840
  %v3889 = vpack.c.b16 %v3845, %v3841
  %v3890 = vpack.c.b16 %v3846, %v3842
  %v3891 = vpack.c.b16 %v3847, %v3843
  %v3892 = vpack.c.b16 %v3852, %v3848
  %v3893 = vpack.c.b16 %v3853, %v3849
  %v3894 = vpack.c.b16 %v3854, %v3850
  %v3895 = vpack.c.b16 %v3855, %v3851
  %v3896 = vpack.c.b16 %v3860, %v3856
  %v3897 = vpack.c.b16 %v3861, %v3857
  %v3898 = vpack.c.b16 %v3862, %v3858
  %v3899 = vpack.c.b16 %v3863, %v3859
  %v3900 = vpack.c.b16 %v3868, %v3864
  %v3901 = vpack.c.b16 %v3869, %v3865
  %v3902 = vpack.c.b16 %v3870, %v3866
  %v3903 = vpack.c.b16 %v3871, %v3867
  %3936 = vmatprep.subr.bf16.mxu0 %v3873
  %3937 = vmatpush1.bf16.msra.mxu0 %v3872
  %3938 = vmatprep.subr.bf16.mxu0 %v3877
  %3939 = vmatpush1.bf16.msra.mxu0 %v3876
  %3940 = vmatprep.subr.bf16.mxu0 %v3881
  %3941 = vmatpush1.bf16.msra.mxu0 %v3880
  %3942 = vmatprep.subr.bf16.mxu0 %v3885
  %3943 = vmatpush1.bf16.msra.mxu0 %v3884
  %3944 = vmatprep.subr.bf16.mxu0 %v3889
  %3945 = vmatpush1.bf16.msra.mxu0 %v3888
  %3946 = vmatprep.subr.bf16.mxu0 %v3893
  %3947 = vmatpush1.bf16.msra.mxu0 %v3892
  %3948 = vmatprep.subr.bf16.mxu0 %v3897
  %3949 = vmatpush1.bf16.msra.mxu0 %v3896
  %3950 = vmatprep.subr.bf16.mxu0 %v3901
  %3951 = vmatpush1.bf16.msra.mxu0 %v3900
  %3952 = vmatprep.subr.bf16.mxu0 0
  %3953 = vmatpush1.bf16.msra.mxu0 0
  %3954 = vmatprep.subr.bf16.mxu0 0
  %3955 = vmatpush1.bf16.msra.mxu0 0
  %3956 = vmatprep.subr.bf16.mxu0 0
  %3957 = vmatpush1.bf16.msra.mxu0 0
  %3958 = vmatprep.subr.bf16.mxu0 0
  %3959 = vmatpush1.bf16.msra.mxu0 0
  %3960 = vmatprep.subr.bf16.mxu0 0
  %3961 = vmatpush1.bf16.msra.mxu0 0
  %3962 = vmatprep.subr.bf16.mxu0 0
  %3963 = vmatpush1.bf16.msra.mxu0 0
  %3964 = vmatprep.subr.bf16.mxu0 0
  %3965 = vmatpush1.bf16.msra.mxu0 0
  %3966 = vmatprep.subr.bf16.mxu0 0
  %3967 = vmatpush1.bf16.msra.mxu0 0
  %3968 = vmatprep.mubr.bf16.mxu0 0
  %3969 = vmatmul.mubr.bf16.gmra.mrb[0].mxu0 %v3607
  %v3970 = vpop.f32.mrb[0].mxu0
  %v3971 = vadd.f32 %v3705, %v3970
  %v3972 = vpop.f32.mrb[0].mxu0
  %v3973 = vadd.f32 %v3707, %v3972
  %v3974 = vpop.f32.mrb[0].mxu0
  %v3975 = vadd.f32 %v3709, %v3974
  %v3976 = vpop.f32.mrb[0].mxu0
  %v3977 = vadd.f32 %v3711, %v3976
  %3978 = vmatprep.mubr.bf16.mxu0 0
  %3979 = vmatmul.mubr.bf16.gmra.mrb[0].mxu0 %v3608
  %v3980 = vpop.f32.mrb[0].mxu0
  %v3981 = vadd.f32 %v3715, %v3980
  %v3982 = vpop.f32.mrb[0].mxu0
  %v3983 = vadd.f32 %v3717, %v3982
  %v3984 = vpop.f32.mrb[0].mxu0
  %v3985 = vadd.f32 %v3719, %v3984
  %v3986 = vpop.f32.mrb[0].mxu0
  %v3987 = vadd.f32 %v3721, %v3986
  %3988 = vdwg.mxu0
  %3989 = vmatprep.subr.bf16.mxu0 %v3875
  %3990 = vmatpush1.bf16.msra.mxu0 %v3874
  %3991 = vmatprep.subr.bf16.mxu0 %v3879
  %3992 = vmatpush1.bf16.msra.mxu0 %v3878
  %3993 = vmatprep.subr.bf16.mxu0 %v3883
  %3994 = vmatpush1.bf16.msra.mxu0 %v3882
  %3995 = vmatprep.subr.bf16.mxu0 %v3887
  %3996 = vmatpush1.bf16.msra.mxu0 %v3886
  %3997 = vmatprep.subr.bf16.mxu0 %v3891
  %3998 = vmatpush1.bf16.msra.mxu0 %v3890
  %3999 = vmatprep.subr.bf16.mxu0 %v3895
  %4000 = vmatpush1.bf16.msra.mxu0 %v3894
  %4001 = vmatprep.subr.bf16.mxu0 %v3899
  %4002 = vmatpush1.bf16.msra.mxu0 %v3898
  %4003 = vmatprep.subr.bf16.mxu0 %v3903
  %4004 = vmatpush1.bf16.msra.mxu0 %v3902
  %4005 = vmatprep.subr.bf16.mxu0 0
  %4006 = vmatpush1.bf16.msra.mxu0 0
  %4007 = vmatprep.subr.bf16.mxu0 0
  %4008 = vmatpush1.bf16.msra.mxu0 0
  %4009 = vmatprep.subr.bf16.mxu0 0
  %4010 = vmatpush1.bf16.msra.mxu0 0
  %4011 = vmatprep.subr.bf16.mxu0 0
  %4012 = vmatpush1.bf16.msra.mxu0 0
  %4013 = vmatprep.subr.bf16.mxu0 0
  %4014 = vmatpush1.bf16.msra.mxu0 0
  %4015 = vmatprep.subr.bf16.mxu0 0
  %4016 = vmatpush1.bf16.msra.mxu0 0
  %4017 = vmatprep.subr.bf16.mxu0 0
  %4018 = vmatpush1.bf16.msra.mxu0 0
  %4019 = vmatprep.subr.bf16.mxu0 0
  %4020 = vmatpush1.bf16.msra.mxu0 0
  %4021 = vmatprep.mubr.bf16.mxu0 0
  %4022 = vmatmul.mubr.bf16.gmra.mrb[0].mxu0 %v3607
  %v4023 = vpop.f32.mrb[0].mxu0
  %v4024 = vadd.f32 %v3758, %v4023
  %v4025 = vpop.f32.mrb[0].mxu0
  %v4026 = vadd.f32 %v3760, %v4025
  %v4027 = vpop.f32.mrb[0].mxu0
  %v4028 = vadd.f32 %v3762, %v4027
  %v4029 = vpop.f32.mrb[0].mxu0
  %v4030 = vadd.f32 %v3764, %v4029
  %4031 = vmatprep.mubr.bf16.mxu0 0
  %4032 = vmatmul.mubr.bf16.gmra.mrb[0].mxu0 %v3608
  %v4033 = vpop.f32.mrb[0].mxu0
  %v4034 = vadd.f32 %v3768, %v4033
  %v4035 = vpop.f32.mrb[0].mxu0
  %v4036 = vadd.f32 %v3770, %v4035
  %v4037 = vpop.f32.mrb[0].mxu0
  %v4038 = vadd.f32 %v3772, %v4037
  %v4039 = vpop.f32.mrb[0].mxu0
  %v4040 = vadd.f32 %v3774, %v4039
  %4041 = vdwg.mxu0
  %v4042 = vld [vmem:[%s1 + $0x1a0] sm:$0x11]
  %v4043 = vld [vmem:[%s1 + $0x1a8] sm:$0x1]
  %4044 = vrot.lane.b32.xlu0 %v3971, 17
  %v4045 = vpop.permute.xlu0 %4044
  %4046 = vrot.lane.b32.xlu0 %v3975, 17
  %v4047 = vpop.permute.xlu0 %4046
  %4048 = vrot.lane.b32.xlu0 %v3981, 17
  %v4049 = vpop.permute.xlu0 %4048
  %4050 = vrot.lane.b32.xlu0 %v3985, 17
  %v4051 = vpop.permute.xlu0 %4050
  %4052 = vrot.lane.b32.xlu0 %v3973, 17
  %v4053 = vpop.permute.xlu0 %4052
  %4054 = vrot.lane.b32.xlu0 %v3977, 17
  %v4055 = vpop.permute.xlu0 %4054
  %4056 = vrot.lane.b32.xlu0 %v3983, 17
  %v4057 = vpop.permute.xlu0 %4056
  %4058 = vrot.lane.b32.xlu0 %v3987, 17
  %v4059 = vpop.permute.xlu0 %4058
  %4060 = vrot.lane.b32.xlu0 %v4024, 17
  %v4061 = vpop.permute.xlu0 %4060
  %4062 = vrot.lane.b32.xlu0 %v4028, 17
  %v4063 = vpop.permute.xlu0 %4062
  %4064 = vrot.lane.b32.xlu0 %v4034, 17
  %v4065 = vpop.permute.xlu0 %4064
  %4066 = vrot.lane.b32.xlu0 %v4038, 17
  %v4067 = vpop.permute.xlu0 %4066
  %4068 = vrot.lane.b32.xlu0 %v4026, 17
  %v4069 = vpop.permute.xlu0 %4068
  %4070 = vrot.lane.b32.xlu0 %v4030, 17
  %v4071 = vpop.permute.xlu0 %4070
  %4072 = vrot.lane.b32.xlu0 %v4036, 17
  %v4073 = vpop.permute.xlu0 %4072
  %4074 = vrot.lane.b32.xlu0 %v4040, 17
  %v4075 = vpop.permute.xlu0 %4074
  %v4076 = vsel %vm155, %v4061, %v4069
  %v4077 = vsel %vm155, %v4063, %v4071
  %v4078 = vsel %vm155, %v4065, %v4073
  %v4079 = vsel %vm155, %v4067, %v4075
  %v4080 = vsel %vm155, %v4053, %v4061
  %v4081 = vsel %vm155, %v4055, %v4063
  %v4082 = vsel %vm155, %v4057, %v4065
  %v4083 = vsel %vm155, %v4059, %v4067
  %v4084 = vsel %vm155, %v4045, %v4053
  %v4085 = vsel %vm155, %v4047, %v4055
  %v4086 = vsel %vm155, %v4049, %v4057
  %v4087 = vsel %vm155, %v4051, %v4059
  %v4088 = vsel %vm155, %v4069, %v4045
  %v4089 = vsel %vm155, %v4071, %v4047
  %v4090 = vsel %vm155, %v4073, %v4049
  %v4091 = vsel %vm155, %v4075, %v4051
  %v4092 = vmul.f32 %v4088, %v165
  %v4093 = vmul.f32 %v4084, %v169
  %v4094 = vmul.f32 %v4080, %v173
  %v4095 = vmul.f32 %v4076, %v177
  %v4096 = vmul.f32 %v4089, %v165
  %v4097 = vmul.f32 %v4085, %v169
  %v4098 = vmul.f32 %v4081, %v173
  %v4099 = vmul.f32 %v4077, %v177
  %v4100 = vmul.f32 %v4090, %v165
  %v4101 = vmul.f32 %v4086, %v169
  %v4102 = vmul.f32 %v4082, %v173
  %v4103 = vmul.f32 %v4078, %v177
  %v4104 = vmul.f32 %v4091, %v165
  %v4105 = vmul.f32 %v4087, %v169
  %v4106 = vmul.f32 %v4083, %v173
  %v4107 = vmul.f32 %v4079, %v177
  %4108 = vrot.lane.b32.xlu0 %v3971, 16
  %v4109 = vpop.permute.xlu0 %4108
  %4110 = vrot.lane.b32.xlu0 %v3975, 16
  %v4111 = vpop.permute.xlu0 %4110
  %4112 = vrot.lane.b32.xlu0 %v3981, 16
  %v4113 = vpop.permute.xlu0 %4112
  %4114 = vrot.lane.b32.xlu0 %v3985, 16
  %v4115 = vpop.permute.xlu0 %4114
  %4116 = vrot.lane.b32.xlu0 %v3973, 16
  %v4117 = vpop.permute.xlu0 %4116
  %4118 = vrot.lane.b32.xlu0 %v3977, 16
  %v4119 = vpop.permute.xlu0 %4118
  %4120 = vrot.lane.b32.xlu0 %v3983, 16
  %v4121 = vpop.permute.xlu0 %4120
  %4122 = vrot.lane.b32.xlu0 %v3987, 16
  %v4123 = vpop.permute.xlu0 %4122
  %4124 = vrot.lane.b32.xlu0 %v4024, 16
  %v4125 = vpop.permute.xlu0 %4124
  %4126 = vrot.lane.b32.xlu0 %v4028, 16
  %v4127 = vpop.permute.xlu0 %4126
  %4128 = vrot.lane.b32.xlu0 %v4034, 16
  %v4129 = vpop.permute.xlu0 %4128
  %4130 = vrot.lane.b32.xlu0 %v4038, 16
  %v4131 = vpop.permute.xlu0 %4130
  %4132 = vrot.lane.b32.xlu0 %v4026, 16
  %v4133 = vpop.permute.xlu0 %4132
  %4134 = vrot.lane.b32.xlu0 %v4030, 16
  %v4135 = vpop.permute.xlu0 %4134
  %4136 = vrot.lane.b32.xlu0 %v4036, 16
  %v4137 = vpop.permute.xlu0 %4136
  %4138 = vrot.lane.b32.xlu0 %v4040, 16
  %v4139 = vpop.permute.xlu0 %4138
  %v4140 = vsel %vm194, %v4125, %v4133
  %v4141 = vsel %vm194, %v4127, %v4135
  %v4142 = vsel %vm194, %v4129, %v4137
  %v4143 = vsel %vm194, %v4131, %v4139
  %v4144 = vsel %vm194, %v4117, %v4125
  %v4145 = vsel %vm194, %v4119, %v4127
  %v4146 = vsel %vm194, %v4121, %v4129
  %v4147 = vsel %vm194, %v4123, %v4131
  %v4148 = vsel %vm194, %v4109, %v4117
  %v4149 = vsel %vm194, %v4111, %v4119
  %v4150 = vsel %vm194, %v4113, %v4121
  %v4151 = vsel %vm194, %v4115, %v4123
  %v4152 = vsel %vm194, %v4133, %v4109
  %v4153 = vsel %vm194, %v4135, %v4111
  %v4154 = vsel %vm194, %v4137, %v4113
  %v4155 = vsel %vm194, %v4139, %v4115
  %v4156 = vmul.f32 %v4152, %v205
  %v4157 = vmul.f32 %v4148, %v209
  %v4158 = vmul.f32 %v4144, %v213
  %v4159 = vmul.f32 %v4140, %v217
  %v4160 = vmul.f32 %v4153, %v205
  %v4161 = vmul.f32 %v4149, %v209
  %v4162 = vmul.f32 %v4145, %v213
  %v4163 = vmul.f32 %v4141, %v217
  %v4164 = vmul.f32 %v4154, %v205
  %v4165 = vmul.f32 %v4150, %v209
  %v4166 = vmul.f32 %v4146, %v213
  %v4167 = vmul.f32 %v4142, %v217
  %v4168 = vmul.f32 %v4155, %v205
  %v4169 = vmul.f32 %v4151, %v209
  %v4170 = vmul.f32 %v4147, %v213
  %v4171 = vmul.f32 %v4143, %v217
  %4172 = vrot.lane.b32.xlu0 %v3971, 15
  %v4173 = vpop.permute.xlu0 %4172
  %4174 = vrot.lane.b32.xlu0 %v3975, 15
  %v4175 = vpop.permute.xlu0 %4174
  %4176 = vrot.lane.b32.xlu0 %v3981, 15
  %v4177 = vpop.permute.xlu0 %4176
  %4178 = vrot.lane.b32.xlu0 %v3985, 15
  %v4179 = vpop.permute.xlu0 %4178
  %4180 = vrot.lane.b32.xlu0 %v3973, 15
  %v4181 = vpop.permute.xlu0 %4180
  %4182 = vrot.lane.b32.xlu0 %v3977, 15
  %v4183 = vpop.permute.xlu0 %4182
  %4184 = vrot.lane.b32.xlu0 %v3983, 15
  %v4185 = vpop.permute.xlu0 %4184
  %4186 = vrot.lane.b32.xlu0 %v3987, 15
  %v4187 = vpop.permute.xlu0 %4186
  %4188 = vrot.lane.b32.xlu0 %v4024, 15
  %v4189 = vpop.permute.xlu0 %4188
  %4190 = vrot.lane.b32.xlu0 %v4028, 15
  %v4191 = vpop.permute.xlu0 %4190
  %4192 = vrot.lane.b32.xlu0 %v4034, 15
  %v4193 = vpop.permute.xlu0 %4192
  %4194 = vrot.lane.b32.xlu0 %v4038, 15
  %v4195 = vpop.permute.xlu0 %4194
  %4196 = vrot.lane.b32.xlu0 %v4026, 15
  %v4197 = vpop.permute.xlu0 %4196
  %4198 = vrot.lane.b32.xlu0 %v4030, 15
  %v4199 = vpop.permute.xlu0 %4198
  %4200 = vrot.lane.b32.xlu0 %v4036, 15
  %v4201 = vpop.permute.xlu0 %4200
  %4202 = vrot.lane.b32.xlu0 %v4040, 15
  %v4203 = vpop.permute.xlu0 %4202
  %v4204 = vsel %vm234, %v4189, %v4197
  %v4205 = vsel %vm234, %v4191, %v4199
  %v4206 = vsel %vm234, %v4193, %v4201
  %v4207 = vsel %vm234, %v4195, %v4203
  %v4208 = vsel %vm234, %v4181, %v4189
  %v4209 = vsel %vm234, %v4183, %v4191
  %v4210 = vsel %vm234, %v4185, %v4193
  %v4211 = vsel %vm234, %v4187, %v4195
  %v4212 = vsel %vm234, %v4173, %v4181
  %v4213 = vsel %vm234, %v4175, %v4183
  %v4214 = vsel %vm234, %v4177, %v4185
  %v4215 = vsel %vm234, %v4179, %v4187
  %v4216 = vsel %vm234, %v4197, %v4173
  %v4217 = vsel %vm234, %v4199, %v4175
  %v4218 = vsel %vm234, %v4201, %v4177
  %v4219 = vsel %vm234, %v4203, %v4179
  %v4220 = vmul.f32 %v4216, %v245
  %v4221 = vmul.f32 %v4212, %v249
  %v4222 = vmul.f32 %v4208, %v253
  %v4223 = vmul.f32 %v4204, %v257
  %v4224 = vmul.f32 %v4217, %v245
  %v4225 = vmul.f32 %v4213, %v249
  %v4226 = vmul.f32 %v4209, %v253
  %v4227 = vmul.f32 %v4205, %v257
  %v4228 = vmul.f32 %v4218, %v245
  %v4229 = vmul.f32 %v4214, %v249
  %v4230 = vmul.f32 %v4210, %v253
  %v4231 = vmul.f32 %v4206, %v257
  %v4232 = vmul.f32 %v4219, %v245
  %v4233 = vmul.f32 %v4215, %v249
  %v4234 = vmul.f32 %v4211, %v253
  %v4235 = vmul.f32 %v4207, %v257
  %4236 = vrot.lane.b32.xlu0 %v3971, 1
  %v4237 = vpop.permute.xlu0 %4236
  %4238 = vrot.lane.b32.xlu0 %v3975, 1
  %v4239 = vpop.permute.xlu0 %4238
  %4240 = vrot.lane.b32.xlu0 %v3981, 1
  %v4241 = vpop.permute.xlu0 %4240
  %4242 = vrot.lane.b32.xlu0 %v3985, 1
  %v4243 = vpop.permute.xlu0 %4242
  %4244 = vrot.lane.b32.xlu0 %v3973, 1
  %v4245 = vpop.permute.xlu0 %4244
  %4246 = vrot.lane.b32.xlu0 %v3977, 1
  %v4247 = vpop.permute.xlu0 %4246
  %4248 = vrot.lane.b32.xlu0 %v3983, 1
  %v4249 = vpop.permute.xlu0 %4248
  %4250 = vrot.lane.b32.xlu0 %v3987, 1
  %v4251 = vpop.permute.xlu0 %4250
  %4252 = vrot.lane.b32.xlu0 %v4024, 1
  %v4253 = vpop.permute.xlu0 %4252
  %4254 = vrot.lane.b32.xlu0 %v4028, 1
  %v4255 = vpop.permute.xlu0 %4254
  %4256 = vrot.lane.b32.xlu0 %v4034, 1
  %v4257 = vpop.permute.xlu0 %4256
  %4258 = vrot.lane.b32.xlu0 %v4038, 1
  %v4259 = vpop.permute.xlu0 %4258
  %4260 = vrot.lane.b32.xlu0 %v4026, 1
  %v4261 = vpop.permute.xlu0 %4260
  %4262 = vrot.lane.b32.xlu0 %v4030, 1
  %v4263 = vpop.permute.xlu0 %4262
  %4264 = vrot.lane.b32.xlu0 %v4036, 1
  %v4265 = vpop.permute.xlu0 %4264
  %4266 = vrot.lane.b32.xlu0 %v4040, 1
  %v4267 = vpop.permute.xlu0 %4266
  %v4268 = vsel %vm274, %v4253, %v4261
  %v4269 = vsel %vm274, %v4255, %v4263
  %v4270 = vsel %vm274, %v4257, %v4265
  %v4271 = vsel %vm274, %v4259, %v4267
  %v4272 = vsel %vm274, %v4245, %v4253
  %v4273 = vsel %vm274, %v4247, %v4255
  %v4274 = vsel %vm274, %v4249, %v4257
  %v4275 = vsel %vm274, %v4251, %v4259
  %v4276 = vsel %vm274, %v4237, %v4245
  %v4277 = vsel %vm274, %v4239, %v4247
  %v4278 = vsel %vm274, %v4241, %v4249
  %v4279 = vsel %vm274, %v4243, %v4251
  %v4280 = vsel %vm274, %v4261, %v4237
  %v4281 = vsel %vm274, %v4263, %v4239
  %v4282 = vsel %vm274, %v4265, %v4241
  %v4283 = vsel %vm274, %v4267, %v4243
  %v4284 = vmul.f32 %v4280, %v285
  %v4285 = vmul.f32 %v4276, %v289
  %v4286 = vmul.f32 %v4272, %v293
  %v4287 = vmul.f32 %v4268, %v297
  %v4288 = vmul.f32 %v4281, %v285
  %v4289 = vmul.f32 %v4277, %v289
  %v4290 = vmul.f32 %v4273, %v293
  %v4291 = vmul.f32 %v4269, %v297
  %v4292 = vmul.f32 %v4282, %v285
  %v4293 = vmul.f32 %v4278, %v289
  %v4294 = vmul.f32 %v4274, %v293
  %v4295 = vmul.f32 %v4270, %v297
  %v4296 = vmul.f32 %v4283, %v285
  %v4297 = vmul.f32 %v4279, %v289
  %v4298 = vmul.f32 %v4275, %v293
  %v4299 = vmul.f32 %v4271, %v297
  %4300 = vrot.lane.b32.xlu0 %v3971, 127
  %v4301 = vpop.permute.xlu0 %4300
  %4302 = vrot.lane.b32.xlu0 %v3975, 127
  %v4303 = vpop.permute.xlu0 %4302
  %4304 = vrot.lane.b32.xlu0 %v3981, 127
  %v4305 = vpop.permute.xlu0 %4304
  %4306 = vrot.lane.b32.xlu0 %v3985, 127
  %v4307 = vpop.permute.xlu0 %4306
  %4308 = vrot.lane.b32.xlu0 %v3973, 127
  %v4309 = vpop.permute.xlu0 %4308
  %4310 = vrot.lane.b32.xlu0 %v3977, 127
  %v4311 = vpop.permute.xlu0 %4310
  %4312 = vrot.lane.b32.xlu0 %v3983, 127
  %v4313 = vpop.permute.xlu0 %4312
  %4314 = vrot.lane.b32.xlu0 %v3987, 127
  %v4315 = vpop.permute.xlu0 %4314
  %4316 = vrot.lane.b32.xlu0 %v4024, 127
  %v4317 = vpop.permute.xlu0 %4316
  %4318 = vrot.lane.b32.xlu0 %v4028, 127
  %v4319 = vpop.permute.xlu0 %4318
  %4320 = vrot.lane.b32.xlu0 %v4034, 127
  %v4321 = vpop.permute.xlu0 %4320
  %4322 = vrot.lane.b32.xlu0 %v4038, 127
  %v4323 = vpop.permute.xlu0 %4322
  %4324 = vrot.lane.b32.xlu0 %v4026, 127
  %v4325 = vpop.permute.xlu0 %4324
  %4326 = vrot.lane.b32.xlu0 %v4030, 127
  %v4327 = vpop.permute.xlu0 %4326
  %4328 = vrot.lane.b32.xlu0 %v4036, 127
  %v4329 = vpop.permute.xlu0 %4328
  %4330 = vrot.lane.b32.xlu0 %v4040, 127
  %v4331 = vpop.permute.xlu0 %4330
  %v4332 = vsel %vm314, %v4317, %v4325
  %v4333 = vsel %vm314, %v4319, %v4327
  %v4334 = vsel %vm314, %v4321, %v4329
  %v4335 = vsel %vm314, %v4323, %v4331
  %v4336 = vsel %vm314, %v4309, %v4317
  %v4337 = vsel %vm314, %v4311, %v4319
  %v4338 = vsel %vm314, %v4313, %v4321
  %v4339 = vsel %vm314, %v4315, %v4323
  %v4340 = vsel %vm314, %v4301, %v4309
  %v4341 = vsel %vm314, %v4303, %v4311
  %v4342 = vsel %vm314, %v4305, %v4313
  %v4343 = vsel %vm314, %v4307, %v4315
  %v4344 = vsel %vm314, %v4325, %v4301
  %v4345 = vsel %vm314, %v4327, %v4303
  %v4346 = vsel %vm314, %v4329, %v4305
  %v4347 = vsel %vm314, %v4331, %v4307
  %v4348 = vmul.f32 %v4340, %v325
  %v4349 = vmul.f32 %v4336, %v329
  %v4350 = vmul.f32 %v4332, %v333
  %v4351 = vmul.f32 %v4344, %v337
  %v4352 = vmul.f32 %v4341, %v325
  %v4353 = vmul.f32 %v4337, %v329
  %v4354 = vmul.f32 %v4333, %v333
  %v4355 = vmul.f32 %v4345, %v337
  %v4356 = vmul.f32 %v4342, %v325
  %v4357 = vmul.f32 %v4338, %v329
  %v4358 = vmul.f32 %v4334, %v333
  %v4359 = vmul.f32 %v4346, %v337
  %v4360 = vmul.f32 %v4343, %v325
  %v4361 = vmul.f32 %v4339, %v329
  %v4362 = vmul.f32 %v4335, %v333
  %v4363 = vmul.f32 %v4347, %v337
  %4364 = vrot.lane.b32.xlu0 %v3971, 113
  %v4365 = vpop.permute.xlu0 %4364
  %4366 = vrot.lane.b32.xlu0 %v3975, 113
  %v4367 = vpop.permute.xlu0 %4366
  %4368 = vrot.lane.b32.xlu0 %v3981, 113
  %v4369 = vpop.permute.xlu0 %4368
  %4370 = vrot.lane.b32.xlu0 %v3985, 113
  %v4371 = vpop.permute.xlu0 %4370
  %4372 = vrot.lane.b32.xlu0 %v3973, 113
  %v4373 = vpop.permute.xlu0 %4372
  %4374 = vrot.lane.b32.xlu0 %v3977, 113
  %v4375 = vpop.permute.xlu0 %4374
  %4376 = vrot.lane.b32.xlu0 %v3983, 113
  %v4377 = vpop.permute.xlu0 %4376
  %4378 = vrot.lane.b32.xlu0 %v3987, 113
  %v4379 = vpop.permute.xlu0 %4378
  %4380 = vrot.lane.b32.xlu0 %v4024, 113
  %v4381 = vpop.permute.xlu0 %4380
  %4382 = vrot.lane.b32.xlu0 %v4028, 113
  %v4383 = vpop.permute.xlu0 %4382
  %4384 = vrot.lane.b32.xlu0 %v4034, 113
  %v4385 = vpop.permute.xlu0 %4384
  %4386 = vrot.lane.b32.xlu0 %v4038, 113
  %v4387 = vpop.permute.xlu0 %4386
  %4388 = vrot.lane.b32.xlu0 %v4026, 113
  %v4389 = vpop.permute.xlu0 %4388
  %4390 = vrot.lane.b32.xlu0 %v4030, 113
  %v4391 = vpop.permute.xlu0 %4390
  %4392 = vrot.lane.b32.xlu0 %v4036, 113
  %v4393 = vpop.permute.xlu0 %4392
  %4394 = vrot.lane.b32.xlu0 %v4040, 113
  %v4395 = vpop.permute.xlu0 %4394
  %v4396 = vsel %vm354, %v4381, %v4389
  %v4397 = vsel %vm354, %v4383, %v4391
  %v4398 = vsel %vm354, %v4385, %v4393
  %v4399 = vsel %vm354, %v4387, %v4395
  %v4400 = vsel %vm354, %v4373, %v4381
  %v4401 = vsel %vm354, %v4375, %v4383
  %v4402 = vsel %vm354, %v4377, %v4385
  %v4403 = vsel %vm354, %v4379, %v4387
  %v4404 = vsel %vm354, %v4365, %v4373
  %v4405 = vsel %vm354, %v4367, %v4375
  %v4406 = vsel %vm354, %v4369, %v4377
  %v4407 = vsel %vm354, %v4371, %v4379
  %v4408 = vsel %vm354, %v4389, %v4365
  %v4409 = vsel %vm354, %v4391, %v4367
  %v4410 = vsel %vm354, %v4393, %v4369
  %v4411 = vsel %vm354, %v4395, %v4371
  %v4412 = vmul.f32 %v4404, %v365
  %v4413 = vmul.f32 %v4400, %v369
  %v4414 = vmul.f32 %v4396, %v373
  %v4415 = vmul.f32 %v4408, %v377
  %v4416 = vmul.f32 %v4405, %v365
  %v4417 = vmul.f32 %v4401, %v369
  %v4418 = vmul.f32 %v4397, %v373
  %v4419 = vmul.f32 %v4409, %v377
  %v4420 = vmul.f32 %v4406, %v365
  %v4421 = vmul.f32 %v4402, %v369
  %v4422 = vmul.f32 %v4398, %v373
  %v4423 = vmul.f32 %v4410, %v377
  %v4424 = vmul.f32 %v4407, %v365
  %v4425 = vmul.f32 %v4403, %v369
  %v4426 = vmul.f32 %v4399, %v373
  %v4427 = vmul.f32 %v4411, %v377
  %4428 = vrot.lane.b32.xlu0 %v3971, 112
  %v4429 = vpop.permute.xlu0 %4428
  %4430 = vrot.lane.b32.xlu0 %v3975, 112
  %v4431 = vpop.permute.xlu0 %4430
  %4432 = vrot.lane.b32.xlu0 %v3981, 112
  %v4433 = vpop.permute.xlu0 %4432
  %4434 = vrot.lane.b32.xlu0 %v3985, 112
  %v4435 = vpop.permute.xlu0 %4434
  %4436 = vrot.lane.b32.xlu0 %v3973, 112
  %v4437 = vpop.permute.xlu0 %4436
  %4438 = vrot.lane.b32.xlu0 %v3977, 112
  %v4439 = vpop.permute.xlu0 %4438
  %4440 = vrot.lane.b32.xlu0 %v3983, 112
  %v4441 = vpop.permute.xlu0 %4440
  %4442 = vrot.lane.b32.xlu0 %v3987, 112
  %v4443 = vpop.permute.xlu0 %4442
  %4444 = vrot.lane.b32.xlu0 %v4024, 112
  %v4445 = vpop.permute.xlu0 %4444
  %4446 = vrot.lane.b32.xlu0 %v4028, 112
  %v4447 = vpop.permute.xlu0 %4446
  %4448 = vrot.lane.b32.xlu0 %v4034, 112
  %v4449 = vpop.permute.xlu0 %4448
  %4450 = vrot.lane.b32.xlu0 %v4038, 112
  %v4451 = vpop.permute.xlu0 %4450
  %4452 = vrot.lane.b32.xlu0 %v4026, 112
  %v4453 = vpop.permute.xlu0 %4452
  %4454 = vrot.lane.b32.xlu0 %v4030, 112
  %v4455 = vpop.permute.xlu0 %4454
  %4456 = vrot.lane.b32.xlu0 %v4036, 112
  %v4457 = vpop.permute.xlu0 %4456
  %4458 = vrot.lane.b32.xlu0 %v4040, 112
  %v4459 = vpop.permute.xlu0 %4458
  %v4460 = vsel %vm394, %v4445, %v4453
  %v4461 = vsel %vm394, %v4447, %v4455
  %v4462 = vsel %vm394, %v4449, %v4457
  %v4463 = vsel %vm394, %v4451, %v4459
  %v4464 = vsel %vm394, %v4437, %v4445
  %v4465 = vsel %vm394, %v4439, %v4447
  %v4466 = vsel %vm394, %v4441, %v4449
  %v4467 = vsel %vm394, %v4443, %v4451
  %v4468 = vsel %vm394, %v4429, %v4437
  %v4469 = vsel %vm394, %v4431, %v4439
  %v4470 = vsel %vm394, %v4433, %v4441
  %v4471 = vsel %vm394, %v4435, %v4443
  %v4472 = vsel %vm394, %v4453, %v4429
  %v4473 = vsel %vm394, %v4455, %v4431
  %v4474 = vsel %vm394, %v4457, %v4433
  %v4475 = vsel %vm394, %v4459, %v4435
  %v4476 = vmul.f32 %v4468, %v405
  %v4477 = vmul.f32 %v4464, %v409
  %v4478 = vmul.f32 %v4460, %v413
  %v4479 = vmul.f32 %v4472, %v417
  %v4480 = vmul.f32 %v4469, %v405
  %v4481 = vmul.f32 %v4465, %v409
  %v4482 = vmul.f32 %v4461, %v413
  %v4483 = vmul.f32 %v4473, %v417
  %v4484 = vmul.f32 %v4470, %v405
  %v4485 = vmul.f32 %v4466, %v409
  %v4486 = vmul.f32 %v4462, %v413
  %v4487 = vmul.f32 %v4474, %v417
  %v4488 = vmul.f32 %v4471, %v405
  %v4489 = vmul.f32 %v4467, %v409
  %v4490 = vmul.f32 %v4463, %v413
  %v4491 = vmul.f32 %v4475, %v417
  %4492 = vrot.lane.b32.xlu0 %v3971, 111
  %v4493 = vpop.permute.xlu0 %4492
  %4494 = vrot.lane.b32.xlu0 %v3975, 111
  %v4495 = vpop.permute.xlu0 %4494
  %4496 = vrot.lane.b32.xlu0 %v3981, 111
  %v4497 = vpop.permute.xlu0 %4496
  %4498 = vrot.lane.b32.xlu0 %v3985, 111
  %v4499 = vpop.permute.xlu0 %4498
  %4500 = vrot.lane.b32.xlu0 %v3973, 111
  %v4501 = vpop.permute.xlu0 %4500
  %4502 = vrot.lane.b32.xlu0 %v3977, 111
  %v4503 = vpop.permute.xlu0 %4502
  %4504 = vrot.lane.b32.xlu0 %v3983, 111
  %v4505 = vpop.permute.xlu0 %4504
  %4506 = vrot.lane.b32.xlu0 %v3987, 111
  %v4507 = vpop.permute.xlu0 %4506
  %4508 = vrot.lane.b32.xlu0 %v4024, 111
  %v4509 = vpop.permute.xlu0 %4508
  %4510 = vrot.lane.b32.xlu0 %v4028, 111
  %v4511 = vpop.permute.xlu0 %4510
  %4512 = vrot.lane.b32.xlu0 %v4034, 111
  %v4513 = vpop.permute.xlu0 %4512
  %4514 = vrot.lane.b32.xlu0 %v4038, 111
  %v4515 = vpop.permute.xlu0 %4514
  %4516 = vrot.lane.b32.xlu0 %v4026, 111
  %v4517 = vpop.permute.xlu0 %4516
  %4518 = vrot.lane.b32.xlu0 %v4030, 111
  %v4519 = vpop.permute.xlu0 %4518
  %4520 = vrot.lane.b32.xlu0 %v4036, 111
  %v4521 = vpop.permute.xlu0 %4520
  %4522 = vrot.lane.b32.xlu0 %v4040, 111
  %v4523 = vpop.permute.xlu0 %4522
  %v4524 = vsel %vm434, %v4509, %v4517
  %v4525 = vsel %vm434, %v4511, %v4519
  %v4526 = vsel %vm434, %v4513, %v4521
  %v4527 = vsel %vm434, %v4515, %v4523
  %v4528 = vsel %vm434, %v4501, %v4509
  %v4529 = vsel %vm434, %v4503, %v4511
  %v4530 = vsel %vm434, %v4505, %v4513
  %v4531 = vsel %vm434, %v4507, %v4515
  %v4532 = vsel %vm434, %v4493, %v4501
  %v4533 = vsel %vm434, %v4495, %v4503
  %v4534 = vsel %vm434, %v4497, %v4505
  %v4535 = vsel %vm434, %v4499, %v4507
  %v4536 = vsel %vm434, %v4517, %v4493
  %v4537 = vsel %vm434, %v4519, %v4495
  %v4538 = vsel %vm434, %v4521, %v4497
  %v4539 = vsel %vm434, %v4523, %v4499
  %v4540 = vmul.f32 %v4532, %v445
  %v4541 = vmul.f32 %v4528, %v449
  %v4542 = vmul.f32 %v4524, %v453
  %v4543 = vmul.f32 %v4536, %v457
  %v4544 = vmul.f32 %v4533, %v445
  %v4545 = vmul.f32 %v4529, %v449
  %v4546 = vmul.f32 %v4525, %v453
  %v4547 = vmul.f32 %v4537, %v457
  %v4548 = vmul.f32 %v4534, %v445
  %v4549 = vmul.f32 %v4530, %v449
  %v4550 = vmul.f32 %v4526, %v453
  %v4551 = vmul.f32 %v4538, %v457
  %v4552 = vmul.f32 %v4535, %v445
  %v4553 = vmul.f32 %v4531, %v449
  %v4554 = vmul.f32 %v4527, %v453
  %v4555 = vmul.f32 %v4539, %v457
  %v4556 = vpack.c.bf16 %v4096, %v4092
  %v4557 = vpack.c.bf16 %v4097, %v4093
  %v4558 = vpack.c.bf16 %v4098, %v4094
  %v4559 = vpack.c.bf16 %v4099, %v4095
  %v4560 = vpack.c.bf16 %v4104, %v4100
  %v4561 = vpack.c.bf16 %v4105, %v4101
  %v4562 = vpack.c.bf16 %v4106, %v4102
  %v4563 = vpack.c.bf16 %v4107, %v4103
  %v4564 = vpack.c.bf16 %v4160, %v4156
  %v4565 = vpack.c.bf16 %v4161, %v4157
  %v4566 = vpack.c.bf16 %v4162, %v4158
  %v4567 = vpack.c.bf16 %v4163, %v4159
  %v4568 = vpack.c.bf16 %v4168, %v4164
  %v4569 = vpack.c.bf16 %v4169, %v4165
  %v4570 = vpack.c.bf16 %v4170, %v4166
  %v4571 = vpack.c.bf16 %v4171, %v4167
  %v4572 = vpack.c.bf16 %v4224, %v4220
  %v4573 = vpack.c.bf16 %v4225, %v4221
  %v4574 = vpack.c.bf16 %v4226, %v4222
  %v4575 = vpack.c.bf16 %v4227, %v4223
  %v4576 = vpack.c.bf16 %v4232, %v4228
  %v4577 = vpack.c.bf16 %v4233, %v4229
  %v4578 = vpack.c.bf16 %v4234, %v4230
  %v4579 = vpack.c.bf16 %v4235, %v4231
  %v4580 = vpack.c.bf16 %v4288, %v4284
  %v4581 = vpack.c.bf16 %v4289, %v4285
  %v4582 = vpack.c.bf16 %v4290, %v4286
  %v4583 = vpack.c.bf16 %v4291, %v4287
  %v4584 = vpack.c.bf16 %v4296, %v4292
  %v4585 = vpack.c.bf16 %v4297, %v4293
  %v4586 = vpack.c.bf16 %v4298, %v4294
  %v4587 = vpack.c.bf16 %v4299, %v4295
  %v4588 = vpack.c.bf16 %v3975, %v3971
  %v4589 = vpack.c.bf16 %v3977, %v3973
  %v4590 = vpack.c.bf16 %v4028, %v4024
  %v4591 = vpack.c.bf16 %v4030, %v4026
  %v4592 = vpack.c.bf16 %v3985, %v3981
  %v4593 = vpack.c.bf16 %v3987, %v3983
  %v4594 = vpack.c.bf16 %v4038, %v4034
  %v4595 = vpack.c.bf16 %v4040, %v4036
  %v4596 = vpack.c.bf16 %v4352, %v4348
  %v4597 = vpack.c.bf16 %v4353, %v4349
  %v4598 = vpack.c.bf16 %v4354, %v4350
  %v4599 = vpack.c.bf16 %v4355, %v4351
  %v4600 = vpack.c.bf16 %v4360, %v4356
  %v4601 = vpack.c.bf16 %v4361, %v4357
  %v4602 = vpack.c.bf16 %v4362, %v4358
  %v4603 = vpack.c.bf16 %v4363, %v4359
  %v4604 = vpack.c.bf16 %v4416, %v4412
  %v4605 = vpack.c.bf16 %v4417, %v4413
  %v4606 = vpack.c.bf16 %v4418, %v4414
  %v4607 = vpack.c.bf16 %v4419, %v4415
  %v4608 = vpack.c.bf16 %v4424, %v4420
  %v4609 = vpack.c.bf16 %v4425, %v4421
  %v4610 = vpack.c.bf16 %v4426, %v4422
  %v4611 = vpack.c.bf16 %v4427, %v4423
  %v4612 = vpack.c.bf16 %v4480, %v4476
  %v4613 = vpack.c.bf16 %v4481, %v4477
  %v4614 = vpack.c.bf16 %v4482, %v4478
  %v4615 = vpack.c.bf16 %v4483, %v4479
  %v4616 = vpack.c.bf16 %v4488, %v4484
  %v4617 = vpack.c.bf16 %v4489, %v4485
  %v4618 = vpack.c.bf16 %v4490, %v4486
  %v4619 = vpack.c.bf16 %v4491, %v4487
  %v4620 = vpack.c.bf16 %v4544, %v4540
  %v4621 = vpack.c.bf16 %v4545, %v4541
  %v4622 = vpack.c.bf16 %v4546, %v4542
  %v4623 = vpack.c.bf16 %v4547, %v4543
  %v4624 = vpack.c.bf16 %v4552, %v4548
  %v4625 = vpack.c.bf16 %v4553, %v4549
  %v4626 = vpack.c.bf16 %v4554, %v4550
  %v4627 = vpack.c.bf16 %v4555, %v4551
  %v4628 = vld [vmem:[%s2 + $0xd0] sm:$0x1]
  %4630 = vset.pattern.permute.xlu0 0
  %4631 = vperm.xlu0 %4630, %v4628
  %v4632 = vpop.permute.xlu0 %4631
  %v4636 = vunpack.c.l.b16 %v4042
  %v4637 = vunpack.c.h.b16 %v4042
  %v4638 = vunpack.c.l.b16 %v4043
  %v4639 = vpack.c.b16 %v4636, %v4636
  %v4640 = vpack.c.b16 %v4637, %v4637
  %v4641 = vpack.c.b16 %v4638, %v4638
  %v4645 = vsel %vm3241, %v4641, 0
  %4647 = vmatprep.subr.bf16.mxu0 %v4557
  %4648 = vmatpush1.bf16.msra.mxu0 %v4556
  %4649 = vmatprep.subr.bf16.mxu0 %v4561
  %4650 = vmatpush1.bf16.msra.mxu0 %v4560
  %4651 = vmatprep.subr.bf16.mxu0 %v4565
  %4652 = vmatpush1.bf16.msra.mxu0 %v4564
  %4653 = vmatprep.subr.bf16.mxu0 %v4569
  %4654 = vmatpush1.bf16.msra.mxu0 %v4568
  %4655 = vmatprep.subr.bf16.mxu0 %v4573
  %4656 = vmatpush1.bf16.msra.mxu0 %v4572
  %4657 = vmatprep.subr.bf16.mxu0 %v4577
  %4658 = vmatpush1.bf16.msra.mxu0 %v4576
  %4659 = vmatprep.subr.bf16.mxu0 %v4581
  %4660 = vmatpush1.bf16.msra.mxu0 %v4580
  %4661 = vmatprep.subr.bf16.mxu0 %v4585
  %4662 = vmatpush1.bf16.msra.mxu0 %v4584
  %4663 = vmatprep.subr.bf16.mxu0 %v4589
  %4664 = vmatpush1.bf16.msra.mxu0 %v4588
  %4665 = vmatprep.subr.bf16.mxu0 %v4593
  %4666 = vmatpush1.bf16.msra.mxu0 %v4592
  %4667 = vmatprep.subr.bf16.mxu0 %v4597
  %4668 = vmatpush1.bf16.msra.mxu0 %v4596
  %4669 = vmatprep.subr.bf16.mxu0 %v4601
  %4670 = vmatpush1.bf16.msra.mxu0 %v4600
  %4671 = vmatprep.subr.bf16.mxu0 %v4605
  %4672 = vmatpush1.bf16.msra.mxu0 %v4604
  %4673 = vmatprep.subr.bf16.mxu0 %v4609
  %4674 = vmatpush1.bf16.msra.mxu0 %v4608
  %4675 = vmatprep.subr.bf16.mxu0 %v4613
  %4676 = vmatpush1.bf16.msra.mxu0 %v4612
  %4677 = vmatprep.subr.bf16.mxu0 %v4617
  %4678 = vmatpush1.bf16.msra.mxu0 %v4616
  %4679 = vmatprep.mubr.bf16.mxu0 %v4640
  %4680 = vmatmul.mubr.bf16.gmra.mrb[0].mxu0 %v4639
  %v4681 = vpop.f32.mrb[0].mxu0
  %v4682 = vadd.f32 %v4632, %v4681
  %v4683 = vpop.f32.mrb[0].mxu0
  %v4684 = vadd.f32 %v4632, %v4683
  %v4685 = vpop.f32.mrb[0].mxu0
  %v4686 = vpop.f32.mrb[0].mxu0
  %4687 = vdwg.mxu0
  %4688 = vmatprep.subr.bf16.mxu0 %v4621
  %4689 = vmatpush1.bf16.msra.mxu0 %v4620
  %4690 = vmatprep.subr.bf16.mxu0 %v4625
  %4691 = vmatpush1.bf16.msra.mxu0 %v4624
  %4692 = vmatprep.subr.bf16.mxu0 0
  %4693 = vmatpush1.bf16.msra.mxu0 0
  %4694 = vmatprep.subr.bf16.mxu0 0
  %4695 = vmatpush1.bf16.msra.mxu0 0
  %4696 = vmatprep.subr.bf16.mxu0 0
  %4697 = vmatpush1.bf16.msra.mxu0 0
  %4698 = vmatprep.subr.bf16.mxu0 0
  %4699 = vmatpush1.bf16.msra.mxu0 0
  %4700 = vmatprep.subr.bf16.mxu0 0
  %4701 = vmatpush1.bf16.msra.mxu0 0
  %4702 = vmatprep.subr.bf16.mxu0 0
  %4703 = vmatpush1.bf16.msra.mxu0 0
  %4704 = vmatprep.subr.bf16.mxu0 0
  %4705 = vmatpush1.bf16.msra.mxu0 0
  %4706 = vmatprep.subr.bf16.mxu0 0
  %4707 = vmatpush1.bf16.msra.mxu0 0
  %4708 = vmatprep.subr.bf16.mxu0 0
  %4709 = vmatpush1.bf16.msra.mxu0 0
  %4710 = vmatprep.subr.bf16.mxu0 0
  %4711 = vmatpush1.bf16.msra.mxu0 0
  %4712 = vmatprep.subr.bf16.mxu0 0
  %4713 = vmatpush1.bf16.msra.mxu0 0
  %4714 = vmatprep.subr.bf16.mxu0 0
  %4715 = vmatpush1.bf16.msra.mxu0 0
  %4716 = vmatprep.subr.bf16.mxu0 0
  %4717 = vmatpush1.bf16.msra.mxu0 0
  %4718 = vmatprep.subr.bf16.mxu0 0
  %4719 = vmatpush1.bf16.msra.mxu0 0
  %4720 = vmatprep.mubr.bf16.mxu0 0
  %4721 = vmatmul.mubr.bf16.gmra.mrb[0].mxu0 %v4645
  %v4722 = vpop.f32.mrb[0].mxu0
  %v4723 = vadd.f32 %v4682, %v4722
  %v4724 = vpop.f32.mrb[0].mxu0
  %v4725 = vadd.f32 %v4684, %v4724
  %v4726 = vpop.f32.mrb[0].mxu0
  %v4727 = vpop.f32.mrb[0].mxu0
  %4728 = vdwg.mxu0
  %4729 = vmatprep.subr.bf16.mxu0 %v4559
  %4730 = vmatpush1.bf16.msra.mxu0 %v4558
  %4731 = vmatprep.subr.bf16.mxu0 %v4563
  %4732 = vmatpush1.bf16.msra.mxu0 %v4562
  %4733 = vmatprep.subr.bf16.mxu0 %v4567
  %4734 = vmatpush1.bf16.msra.mxu0 %v4566
  %4735 = vmatprep.subr.bf16.mxu0 %v4571
  %4736 = vmatpush1.bf16.msra.mxu0 %v4570
  %4737 = vmatprep.subr.bf16.mxu0 %v4575
  %4738 = vmatpush1.bf16.msra.mxu0 %v4574
  %4739 = vmatprep.subr.bf16.mxu0 %v4579
  %4740 = vmatpush1.bf16.msra.mxu0 %v4578
  %4741 = vmatprep.subr.bf16.mxu0 %v4583
  %4742 = vmatpush1.bf16.msra.mxu0 %v4582
  %4743 = vmatprep.subr.bf16.mxu0 %v4587
  %4744 = vmatpush1.bf16.msra.mxu0 %v4586
  %4745 = vmatprep.subr.bf16.mxu0 %v4591
  %4746 = vmatpush1.bf16.msra.mxu0 %v4590
  %4747 = vmatprep.subr.bf16.mxu0 %v4595
  %4748 = vmatpush1.bf16.msra.mxu0 %v4594
  %4749 = vmatprep.subr.bf16.mxu0 %v4599
  %4750 = vmatpush1.bf16.msra.mxu0 %v4598
  %4751 = vmatprep.subr.bf16.mxu0 %v4603
  %4752 = vmatpush1.bf16.msra.mxu0 %v4602
  %4753 = vmatprep.subr.bf16.mxu0 %v4607
  %4754 = vmatpush1.bf16.msra.mxu0 %v4606
  %4755 = vmatprep.subr.bf16.mxu0 %v4611
  %4756 = vmatpush1.bf16.msra.mxu0 %v4610
  %4757 = vmatprep.subr.bf16.mxu0 %v4615
  %4758 = vmatpush1.bf16.msra.mxu0 %v4614
  %4759 = vmatprep.subr.bf16.mxu0 %v4619
  %4760 = vmatpush1.bf16.msra.mxu0 %v4618
  %4761 = vmatprep.mubr.bf16.mxu0 %v4640
  %4762 = vmatmul.mubr.bf16.gmra.mrb[0].mxu0 %v4639
  %v4763 = vpop.f32.mrb[0].mxu0
  %v4764 = vadd.f32 %v4632, %v4763
  %v4765 = vpop.f32.mrb[0].mxu0
  %v4766 = vadd.f32 %v4632, %v4765
  %v4767 = vpop.f32.mrb[0].mxu0
  %v4768 = vpop.f32.mrb[0].mxu0
  %4769 = vdwg.mxu0
  %4770 = vmatprep.subr.bf16.mxu0 %v4623
  %4771 = vmatpush1.bf16.msra.mxu0 %v4622
  %4772 = vmatprep.subr.bf16.mxu0 %v4627
  %4773 = vmatpush1.bf16.msra.mxu0 %v4626
  %4774 = vmatprep.subr.bf16.mxu0 0
  %4775 = vmatpush1.bf16.msra.mxu0 0
  %4776 = vmatprep.subr.bf16.mxu0 0
  %4777 = vmatpush1.bf16.msra.mxu0 0
  %4778 = vmatprep.subr.bf16.mxu0 0
  %4779 = vmatpush1.bf16.msra.mxu0 0
  %4780 = vmatprep.subr.bf16.mxu0 0
  %4781 = vmatpush1.bf16.msra.mxu0 0
  %4782 = vmatprep.subr.bf16.mxu0 0
  %4783 = vmatpush1.bf16.msra.mxu0 0
  %4784 = vmatprep.subr.bf16.mxu0 0
  %4785 = vmatpush1.bf16.msra.mxu0 0
  %4786 = vmatprep.subr.bf16.mxu0 0
  %4787 = vmatpush1.bf16.msra.mxu0 0
  %4788 = vmatprep.subr.bf16.mxu0 0
  %4789 = vmatpush1.bf16.msra.mxu0 0
  %4790 = vmatprep.subr.bf16.mxu0 0
  %4791 = vmatpush1.bf16.msra.mxu0 0
  %4792 = vmatprep.subr.bf16.mxu0 0
  %4793 = vmatpush1.bf16.msra.mxu0 0
  %4794 = vmatprep.subr.bf16.mxu0 0
  %4795 = vmatpush1.bf16.msra.mxu0 0
  %4796 = vmatprep.subr.bf16.mxu0 0
  %4797 = vmatpush1.bf16.msra.mxu0 0
  %4798 = vmatprep.subr.bf16.mxu0 0
  %4799 = vmatpush1.bf16.msra.mxu0 0
  %4800 = vmatprep.subr.bf16.mxu0 0
  %4801 = vmatpush1.bf16.msra.mxu0 0
  %4802 = vmatprep.mubr.bf16.mxu0 0
  %4803 = vmatmul.mubr.bf16.gmra.mrb[0].mxu0 %v4645
  %v4804 = vpop.f32.mrb[0].mxu0
  %v4805 = vadd.f32 %v4764, %v4804
  %v4806 = vpop.f32.mrb[0].mxu0
  %v4807 = vadd.f32 %v4766, %v4806
  %v4808 = vpop.f32.mrb[0].mxu0
  %v4809 = vpop.f32.mrb[0].mxu0
  %4810 = vdwg.mxu0
  %v4815 = vcombine.low %v4723, %v4725
  %v4816 = vcombine.low %v4805, %v4807
  %v4818 = vunpack.c.l.s4 1966171168
  %v4819 = vunpack.c.0.s8 %v4818
  %v4820 = vlaneseq
  %v4821 = vshrl.u32 %v4820, 7
  %v4822 = vsub.s32 %v4819, %v4821
  %v4823 = vrot.slane %v4815, %v4822
  %v4825 = vunpack.c.l.s4 1966171168
  %v4826 = vunpack.c.0.s8 %v4825
  %v4827 = vlaneseq
  %v4828 = vshrl.u32 %v4827, 7
  %v4829 = vsub.s32 %v4826, %v4828
  %v4830 = vrot.slane %v4816, %v4829
  %v4831 = vcombine.low %v4823, %v4830
  %v4833 = vunpack.c.l.s4 1966171168
  %v4834 = vunpack.c.0.s8 %v4833
  %v4835 = vlaneseq
  %v4836 = vshrl.u32 %v4835, 7
  %v4837 = vsub.s32 %v4834, %v4836
  %v4838 = vrot.slane %v4831, %v4837
  %v4840 = vlaneseq
  %vm4841 = vcmp.ge.s32.totalorder %v4840, 0
  %vm4842 = vcmp.lt.s32.totalorder %v4840, 512
  %vm4843 = vmand %vm4841, %vm4842
  %4844 = vst.msk [vmem:[%s6] sm:$0xf] %vm4843, %v4838
  // Predicated region
  $region26: #{feature_net_forward.1} parent=0 // pred_check
    _
  $region27: #{feature_net_forward.1} parent=0 // pred_check_branch
    %4846 = sbr.rel (0) target = $region29
  $region28: #{feature_net_forward.1} parent=0 // pred_region
    _
  $region29: #{feature_net_forward.1} parent=0 // pred_fallthru
    _
  // Predicated region
  $region30: #{feature_net_forward.1} parent=0 // pred_check
    _
  $region31: #{feature_net_forward.1} parent=0 // pred_check_branch
    %4848 = sbr.rel (0) target = $region33
  $region32: #{feature_net_forward.1} parent=0 // pred_region
    _
  $region33: #{feature_net_forward.1} parent=0 // pred_fallthru
    _

</llo_original>
